<compile_context>
chip_gen: v6e
topology: v6e:2x2x1
jax: 0.10.0
libtpu: 0.0.40
codegen_flags: <defaults>
</compile_context>

<pallas_src>
import jax
import jax.numpy as jnp
from jax.experimental import pallas as pl
from jax.experimental.pallas import tpu as pltpu


def _round_up(n, m):
    return ((n + m - 1) // m) * m


def tbnn_kernel(x_ref, tb_ref,
                w1_ref, b1_ref, w2_ref, b2_ref, w3_ref, b3_ref, w4_ref, b4_ref,
                wcr_ref, bcr_ref, s_ref,
                out_ref):
    # MLP hidden stack: 4 x (Linear -> LeakyReLU -> Dropout[eval=identity]).
    h = x_ref[...]
    for w_ref, b_ref in ((w1_ref, b1_ref), (w2_ref, b2_ref),
                         (w3_ref, b3_ref), (w4_ref, b4_ref)):
        h = jnp.dot(h, w_ref[...], preferred_element_type=jnp.float32) + b_ref[...]
        h = jnp.where(h > 0, h, 0.01 * h)           # LeakyReLU(0.01)

    # Expanded coeff layer: (TB, hidden) @ (hidden, C*dd).  Each coefficient is
    # repeated dd times along lanes, so the contraction below is a plain VPU
    # multiply followed by an MXU reduction - no cross-lane/XLU traffic.
    coeffs_rep = (jnp.dot(h, wcr_ref[...], preferred_element_type=jnp.float32)
                  + bcr_ref[...])                    # (TB, C*dd)

    prod = coeffs_rep * tb_ref[...].astype(jnp.float32)   # (TB, C*dd)

    # sum_c via constant 0/1 scatter matrix S (C*dd, dd) on the MXU; single
    # dense store of the (TB, dd) result.
    out_ref[...] = jnp.dot(prod, s_ref[...], preferred_element_type=jnp.float32)


def tbnn_forward(x, tensor_basis, params, *, block_b=1024,
                 basis_dtype=jnp.float32, vmem_limit_bytes=32 << 20):
    """x: (B, input_dim); tensor_basis: (B, num_coeffs, d, d) -> (B, d, d)."""
    B, input_dim = x.shape
    C = tensor_basis.shape[1]
    d = tensor_basis.shape[-1]
    dd = d * d

    x = x.astype(jnp.float32)
    tb_flat = tensor_basis.reshape(B, C * dd).astype(basis_dtype)

    # Grid sizing: large 128-multiple row tiles; if more than one step is
    # needed, use an even step count so the parallel axis balances over 2 TCs.
    n_steps = -(-B // block_b)
    if n_steps > 1 and n_steps % 2:
        n_steps += 1
    tb_rows = _round_up(-(-B // n_steps), 128)
    b_pad = n_steps * tb_rows
    if b_pad != B:
        x = jnp.pad(x, ((0, b_pad - B), (0, 0)))
        tb_flat = jnp.pad(tb_flat, ((0, b_pad - B), (0, 0)))

    (w1, b1), (w2, b2), (w3, b3), (w4, b4), (wc, bc) = params

    # Pre-expand coeff layer + build the scatter matrix (0/1 entries; exact).
    wc_rep = jnp.repeat(wc.astype(jnp.float32), dd, axis=1)        # (hidden, C*dd)
    bc_rep = jnp.repeat(bc.astype(jnp.float32), dd, axis=1)        # (1, C*dd)
    scatter = jnp.tile(jnp.eye(dd, dtype=jnp.float32), (C, 1))     # (C*dd, dd)

    weights = (w1, b1, w2, b2, w3, b3, w4, b4, wc_rep, bc_rep, scatter)

    def batch_spec(lanes):
        return pl.BlockSpec((tb_rows, lanes), lambda i: (i, 0))

    def resident_spec(arr):
        # Constant index map -> block never changes -> stays VMEM-resident.
        return pl.BlockSpec(arr.shape, lambda i: (0, 0))

    out_padded = pl.pallas_call(
        tbnn_kernel,
        out_shape=jax.ShapeDtypeStruct((b_pad, dd), jnp.float32),
        grid=(n_steps,),
        in_specs=[batch_spec(input_dim), batch_spec(C * dd)]
                 + [resident_spec(a) for a in weights],
        out_specs=pl.BlockSpec((tb_rows, dd), lambda i: (i, 0)),
        compiler_params=pltpu.CompilerParams(
            dimension_semantics=("parallel",),
            vmem_limit_bytes=vmem_limit_bytes),
    )(x, tb_flat, *weights)

    return out_padded[:B].reshape(B, d, d)


def init_params(key, input_dim, hidden_dim, num_coeffs):
    """Deterministic init. Weights stored as (in, out) so the kernel does
    x @ W + b (same semantics as torch's x @ W.T + b with W of shape (out, in))."""
    dims = [(input_dim, hidden_dim), (hidden_dim, hidden_dim),
            (hidden_dim, hidden_dim), (hidden_dim, hidden_dim),
            (hidden_dim, num_coeffs)]
    params = []
    for (fan_in, fan_out) in dims:
        key, kw, kb = jax.random.split(key, 3)
        bound = 1.0 / jnp.sqrt(fan_in)
        w = jax.random.uniform(kw, (fan_in, fan_out), jnp.float32, -bound, bound)
        b = jax.random.uniform(kb, (1, fan_out), jnp.float32, -bound, bound)
        params.append((w, b))
    return params


def tbnn_reference(x, tensor_basis, params):
    """Pure-JAX reference of the PyTorch forward (eval mode)."""
    h = x.astype(jnp.float32)
    for (w, b) in params[:-1]:
        h = h @ w + b
        h = jnp.where(h > 0, h, 0.01 * h)
    wc, bc = params[-1]
    coeffs = h @ wc + bc                            # (B, C)
    return jnp.sum(coeffs[:, :, None, None] * tensor_basis, axis=1)


if __name__ == "__main__":
    input_dim = 5
    output_dim = 3
    hidden_dim = 32
    num_coeffs = 10
    batch = 300        # deliberately not a multiple of the batch tile

    key = jax.random.PRNGKey(0)
    key, kx, kt, kp = jax.random.split(key, 4)

    x = jax.random.normal(kx, (batch, input_dim), jnp.float32)
    tensor_basis = jax.random.normal(
        kt, (batch, num_coeffs, output_dim, output_dim), jnp.float32)
    params = init_params(kp, input_dim, hidden_dim, num_coeffs)

    out = jax.block_until_ready(tbnn_forward(x, tensor_basis, params))

    ref = jax.block_until_ready(tbnn_reference(x, tensor_basis, params))
    assert out.shape == (batch, output_dim, output_dim)
    assert jnp.allclose(out, ref, atol=1e-4, rtol=1e-4), \
        float(jnp.max(jnp.abs(out - ref)))

    print("KERNEL_OK")
</pallas_src>

<mosaic_0001>
module attributes {stable_mosaic.version = 11 : i64} {
  func.func @tbnn_kernel(%arg0: i32, %arg1: memref<384x5xf32, #tpu.memory_space<vmem>>, %arg2: memref<384x90xf32, #tpu.memory_space<vmem>>, %arg3: memref<5x32xf32, #tpu.memory_space<vmem>>, %arg4: memref<1x32xf32, #tpu.memory_space<vmem>>, %arg5: memref<32x32xf32, #tpu.memory_space<vmem>>, %arg6: memref<1x32xf32, #tpu.memory_space<vmem>>, %arg7: memref<32x32xf32, #tpu.memory_space<vmem>>, %arg8: memref<1x32xf32, #tpu.memory_space<vmem>>, %arg9: memref<32x32xf32, #tpu.memory_space<vmem>>, %arg10: memref<1x32xf32, #tpu.memory_space<vmem>>, %arg11: memref<32x90xf32, #tpu.memory_space<vmem>>, %arg12: memref<1x90xf32, #tpu.memory_space<vmem>>, %arg13: memref<90x9xf32, #tpu.memory_space<vmem>>, %arg14: memref<384x9xf32, #tpu.memory_space<vmem>>) attributes {dimension_semantics = [#tpu.dimension_semantics<parallel>], iteration_bounds = array<i64: 1>, scalar_prefetch = 0 : i64, scratch_operands = 0 : i64, tpu.core_type = #tpu.core_type<tc>, window_params = [{transform_indices = @transform_0, window_bounds = array<i64: 384, 5>}, {transform_indices = @transform_1, window_bounds = array<i64: 384, 90>}, {pipeline_mode = #tpu.pipeline_mode<synchronous>, transform_indices = @transform_2, window_bounds = array<i64: 5, 32>}, {pipeline_mode = #tpu.pipeline_mode<synchronous>, transform_indices = @transform_3, window_bounds = array<i64: 1, 32>}, {pipeline_mode = #tpu.pipeline_mode<synchronous>, transform_indices = @transform_4, window_bounds = array<i64: 32, 32>}, {pipeline_mode = #tpu.pipeline_mode<synchronous>, transform_indices = @transform_5, window_bounds = array<i64: 1, 32>}, {pipeline_mode = #tpu.pipeline_mode<synchronous>, transform_indices = @transform_6, window_bounds = array<i64: 32, 32>}, {pipeline_mode = #tpu.pipeline_mode<synchronous>, transform_indices = @transform_7, window_bounds = array<i64: 1, 32>}, {pipeline_mode = #tpu.pipeline_mode<synchronous>, transform_indices = @transform_8, window_bounds = array<i64: 32, 32>}, {pipeline_mode = #tpu.pipeline_mode<synchronous>, transform_indices = @transform_9, window_bounds = array<i64: 1, 32>}, {pipeline_mode = #tpu.pipeline_mode<synchronous>, transform_indices = @transform_10, window_bounds = array<i64: 32, 90>}, {pipeline_mode = #tpu.pipeline_mode<synchronous>, transform_indices = @transform_11, window_bounds = array<i64: 1, 90>}, {pipeline_mode = #tpu.pipeline_mode<synchronous>, transform_indices = @transform_12, window_bounds = array<i64: 90, 9>}, {transform_indices = @transform_13, window_bounds = array<i64: 384, 9>}]} {
    %c0 = arith.constant 0 : index
    %c0_0 = arith.constant 0 : index
    %0 = vector.load %arg1[%c0, %c0_0] : memref<384x5xf32, #tpu.memory_space<vmem>>, vector<384x5xf32>
    %c0_1 = arith.constant 0 : index
    %c0_2 = arith.constant 0 : index
    %1 = vector.load %arg3[%c0_1, %c0_2] : memref<5x32xf32, #tpu.memory_space<vmem>>, vector<5x32xf32>
    %cst = arith.constant dense<0.000000e+00> : vector<384x32xf32>
    %2 = tpu.matmul %0, %1, %cst {dimension_numbers = #tpu.dot_dimension_numbers<[1], [0], [0], [1], [0, 0, 1, 1], [], []>} : vector<384x5xf32>, vector<5x32xf32>, vector<384x32xf32> -> vector<384x32xf32>
    %c0_3 = arith.constant 0 : index
    %c0_4 = arith.constant 0 : index
    %3 = vector.load %arg4[%c0_3, %c0_4] : memref<1x32xf32, #tpu.memory_space<vmem>>, vector<1x32xf32>
    %4 = vector.broadcast %3 : vector<1x32xf32> to vector<384x32xf32>
    %5 = arith.addf %2, %4 : vector<384x32xf32>
    %cst_5 = arith.constant 0.000000e+00 : f32
    %6 = vector.broadcast %cst_5 : f32 to vector<384x32xf32>
    %7 = arith.cmpf ogt, %5, %6 : vector<384x32xf32>
    %cst_6 = arith.constant 0.00999999977 : f32
    %8 = vector.broadcast %cst_6 : f32 to vector<384x32xf32>
    %9 = arith.mulf %8, %5 : vector<384x32xf32>
    %10 = arith.select %7, %5, %9 : vector<384x32xi1>, vector<384x32xf32>
    %c0_7 = arith.constant 0 : index
    %c0_8 = arith.constant 0 : index
    %11 = vector.load %arg5[%c0_7, %c0_8] : memref<32x32xf32, #tpu.memory_space<vmem>>, vector<32x32xf32>
    %cst_9 = arith.constant dense<0.000000e+00> : vector<384x32xf32>
    %12 = tpu.matmul %10, %11, %cst_9 {dimension_numbers = #tpu.dot_dimension_numbers<[1], [0], [0], [1], [0, 0, 1, 1], [], []>} : vector<384x32xf32>, vector<32x32xf32>, vector<384x32xf32> -> vector<384x32xf32>
    %c0_10 = arith.constant 0 : index
    %c0_11 = arith.constant 0 : index
    %13 = vector.load %arg6[%c0_10, %c0_11] : memref<1x32xf32, #tpu.memory_space<vmem>>, vector<1x32xf32>
    %14 = vector.broadcast %13 : vector<1x32xf32> to vector<384x32xf32>
    %15 = arith.addf %12, %14 : vector<384x32xf32>
    %cst_12 = arith.constant 0.000000e+00 : f32
    %16 = vector.broadcast %cst_12 : f32 to vector<384x32xf32>
    %17 = arith.cmpf ogt, %15, %16 : vector<384x32xf32>
    %cst_13 = arith.constant 0.00999999977 : f32
    %18 = vector.broadcast %cst_13 : f32 to vector<384x32xf32>
    %19 = arith.mulf %18, %15 : vector<384x32xf32>
    %20 = arith.select %17, %15, %19 : vector<384x32xi1>, vector<384x32xf32>
    %c0_14 = arith.constant 0 : index
    %c0_15 = arith.constant 0 : index
    %21 = vector.load %arg7[%c0_14, %c0_15] : memref<32x32xf32, #tpu.memory_space<vmem>>, vector<32x32xf32>
    %cst_16 = arith.constant dense<0.000000e+00> : vector<384x32xf32>
    %22 = tpu.matmul %20, %21, %cst_16 {dimension_numbers = #tpu.dot_dimension_numbers<[1], [0], [0], [1], [0, 0, 1, 1], [], []>} : vector<384x32xf32>, vector<32x32xf32>, vector<384x32xf32> -> vector<384x32xf32>
    %c0_17 = arith.constant 0 : index
    %c0_18 = arith.constant 0 : index
    %23 = vector.load %arg8[%c0_17, %c0_18] : memref<1x32xf32, #tpu.memory_space<vmem>>, vector<1x32xf32>
    %24 = vector.broadcast %23 : vector<1x32xf32> to vector<384x32xf32>
    %25 = arith.addf %22, %24 : vector<384x32xf32>
    %cst_19 = arith.constant 0.000000e+00 : f32
    %26 = vector.broadcast %cst_19 : f32 to vector<384x32xf32>
    %27 = arith.cmpf ogt, %25, %26 : vector<384x32xf32>
    %cst_20 = arith.constant 0.00999999977 : f32
    %28 = vector.broadcast %cst_20 : f32 to vector<384x32xf32>
    %29 = arith.mulf %28, %25 : vector<384x32xf32>
    %30 = arith.select %27, %25, %29 : vector<384x32xi1>, vector<384x32xf32>
    %c0_21 = arith.constant 0 : index
    %c0_22 = arith.constant 0 : index
    %31 = vector.load %arg9[%c0_21, %c0_22] : memref<32x32xf32, #tpu.memory_space<vmem>>, vector<32x32xf32>
    %cst_23 = arith.constant dense<0.000000e+00> : vector<384x32xf32>
    %32 = tpu.matmul %30, %31, %cst_23 {dimension_numbers = #tpu.dot_dimension_numbers<[1], [0], [0], [1], [0, 0, 1, 1], [], []>} : vector<384x32xf32>, vector<32x32xf32>, vector<384x32xf32> -> vector<384x32xf32>
    %c0_24 = arith.constant 0 : index
    %c0_25 = arith.constant 0 : index
    %33 = vector.load %arg10[%c0_24, %c0_25] : memref<1x32xf32, #tpu.memory_space<vmem>>, vector<1x32xf32>
    %34 = vector.broadcast %33 : vector<1x32xf32> to vector<384x32xf32>
    %35 = arith.addf %32, %34 : vector<384x32xf32>
    %cst_26 = arith.constant 0.000000e+00 : f32
    %36 = vector.broadcast %cst_26 : f32 to vector<384x32xf32>
    %37 = arith.cmpf ogt, %35, %36 : vector<384x32xf32>
    %cst_27 = arith.constant 0.00999999977 : f32
    %38 = vector.broadcast %cst_27 : f32 to vector<384x32xf32>
    %39 = arith.mulf %38, %35 : vector<384x32xf32>
    %40 = arith.select %37, %35, %39 : vector<384x32xi1>, vector<384x32xf32>
    %c0_28 = arith.constant 0 : index
    %c0_29 = arith.constant 0 : index
    %41 = vector.load %arg11[%c0_28, %c0_29] : memref<32x90xf32, #tpu.memory_space<vmem>>, vector<32x90xf32>
    %cst_30 = arith.constant dense<0.000000e+00> : vector<384x90xf32>
    %42 = tpu.matmul %40, %41, %cst_30 {dimension_numbers = #tpu.dot_dimension_numbers<[1], [0], [0], [1], [0, 0, 1, 1], [], []>} : vector<384x32xf32>, vector<32x90xf32>, vector<384x90xf32> -> vector<384x90xf32>
    %c0_31 = arith.constant 0 : index
    %c0_32 = arith.constant 0 : index
    %43 = vector.load %arg12[%c0_31, %c0_32] : memref<1x90xf32, #tpu.memory_space<vmem>>, vector<1x90xf32>
    %44 = vector.broadcast %43 : vector<1x90xf32> to vector<384x90xf32>
    %45 = arith.addf %42, %44 : vector<384x90xf32>
    %c0_33 = arith.constant 0 : index
    %c0_34 = arith.constant 0 : index
    %46 = vector.load %arg2[%c0_33, %c0_34] : memref<384x90xf32, #tpu.memory_space<vmem>>, vector<384x90xf32>
    %47 = arith.mulf %45, %46 : vector<384x90xf32>
    %c0_35 = arith.constant 0 : index
    %c0_36 = arith.constant 0 : index
    %48 = vector.load %arg13[%c0_35, %c0_36] : memref<90x9xf32, #tpu.memory_space<vmem>>, vector<90x9xf32>
    %cst_37 = arith.constant dense<0.000000e+00> : vector<384x9xf32>
    %49 = tpu.matmul %47, %48, %cst_37 {dimension_numbers = #tpu.dot_dimension_numbers<[1], [0], [0], [1], [0, 0, 1, 1], [], []>} : vector<384x90xf32>, vector<90x9xf32>, vector<384x9xf32> -> vector<384x9xf32>
    %c0_38 = arith.constant 0 : index
    %c0_39 = arith.constant 0 : index
    %50 = vector.load %arg14[%c0_38, %c0_39] : memref<384x9xf32, #tpu.memory_space<vmem>>, vector<384x9xf32>
    tpu.vector_store %arg14[%c0_38, %c0_39], %49 {strides = array<i32>} : memref<384x9xf32, #tpu.memory_space<vmem>>, vector<384x9xf32>,
    return
  }
  func.func @transform_0(%arg0: i32) -> (i32, i32) {
    %c0_i32 = arith.constant 0 : i32
    %c0_i32_0 = arith.constant 0 : i32
    return %arg0, %c0_i32 : i32, i32
  }
  func.func @transform_1(%arg0: i32) -> (i32, i32) {
    %c0_i32 = arith.constant 0 : i32
    %c0_i32_0 = arith.constant 0 : i32
    return %arg0, %c0_i32 : i32, i32
  }
  func.func @transform_2(%arg0: i32) -> (i32, i32) {
    %c0_i32 = arith.constant 0 : i32
    %c0_i32_0 = arith.constant 0 : i32
    %c0_i32_1 = arith.constant 0 : i32
    return %c0_i32, %c0_i32_0 : i32, i32
  }
  func.func @transform_3(%arg0: i32) -> (i32, i32) {
    %c0_i32 = arith.constant 0 : i32
    %c0_i32_0 = arith.constant 0 : i32
    %c0_i32_1 = arith.constant 0 : i32
    return %c0_i32, %c0_i32_0 : i32, i32
  }
  func.func @transform_4(%arg0: i32) -> (i32, i32) {
    %c0_i32 = arith.constant 0 : i32
    %c0_i32_0 = arith.constant 0 : i32
    %c0_i32_1 = arith.constant 0 : i32
    return %c0_i32, %c0_i32_0 : i32, i32
  }
  func.func @transform_5(%arg0: i32) -> (i32, i32) {
    %c0_i32 = arith.constant 0 : i32
    %c0_i32_0 = arith.constant 0 : i32
    %c0_i32_1 = arith.constant 0 : i32
    return %c0_i32, %c0_i32_0 : i32, i32
  }
  func.func @transform_6(%arg0: i32) -> (i32, i32) {
    %c0_i32 = arith.constant 0 : i32
    %c0_i32_0 = arith.constant 0 : i32
    %c0_i32_1 = arith.constant 0 : i32
    return %c0_i32, %c0_i32_0 : i32, i32
  }
  func.func @transform_7(%arg0: i32) -> (i32, i32) {
    %c0_i32 = arith.constant 0 : i32
    %c0_i32_0 = arith.constant 0 : i32
    %c0_i32_1 = arith.constant 0 : i32
    return %c0_i32, %c0_i32_0 : i32, i32
  }
  func.func @transform_8(%arg0: i32) -> (i32, i32) {
    %c0_i32 = arith.constant 0 : i32
    %c0_i32_0 = arith.constant 0 : i32
    %c0_i32_1 = arith.constant 0 : i32
    return %c0_i32, %c0_i32_0 : i32, i32
  }
  func.func @transform_9(%arg0: i32) -> (i32, i32) {
    %c0_i32 = arith.constant 0 : i32
    %c0_i32_0 = arith.constant 0 : i32
    %c0_i32_1 = arith.constant 0 : i32
    return %c0_i32, %c0_i32_0 : i32, i32
  }
  func.func @transform_10(%arg0: i32) -> (i32, i32) {
    %c0_i32 = arith.constant 0 : i32
    %c0_i32_0 = arith.constant 0 : i32
    %c0_i32_1 = arith.constant 0 : i32
    return %c0_i32, %c0_i32_0 : i32, i32
  }
  func.func @transform_11(%arg0: i32) -> (i32, i32) {
    %c0_i32 = arith.constant 0 : i32
    %c0_i32_0 = arith.constant 0 : i32
    %c0_i32_1 = arith.constant 0 : i32
    return %c0_i32, %c0_i32_0 : i32, i32
  }
  func.func @transform_12(%arg0: i32) -> (i32, i32) {
    %c0_i32 = arith.constant 0 : i32
    %c0_i32_0 = arith.constant 0 : i32
    %c0_i32_1 = arith.constant 0 : i32
    return %c0_i32, %c0_i32_0 : i32, i32
  }
  func.func @transform_13(%arg0: i32) -> (i32, i32) {
    %c0_i32 = arith.constant 0 : i32
    %c0_i32_0 = arith.constant 0 : i32
    return %arg0, %c0_i32 : i32, i32
  }
}

</mosaic_0001>

<llo_original>
// kernel: tpu_custom_call.1
$region0: #{tpu_custom_call.1}
  #allocation0 [shape = 'u32[]', space=smem, size = 0x4, offset = 0x4, fixed_abs, tag = 'smem constant byte address 0x4 - core index']
  #allocation1 [shape = 'u32[144,128]{1,0:T(1,128)}', space=vmem, size = 0x12000, scoped, tag = 'internal scratch']
  %s0 = inlined_call_operand.vmem [shape: f32[384,5], index: 0, kind: input, shape index: {}]
  %s1 = inlined_call_operand.vmem [shape: f32[384,90], index: 1, kind: input, shape index: {}]
  %s2 = inlined_call_operand.vmem [shape: f32[5,32], index: 2, kind: input, shape index: {}]
  %s3 = inlined_call_operand.vmem [shape: f32[1,32], index: 3, kind: input, shape index: {}]
  %s4 = inlined_call_operand.vmem [shape: f32[32,32], index: 4, kind: input, shape index: {}]
  %s5 = inlined_call_operand.vmem [shape: f32[1,32], index: 5, kind: input, shape index: {}]
  %s6 = inlined_call_operand.vmem [shape: f32[32,32], index: 6, kind: input, shape index: {}]
  %s7 = inlined_call_operand.vmem [shape: f32[1,32], index: 7, kind: input, shape index: {}]
  %s8 = inlined_call_operand.vmem [shape: f32[32,32], index: 8, kind: input, shape index: {}]
  %s9 = inlined_call_operand.vmem [shape: f32[1,32], index: 9, kind: input, shape index: {}]
  %s10 = inlined_call_operand.vmem [shape: f32[32,90], index: 10, kind: input, shape index: {}]
  %s11 = inlined_call_operand.vmem [shape: f32[1,90], index: 11, kind: input, shape index: {}]
  %s12 = inlined_call_operand.vmem [shape: f32[90,9], index: 12, kind: input, shape index: {}]
  %s13 = inlined_call_operand.vmem [shape: f32[384,9], index: 13, kind: output, shape index: {}]
  %s14 = sld [smem:[#allocation0]]
  $region62: #{tpu_custom_call.1} parent=0
    _
  %s16 = ssub.s32 1, %s14
  %s17 = scalar_select 0, %s16, %s14
  // Predicated region
  $region2: #{tpu_custom_call.1} parent=0 // pred_check
    _
  $region3: #{tpu_custom_call.1} parent=0 // pred_check_branch
    %19 = sbr.rel (0) target = $region5
  $region4: #{tpu_custom_call.1} parent=0 // pred_region
    _
  $region5: #{tpu_custom_call.1} parent=0 // pred_fallthru
    _
  // Predicated region
  $region6: #{tpu_custom_call.1} parent=0 // pred_check
    _
  $region7: #{tpu_custom_call.1} parent=0 // pred_check_branch
    %21 = sbr.rel (0) target = $region9
  $region8: #{tpu_custom_call.1} parent=0 // pred_region
    _
  $region9: #{tpu_custom_call.1} parent=0 // pred_fallthru
    _
  // Predicated region
  $region10: #{tpu_custom_call.1} parent=0 // pred_check
    _
  $region11: #{tpu_custom_call.1} parent=0 // pred_check_branch
    %23 = sbr.rel (0) target = $region13
  $region12: #{tpu_custom_call.1} parent=0 // pred_region
    _
  $region13: #{tpu_custom_call.1} parent=0 // pred_fallthru
    _
  // Predicated region
  $region14: #{tpu_custom_call.1} parent=0 // pred_check
    _
  $region15: #{tpu_custom_call.1} parent=0 // pred_check_branch
    %25 = sbr.rel (0) target = $region17
  $region16: #{tpu_custom_call.1} parent=0 // pred_region
    _
  $region17: #{tpu_custom_call.1} parent=0 // pred_fallthru
    _
  // Predicated region
  $region18: #{tpu_custom_call.1} parent=0 // pred_check
    _
  $region19: #{tpu_custom_call.1} parent=0 // pred_check_branch
    %27 = sbr.rel (0) target = $region21
  $region20: #{tpu_custom_call.1} parent=0 // pred_region
    _
  $region21: #{tpu_custom_call.1} parent=0 // pred_fallthru
    _
  // Predicated region
  $region22: #{tpu_custom_call.1} parent=0 // pred_check
    _
  $region23: #{tpu_custom_call.1} parent=0 // pred_check_branch
    %29 = sbr.rel (0) target = $region25
  $region24: #{tpu_custom_call.1} parent=0 // pred_region
    _
  $region25: #{tpu_custom_call.1} parent=0 // pred_fallthru
    _
  // Predicated region
  $region26: #{tpu_custom_call.1} parent=0 // pred_check
    _
  $region27: #{tpu_custom_call.1} parent=0 // pred_check_branch
    %31 = sbr.rel (0) target = $region29
  $region28: #{tpu_custom_call.1} parent=0 // pred_region
    _
  $region29: #{tpu_custom_call.1} parent=0 // pred_fallthru
    _
  // Predicated region
  $region30: #{tpu_custom_call.1} parent=0 // pred_check
    _
  $region31: #{tpu_custom_call.1} parent=0 // pred_check_branch
    %33 = sbr.rel (0) target = $region33
  $region32: #{tpu_custom_call.1} parent=0 // pred_region
    _
  $region33: #{tpu_custom_call.1} parent=0 // pred_fallthru
    _
  // Predicated region
  $region34: #{tpu_custom_call.1} parent=0 // pred_check
    _
  $region35: #{tpu_custom_call.1} parent=0 // pred_check_branch
    %35 = sbr.rel (0) target = $region37
  $region36: #{tpu_custom_call.1} parent=0 // pred_region
    _
  $region37: #{tpu_custom_call.1} parent=0 // pred_fallthru
    _
  // Predicated region
  $region38: #{tpu_custom_call.1} parent=0 // pred_check
    _
  $region39: #{tpu_custom_call.1} parent=0 // pred_check_branch
    %37 = sbr.rel (0) target = $region41
  $region40: #{tpu_custom_call.1} parent=0 // pred_region
    _
  $region41: #{tpu_custom_call.1} parent=0 // pred_fallthru
    _
  // Predicated region
  $region42: #{tpu_custom_call.1} parent=0 // pred_check
    _
  $region43: #{tpu_custom_call.1} parent=0 // pred_check_branch
    %39 = sbr.rel (0) target = $region45
  $region44: #{tpu_custom_call.1} parent=0 // pred_region
    _
  $region45: #{tpu_custom_call.1} parent=0 // pred_fallthru
    _
  // Predicated region
  $region46: #{tpu_custom_call.1} parent=0 // pred_check
    _
  $region47: #{tpu_custom_call.1} parent=0 // pred_check_branch
    %41 = sbr.rel (0) target = $region49
  $region48: #{tpu_custom_call.1} parent=0 // pred_region
    _
  $region49: #{tpu_custom_call.1} parent=0 // pred_fallthru
    _
  // Predicated region
  $region50: #{tpu_custom_call.1} parent=0 // pred_check
    _
  $region51: #{tpu_custom_call.1} parent=0 // pred_check_branch
    %43 = sbr.rel (0) target = $region53
  $region52: #{tpu_custom_call.1} parent=0 // pred_region
    _
  $region53: #{tpu_custom_call.1} parent=0 // pred_fallthru
    _
  %v44 = vld [vmem:[%s0] sm:$0xff]
  %v45 = vld [vmem:[%s0 + $0x8] sm:$0xff]
  %v46 = vld [vmem:[%s0 + $0x10] sm:$0xff]
  %v47 = vld [vmem:[%s0 + $0x18] sm:$0xff]
  %v48 = vld [vmem:[%s0 + $0x20] sm:$0xff]
  %v49 = vld [vmem:[%s0 + $0x28] sm:$0xff]
  %v50 = vld [vmem:[%s0 + $0x30] sm:$0xff]
  %v51 = vld [vmem:[%s0 + $0x38] sm:$0xff]
  %v52 = vld [vmem:[%s0 + $0x40] sm:$0xff]
  %v53 = vld [vmem:[%s0 + $0x48] sm:$0xff]
  %v54 = vld [vmem:[%s0 + $0x50] sm:$0xff]
  %v55 = vld [vmem:[%s0 + $0x58] sm:$0xff]
  %v56 = vld [vmem:[%s0 + $0x60] sm:$0xff]
  %v57 = vld [vmem:[%s0 + $0x68] sm:$0xff]
  %v58 = vld [vmem:[%s0 + $0x70] sm:$0xff]
  %v59 = vld [vmem:[%s0 + $0x78] sm:$0xff]
  %v60 = vld [vmem:[%s0 + $0x80] sm:$0xff]
  %v61 = vld [vmem:[%s0 + $0x88] sm:$0xff]
  %v62 = vld [vmem:[%s0 + $0x90] sm:$0xff]
  %v63 = vld [vmem:[%s0 + $0x98] sm:$0xff]
  %v64 = vld [vmem:[%s0 + $0xa0] sm:$0xff]
  %v65 = vld [vmem:[%s0 + $0xa8] sm:$0xff]
  %v66 = vld [vmem:[%s0 + $0xb0] sm:$0xff]
  %v67 = vld [vmem:[%s0 + $0xb8] sm:$0xff]
  %v68 = vld [vmem:[%s0 + $0xc0] sm:$0xff]
  %v69 = vld [vmem:[%s0 + $0xc8] sm:$0xff]
  %v70 = vld [vmem:[%s0 + $0xd0] sm:$0xff]
  %v71 = vld [vmem:[%s0 + $0xd8] sm:$0xff]
  %v72 = vld [vmem:[%s0 + $0xe0] sm:$0xff]
  %v73 = vld [vmem:[%s0 + $0xe8] sm:$0xff]
  %v74 = vld [vmem:[%s0 + $0xf0] sm:$0xff]
  %v75 = vld [vmem:[%s0 + $0xf8] sm:$0xff]
  %v76 = vld [vmem:[%s0 + $0x100] sm:$0xff]
  %v77 = vld [vmem:[%s0 + $0x108] sm:$0xff]
  %v78 = vld [vmem:[%s0 + $0x110] sm:$0xff]
  %v79 = vld [vmem:[%s0 + $0x118] sm:$0xff]
  %v80 = vld [vmem:[%s0 + $0x120] sm:$0xff]
  %v81 = vld [vmem:[%s0 + $0x128] sm:$0xff]
  %v82 = vld [vmem:[%s0 + $0x130] sm:$0xff]
  %v83 = vld [vmem:[%s0 + $0x138] sm:$0xff]
  %v84 = vld [vmem:[%s0 + $0x140] sm:$0xff]
  %v85 = vld [vmem:[%s0 + $0x148] sm:$0xff]
  %v86 = vld [vmem:[%s0 + $0x150] sm:$0xff]
  %v87 = vld [vmem:[%s0 + $0x158] sm:$0xff]
  %v88 = vld [vmem:[%s0 + $0x160] sm:$0xff]
  %v89 = vld [vmem:[%s0 + $0x168] sm:$0xff]
  %v90 = vld [vmem:[%s0 + $0x170] sm:$0xff]
  %v91 = vld [vmem:[%s0 + $0x178] sm:$0xff]
  %v92 = vld [vmem:[%s2] sm:$0x1f]
  %v93 = vld [vmem:[%s3] sm:$0x1]
  %v95 = vlaneseq
  %v96 = vshrl.u32 %v95, 7
  %v97 = vsub.s32 0, %v96
  %v98 = vrot.slane %v93, %v97
  %vm100 = vcmask 39936
  %v102 = vsel %vm100, %v44, 0
  %v105 = vsel %vm100, %v45, 0
  %v108 = vsel %vm100, %v46, 0
  %v111 = vsel %vm100, %v47, 0
  %v114 = vsel %vm100, %v48, 0
  %v117 = vsel %vm100, %v49, 0
  %v120 = vsel %vm100, %v50, 0
  %v123 = vsel %vm100, %v51, 0
  %v126 = vsel %vm100, %v52, 0
  %v129 = vsel %vm100, %v53, 0
  %v132 = vsel %vm100, %v54, 0
  %v135 = vsel %vm100, %v55, 0
  %v138 = vsel %vm100, %v56, 0
  %v141 = vsel %vm100, %v57, 0
  %v144 = vsel %vm100, %v58, 0
  %v147 = vsel %vm100, %v59, 0
  %v150 = vsel %vm100, %v60, 0
  %v153 = vsel %vm100, %v61, 0
  %v156 = vsel %vm100, %v62, 0
  %v159 = vsel %vm100, %v63, 0
  %v162 = vsel %vm100, %v64, 0
  %v165 = vsel %vm100, %v65, 0
  %v168 = vsel %vm100, %v66, 0
  %v171 = vsel %vm100, %v67, 0
  %v174 = vsel %vm100, %v68, 0
  %v177 = vsel %vm100, %v69, 0
  %v180 = vsel %vm100, %v70, 0
  %v183 = vsel %vm100, %v71, 0
  %v186 = vsel %vm100, %v72, 0
  %v189 = vsel %vm100, %v73, 0
  %v192 = vsel %vm100, %v74, 0
  %v195 = vsel %vm100, %v75, 0
  %v198 = vsel %vm100, %v76, 0
  %v201 = vsel %vm100, %v77, 0
  %v204 = vsel %vm100, %v78, 0
  %v207 = vsel %vm100, %v79, 0
  %v210 = vsel %vm100, %v80, 0
  %v213 = vsel %vm100, %v81, 0
  %v216 = vsel %vm100, %v82, 0
  %v219 = vsel %vm100, %v83, 0
  %v222 = vsel %vm100, %v84, 0
  %v225 = vsel %vm100, %v85, 0
  %v228 = vsel %vm100, %v86, 0
  %v231 = vsel %vm100, %v87, 0
  %v234 = vsel %vm100, %v88, 0
  %v237 = vsel %vm100, %v89, 0
  %v240 = vsel %vm100, %v90, 0
  %v243 = vsel %vm100, %v91, 0
  %vm245 = vcmask 1044480
  %v247 = vsel %vm245, %v92, 0
  %249 = vmatprep.subr.mxu0 0.0
  %250 = vmatpush1.msra.mxu0 0.0
  %251 = vmatprep.subr.mxu0 0.0
  %252 = vmatpush1.msra.mxu0 0.0
  %253 = vmatprep.subr.mxu0 0.0
  %254 = vmatpush1.msra.mxu0 0.0
  %255 = vmatprep.subr.mxu0 0.0
  %256 = vmatpush1.msra.mxu0 0.0
  %257 = vmatprep.subr.mxu0 0.0
  %258 = vmatpush1.msra.mxu0 0.0
  %259 = vmatprep.subr.mxu0 0.0
  %260 = vmatpush1.msra.mxu0 0.0
  %261 = vmatprep.subr.mxu0 0.0
  %262 = vmatpush1.msra.mxu0 0.0
  %263 = vmatprep.subr.mxu0 0.0
  %264 = vmatpush1.msra.mxu0 0.0
  %265 = vmatprep.subr.mxu0 0.0
  %266 = vmatpush1.msra.mxu0 0.0
  %267 = vmatprep.subr.mxu0 0.0
  %268 = vmatpush1.msra.mxu0 0.0
  %269 = vmatprep.subr.mxu0 0.0
  %270 = vmatpush1.msra.mxu0 0.0
  %271 = vmatprep.subr.mxu0 0.0
  %272 = vmatpush1.msra.mxu0 0.0
  %273 = vmatprep.subr.mxu0 0.0
  %274 = vmatpush1.msra.mxu0 0.0
  %275 = vmatprep.subr.mxu0 0.0
  %276 = vmatpush1.msra.mxu0 0.0
  %277 = vmatprep.subr.mxu0 0.0
  %278 = vmatpush1.msra.mxu0 0.0
  %279 = vmatprep.subr.mxu0 0.0
  %280 = vmatpush1.msra.mxu0 %v247
  %281 = vmatprep.subr.mxu0 0.0
  %282 = vmatpush2.msra.mxu0 0.0
  %283 = vmatprep.subr.mxu0 0.0
  %284 = vmatpush2.msra.mxu0 0.0
  %285 = vmatprep.subr.mxu0 0.0
  %286 = vmatpush2.msra.mxu0 0.0
  %287 = vmatprep.subr.mxu0 0.0
  %288 = vmatpush2.msra.mxu0 0.0
  %289 = vmatprep.subr.mxu0 0.0
  %290 = vmatpush2.msra.mxu0 0.0
  %291 = vmatprep.subr.mxu0 0.0
  %292 = vmatpush2.msra.mxu0 0.0
  %293 = vmatprep.subr.mxu0 0.0
  %294 = vmatpush2.msra.mxu0 0.0
  %295 = vmatprep.subr.mxu0 0.0
  %296 = vmatpush2.msra.mxu0 0.0
  %297 = vmatprep.subr.mxu0 0.0
  %298 = vmatpush2.msra.mxu0 0.0
  %299 = vmatprep.subr.mxu0 0.0
  %300 = vmatpush2.msra.mxu0 0.0
  %301 = vmatprep.subr.mxu0 0.0
  %302 = vmatpush2.msra.mxu0 0.0
  %303 = vmatprep.subr.mxu0 0.0
  %304 = vmatpush2.msra.mxu0 0.0
  %305 = vmatprep.subr.mxu0 0.0
  %306 = vmatpush2.msra.mxu0 0.0
  %307 = vmatprep.subr.mxu0 0.0
  %308 = vmatpush2.msra.mxu0 0.0
  %309 = vmatprep.subr.mxu0 0.0
  %310 = vmatpush2.msra.mxu0 0.0
  %311 = vmatprep.subr.mxu0 0.0
  %312 = vmatpush2.msra.mxu0 0.0
  %313 = vmatprep.mubr.f32.mxu0 0.0
  %314 = vmatmul.mubr.f32.gmra.mxu0 %v102
  %v315 = vpop.f32.mrf.mxu0
  %v316 = vadd.f32 %v98, %v315
  %v317 = vpop.f32.mrf.mxu0
  %318 = vmatprep.mubr.f32.mxu0 0.0
  %319 = vmatmul.mubr.f32.gmra.mxu0 %v105
  %v320 = vpop.f32.mrf.mxu0
  %v321 = vadd.f32 %v98, %v320
  %v322 = vpop.f32.mrf.mxu0
  %323 = vmatprep.mubr.f32.mxu0 0.0
  %324 = vmatmul.mubr.f32.gmra.mxu0 %v108
  %v325 = vpop.f32.mrf.mxu0
  %v326 = vadd.f32 %v98, %v325
  %v327 = vpop.f32.mrf.mxu0
  %328 = vmatprep.mubr.f32.mxu0 0.0
  %329 = vmatmul.mubr.f32.gmra.mxu0 %v111
  %v330 = vpop.f32.mrf.mxu0
  %v331 = vadd.f32 %v98, %v330
  %v332 = vpop.f32.mrf.mxu0
  %333 = vmatprep.mubr.f32.mxu0 0.0
  %334 = vmatmul.mubr.f32.gmra.mxu0 %v114
  %v335 = vpop.f32.mrf.mxu0
  %v336 = vadd.f32 %v98, %v335
  %v337 = vpop.f32.mrf.mxu0
  %338 = vmatprep.mubr.f32.mxu0 0.0
  %339 = vmatmul.mubr.f32.gmra.mxu0 %v117
  %v340 = vpop.f32.mrf.mxu0
  %v341 = vadd.f32 %v98, %v340
  %v342 = vpop.f32.mrf.mxu0
  %343 = vmatprep.mubr.f32.mxu0 0.0
  %344 = vmatmul.mubr.f32.gmra.mxu0 %v120
  %v345 = vpop.f32.mrf.mxu0
  %v346 = vadd.f32 %v98, %v345
  %v347 = vpop.f32.mrf.mxu0
  %348 = vmatprep.mubr.f32.mxu0 0.0
  %349 = vmatmul.mubr.f32.gmra.mxu0 %v123
  %v350 = vpop.f32.mrf.mxu0
  %v351 = vadd.f32 %v98, %v350
  %v352 = vpop.f32.mrf.mxu0
  %353 = vmatprep.mubr.f32.mxu0 0.0
  %354 = vmatmul.mubr.f32.gmra.mxu0 %v126
  %v355 = vpop.f32.mrf.mxu0
  %v356 = vadd.f32 %v98, %v355
  %v357 = vpop.f32.mrf.mxu0
  %358 = vmatprep.mubr.f32.mxu0 0.0
  %359 = vmatmul.mubr.f32.gmra.mxu0 %v129
  %v360 = vpop.f32.mrf.mxu0
  %v361 = vadd.f32 %v98, %v360
  %v362 = vpop.f32.mrf.mxu0
  %363 = vmatprep.mubr.f32.mxu0 0.0
  %364 = vmatmul.mubr.f32.gmra.mxu0 %v132
  %v365 = vpop.f32.mrf.mxu0
  %v366 = vadd.f32 %v98, %v365
  %v367 = vpop.f32.mrf.mxu0
  %368 = vmatprep.mubr.f32.mxu0 0.0
  %369 = vmatmul.mubr.f32.gmra.mxu0 %v135
  %v370 = vpop.f32.mrf.mxu0
  %v371 = vadd.f32 %v98, %v370
  %v372 = vpop.f32.mrf.mxu0
  %373 = vmatprep.mubr.f32.mxu0 0.0
  %374 = vmatmul.mubr.f32.gmra.mxu0 %v138
  %v375 = vpop.f32.mrf.mxu0
  %v376 = vadd.f32 %v98, %v375
  %v377 = vpop.f32.mrf.mxu0
  %378 = vmatprep.mubr.f32.mxu0 0.0
  %379 = vmatmul.mubr.f32.gmra.mxu0 %v141
  %v380 = vpop.f32.mrf.mxu0
  %v381 = vadd.f32 %v98, %v380
  %v382 = vpop.f32.mrf.mxu0
  %383 = vmatprep.mubr.f32.mxu0 0.0
  %384 = vmatmul.mubr.f32.gmra.mxu0 %v144
  %v385 = vpop.f32.mrf.mxu0
  %v386 = vadd.f32 %v98, %v385
  %v387 = vpop.f32.mrf.mxu0
  %388 = vmatprep.mubr.f32.mxu0 0.0
  %389 = vmatmul.mubr.f32.gmra.mxu0 %v147
  %v390 = vpop.f32.mrf.mxu0
  %v391 = vadd.f32 %v98, %v390
  %v392 = vpop.f32.mrf.mxu0
  %393 = vmatprep.mubr.f32.mxu0 0.0
  %394 = vmatmul.mubr.f32.gmra.mxu0 %v150
  %v395 = vpop.f32.mrf.mxu0
  %v396 = vadd.f32 %v98, %v395
  %v397 = vpop.f32.mrf.mxu0
  %398 = vmatprep.mubr.f32.mxu0 0.0
  %399 = vmatmul.mubr.f32.gmra.mxu0 %v153
  %v400 = vpop.f32.mrf.mxu0
  %v401 = vadd.f32 %v98, %v400
  %v402 = vpop.f32.mrf.mxu0
  %403 = vmatprep.mubr.f32.mxu0 0.0
  %404 = vmatmul.mubr.f32.gmra.mxu0 %v156
  %v405 = vpop.f32.mrf.mxu0
  %v406 = vadd.f32 %v98, %v405
  %v407 = vpop.f32.mrf.mxu0
  %408 = vmatprep.mubr.f32.mxu0 0.0
  %409 = vmatmul.mubr.f32.gmra.mxu0 %v159
  %v410 = vpop.f32.mrf.mxu0
  %v411 = vadd.f32 %v98, %v410
  %v412 = vpop.f32.mrf.mxu0
  %413 = vmatprep.mubr.f32.mxu0 0.0
  %414 = vmatmul.mubr.f32.gmra.mxu0 %v162
  %v415 = vpop.f32.mrf.mxu0
  %v416 = vadd.f32 %v98, %v415
  %v417 = vpop.f32.mrf.mxu0
  %418 = vmatprep.mubr.f32.mxu0 0.0
  %419 = vmatmul.mubr.f32.gmra.mxu0 %v165
  %v420 = vpop.f32.mrf.mxu0
  %v421 = vadd.f32 %v98, %v420
  %v422 = vpop.f32.mrf.mxu0
  %423 = vmatprep.mubr.f32.mxu0 0.0
  %424 = vmatmul.mubr.f32.gmra.mxu0 %v168
  %v425 = vpop.f32.mrf.mxu0
  %v426 = vadd.f32 %v98, %v425
  %v427 = vpop.f32.mrf.mxu0
  %428 = vmatprep.mubr.f32.mxu0 0.0
  %429 = vmatmul.mubr.f32.gmra.mxu0 %v171
  %v430 = vpop.f32.mrf.mxu0
  %v431 = vadd.f32 %v98, %v430
  %v432 = vpop.f32.mrf.mxu0
  %433 = vmatprep.mubr.f32.mxu0 0.0
  %434 = vmatmul.mubr.f32.gmra.mxu0 %v174
  %v435 = vpop.f32.mrf.mxu0
  %v436 = vadd.f32 %v98, %v435
  %v437 = vpop.f32.mrf.mxu0
  %438 = vmatprep.mubr.f32.mxu0 0.0
  %439 = vmatmul.mubr.f32.gmra.mxu0 %v177
  %v440 = vpop.f32.mrf.mxu0
  %v441 = vadd.f32 %v98, %v440
  %v442 = vpop.f32.mrf.mxu0
  %443 = vmatprep.mubr.f32.mxu0 0.0
  %444 = vmatmul.mubr.f32.gmra.mxu0 %v180
  %v445 = vpop.f32.mrf.mxu0
  %v446 = vadd.f32 %v98, %v445
  %v447 = vpop.f32.mrf.mxu0
  %448 = vmatprep.mubr.f32.mxu0 0.0
  %449 = vmatmul.mubr.f32.gmra.mxu0 %v183
  %v450 = vpop.f32.mrf.mxu0
  %v451 = vadd.f32 %v98, %v450
  %v452 = vpop.f32.mrf.mxu0
  %453 = vmatprep.mubr.f32.mxu0 0.0
  %454 = vmatmul.mubr.f32.gmra.mxu0 %v186
  %v455 = vpop.f32.mrf.mxu0
  %v456 = vadd.f32 %v98, %v455
  %v457 = vpop.f32.mrf.mxu0
  %458 = vmatprep.mubr.f32.mxu0 0.0
  %459 = vmatmul.mubr.f32.gmra.mxu0 %v189
  %v460 = vpop.f32.mrf.mxu0
  %v461 = vadd.f32 %v98, %v460
  %v462 = vpop.f32.mrf.mxu0
  %463 = vmatprep.mubr.f32.mxu0 0.0
  %464 = vmatmul.mubr.f32.gmra.mxu0 %v192
  %v465 = vpop.f32.mrf.mxu0
  %v466 = vadd.f32 %v98, %v465
  %v467 = vpop.f32.mrf.mxu0
  %468 = vmatprep.mubr.f32.mxu0 0.0
  %469 = vmatmul.mubr.f32.gmra.mxu0 %v195
  %v470 = vpop.f32.mrf.mxu0
  %v471 = vadd.f32 %v98, %v470
  %v472 = vpop.f32.mrf.mxu0
  %473 = vmatprep.mubr.f32.mxu0 0.0
  %474 = vmatmul.mubr.f32.gmra.mxu0 %v198
  %v475 = vpop.f32.mrf.mxu0
  %v476 = vadd.f32 %v98, %v475
  %v477 = vpop.f32.mrf.mxu0
  %478 = vmatprep.mubr.f32.mxu0 0.0
  %479 = vmatmul.mubr.f32.gmra.mxu0 %v201
  %v480 = vpop.f32.mrf.mxu0
  %v481 = vadd.f32 %v98, %v480
  %v482 = vpop.f32.mrf.mxu0
  %483 = vmatprep.mubr.f32.mxu0 0.0
  %484 = vmatmul.mubr.f32.gmra.mxu0 %v204
  %v485 = vpop.f32.mrf.mxu0
  %v486 = vadd.f32 %v98, %v485
  %v487 = vpop.f32.mrf.mxu0
  %488 = vmatprep.mubr.f32.mxu0 0.0
  %489 = vmatmul.mubr.f32.gmra.mxu0 %v207
  %v490 = vpop.f32.mrf.mxu0
  %v491 = vadd.f32 %v98, %v490
  %v492 = vpop.f32.mrf.mxu0
  %493 = vmatprep.mubr.f32.mxu0 0.0
  %494 = vmatmul.mubr.f32.gmra.mxu0 %v210
  %v495 = vpop.f32.mrf.mxu0
  %v496 = vadd.f32 %v98, %v495
  %v497 = vpop.f32.mrf.mxu0
  %498 = vmatprep.mubr.f32.mxu0 0.0
  %499 = vmatmul.mubr.f32.gmra.mxu0 %v213
  %v500 = vpop.f32.mrf.mxu0
  %v501 = vadd.f32 %v98, %v500
  %v502 = vpop.f32.mrf.mxu0
  %503 = vmatprep.mubr.f32.mxu0 0.0
  %504 = vmatmul.mubr.f32.gmra.mxu0 %v216
  %v505 = vpop.f32.mrf.mxu0
  %v506 = vadd.f32 %v98, %v505
  %v507 = vpop.f32.mrf.mxu0
  %508 = vmatprep.mubr.f32.mxu0 0.0
  %509 = vmatmul.mubr.f32.gmra.mxu0 %v219
  %v510 = vpop.f32.mrf.mxu0
  %v511 = vadd.f32 %v98, %v510
  %v512 = vpop.f32.mrf.mxu0
  %513 = vmatprep.mubr.f32.mxu0 0.0
  %514 = vmatmul.mubr.f32.gmra.mxu0 %v222
  %v515 = vpop.f32.mrf.mxu0
  %v516 = vadd.f32 %v98, %v515
  %v517 = vpop.f32.mrf.mxu0
  %518 = vmatprep.mubr.f32.mxu0 0.0
  %519 = vmatmul.mubr.f32.gmra.mxu0 %v225
  %v520 = vpop.f32.mrf.mxu0
  %v521 = vadd.f32 %v98, %v520
  %v522 = vpop.f32.mrf.mxu0
  %523 = vmatprep.mubr.f32.mxu0 0.0
  %524 = vmatmul.mubr.f32.gmra.mxu0 %v228
  %v525 = vpop.f32.mrf.mxu0
  %v526 = vadd.f32 %v98, %v525
  %v527 = vpop.f32.mrf.mxu0
  %528 = vmatprep.mubr.f32.mxu0 0.0
  %529 = vmatmul.mubr.f32.gmra.mxu0 %v231
  %v530 = vpop.f32.mrf.mxu0
  %v531 = vadd.f32 %v98, %v530
  %v532 = vpop.f32.mrf.mxu0
  %533 = vmatprep.mubr.f32.mxu0 0.0
  %534 = vmatmul.mubr.f32.gmra.mxu0 %v234
  %v535 = vpop.f32.mrf.mxu0
  %v536 = vadd.f32 %v98, %v535
  %v537 = vpop.f32.mrf.mxu0
  %538 = vmatprep.mubr.f32.mxu0 0.0
  %539 = vmatmul.mubr.f32.gmra.mxu0 %v237
  %v540 = vpop.f32.mrf.mxu0
  %v541 = vadd.f32 %v98, %v540
  %v542 = vpop.f32.mrf.mxu0
  %543 = vmatprep.mubr.f32.mxu0 0.0
  %544 = vmatmul.mubr.f32.gmra.mxu0 %v240
  %v545 = vpop.f32.mrf.mxu0
  %v546 = vadd.f32 %v98, %v545
  %v547 = vpop.f32.mrf.mxu0
  %548 = vmatprep.mubr.f32.mxu0 0.0
  %549 = vmatmul.mubr.f32.gmra.mxu0 %v243
  %v550 = vpop.f32.mrf.mxu0
  %v551 = vadd.f32 %v98, %v550
  %v552 = vpop.f32.mrf.mxu0
  %553 = vdwg.mxu0
  %vm554 = vcmp.gt.f32.partialorder %v316, 0.0
  %vm555 = vcmp.gt.f32.partialorder %v321, 0.0
  %vm556 = vcmp.gt.f32.partialorder %v326, 0.0
  %vm557 = vcmp.gt.f32.partialorder %v331, 0.0
  %vm558 = vcmp.gt.f32.partialorder %v336, 0.0
  %vm559 = vcmp.gt.f32.partialorder %v341, 0.0
  %vm560 = vcmp.gt.f32.partialorder %v346, 0.0
  %vm561 = vcmp.gt.f32.partialorder %v351, 0.0
  %vm562 = vcmp.gt.f32.partialorder %v356, 0.0
  %vm563 = vcmp.gt.f32.partialorder %v361, 0.0
  %vm564 = vcmp.gt.f32.partialorder %v366, 0.0
  %vm565 = vcmp.gt.f32.partialorder %v371, 0.0
  %vm566 = vcmp.gt.f32.partialorder %v376, 0.0
  %vm567 = vcmp.gt.f32.partialorder %v381, 0.0
  %vm568 = vcmp.gt.f32.partialorder %v386, 0.0
  %vm569 = vcmp.gt.f32.partialorder %v391, 0.0
  %vm570 = vcmp.gt.f32.partialorder %v396, 0.0
  %vm571 = vcmp.gt.f32.partialorder %v401, 0.0
  %vm572 = vcmp.gt.f32.partialorder %v406, 0.0
  %vm573 = vcmp.gt.f32.partialorder %v411, 0.0
  %vm574 = vcmp.gt.f32.partialorder %v416, 0.0
  %vm575 = vcmp.gt.f32.partialorder %v421, 0.0
  %vm576 = vcmp.gt.f32.partialorder %v426, 0.0
  %vm577 = vcmp.gt.f32.partialorder %v431, 0.0
  %vm578 = vcmp.gt.f32.partialorder %v436, 0.0
  %vm579 = vcmp.gt.f32.partialorder %v441, 0.0
  %vm580 = vcmp.gt.f32.partialorder %v446, 0.0
  %vm581 = vcmp.gt.f32.partialorder %v451, 0.0
  %vm582 = vcmp.gt.f32.partialorder %v456, 0.0
  %vm583 = vcmp.gt.f32.partialorder %v461, 0.0
  %vm584 = vcmp.gt.f32.partialorder %v466, 0.0
  %vm585 = vcmp.gt.f32.partialorder %v471, 0.0
  %vm586 = vcmp.gt.f32.partialorder %v476, 0.0
  %vm587 = vcmp.gt.f32.partialorder %v481, 0.0
  %vm588 = vcmp.gt.f32.partialorder %v486, 0.0
  %vm589 = vcmp.gt.f32.partialorder %v491, 0.0
  %vm590 = vcmp.gt.f32.partialorder %v496, 0.0
  %vm591 = vcmp.gt.f32.partialorder %v501, 0.0
  %vm592 = vcmp.gt.f32.partialorder %v506, 0.0
  %vm593 = vcmp.gt.f32.partialorder %v511, 0.0
  %vm594 = vcmp.gt.f32.partialorder %v516, 0.0
  %vm595 = vcmp.gt.f32.partialorder %v521, 0.0
  %vm596 = vcmp.gt.f32.partialorder %v526, 0.0
  %vm597 = vcmp.gt.f32.partialorder %v531, 0.0
  %vm598 = vcmp.gt.f32.partialorder %v536, 0.0
  %vm599 = vcmp.gt.f32.partialorder %v541, 0.0
  %vm600 = vcmp.gt.f32.partialorder %v546, 0.0
  %vm601 = vcmp.gt.f32.partialorder %v551, 0.0
  %v602 = vmul.f32 %v316, 0.01
  %v603 = vmul.f32 %v321, 0.01
  %v604 = vmul.f32 %v326, 0.01
  %v605 = vmul.f32 %v331, 0.01
  %v606 = vmul.f32 %v336, 0.01
  %v607 = vmul.f32 %v341, 0.01
  %v608 = vmul.f32 %v346, 0.01
  %v609 = vmul.f32 %v351, 0.01
  %v610 = vmul.f32 %v356, 0.01
  %v611 = vmul.f32 %v361, 0.01
  %v612 = vmul.f32 %v366, 0.01
  %v613 = vmul.f32 %v371, 0.01
  %v614 = vmul.f32 %v376, 0.01
  %v615 = vmul.f32 %v381, 0.01
  %v616 = vmul.f32 %v386, 0.01
  %v617 = vmul.f32 %v391, 0.01
  %v618 = vmul.f32 %v396, 0.01
  %v619 = vmul.f32 %v401, 0.01
  %v620 = vmul.f32 %v406, 0.01
  %v621 = vmul.f32 %v411, 0.01
  %v622 = vmul.f32 %v416, 0.01
  %v623 = vmul.f32 %v421, 0.01
  %v624 = vmul.f32 %v426, 0.01
  %v625 = vmul.f32 %v431, 0.01
  %v626 = vmul.f32 %v436, 0.01
  %v627 = vmul.f32 %v441, 0.01
  %v628 = vmul.f32 %v446, 0.01
  %v629 = vmul.f32 %v451, 0.01
  %v630 = vmul.f32 %v456, 0.01
  %v631 = vmul.f32 %v461, 0.01
  %v632 = vmul.f32 %v466, 0.01
  %v633 = vmul.f32 %v471, 0.01
  %v634 = vmul.f32 %v476, 0.01
  %v635 = vmul.f32 %v481, 0.01
  %v636 = vmul.f32 %v486, 0.01
  %v637 = vmul.f32 %v491, 0.01
  %v638 = vmul.f32 %v496, 0.01
  %v639 = vmul.f32 %v501, 0.01
  %v640 = vmul.f32 %v506, 0.01
  %v641 = vmul.f32 %v511, 0.01
  %v642 = vmul.f32 %v516, 0.01
  %v643 = vmul.f32 %v521, 0.01
  %v644 = vmul.f32 %v526, 0.01
  %v645 = vmul.f32 %v531, 0.01
  %v646 = vmul.f32 %v536, 0.01
  %v647 = vmul.f32 %v541, 0.01
  %v648 = vmul.f32 %v546, 0.01
  %v649 = vmul.f32 %v551, 0.01
  %v650 = vsel %vm554, %v316, %v602
  %v651 = vsel %vm555, %v321, %v603
  %v652 = vsel %vm556, %v326, %v604
  %v653 = vsel %vm557, %v331, %v605
  %v654 = vsel %vm558, %v336, %v606
  %v655 = vsel %vm559, %v341, %v607
  %v656 = vsel %vm560, %v346, %v608
  %v657 = vsel %vm561, %v351, %v609
  %v658 = vsel %vm562, %v356, %v610
  %v659 = vsel %vm563, %v361, %v611
  %v660 = vsel %vm564, %v366, %v612
  %v661 = vsel %vm565, %v371, %v613
  %v662 = vsel %vm566, %v376, %v614
  %v663 = vsel %vm567, %v381, %v615
  %v664 = vsel %vm568, %v386, %v616
  %v665 = vsel %vm569, %v391, %v617
  %v666 = vsel %vm570, %v396, %v618
  %v667 = vsel %vm571, %v401, %v619
  %v668 = vsel %vm572, %v406, %v620
  %v669 = vsel %vm573, %v411, %v621
  %v670 = vsel %vm574, %v416, %v622
  %v671 = vsel %vm575, %v421, %v623
  %v672 = vsel %vm576, %v426, %v624
  %v673 = vsel %vm577, %v431, %v625
  %v674 = vsel %vm578, %v436, %v626
  %v675 = vsel %vm579, %v441, %v627
  %v676 = vsel %vm580, %v446, %v628
  %v677 = vsel %vm581, %v451, %v629
  %v678 = vsel %vm582, %v456, %v630
  %v679 = vsel %vm583, %v461, %v631
  %v680 = vsel %vm584, %v466, %v632
  %v681 = vsel %vm585, %v471, %v633
  %v682 = vsel %vm586, %v476, %v634
  %v683 = vsel %vm587, %v481, %v635
  %v684 = vsel %vm588, %v486, %v636
  %v685 = vsel %vm589, %v491, %v637
  %v686 = vsel %vm590, %v496, %v638
  %v687 = vsel %vm591, %v501, %v639
  %v688 = vsel %vm592, %v506, %v640
  %v689 = vsel %vm593, %v511, %v641
  %v690 = vsel %vm594, %v516, %v642
  %v691 = vsel %vm595, %v521, %v643
  %v692 = vsel %vm596, %v526, %v644
  %v693 = vsel %vm597, %v531, %v645
  %v694 = vsel %vm598, %v536, %v646
  %v695 = vsel %vm599, %v541, %v647
  %v696 = vsel %vm600, %v546, %v648
  %v697 = vsel %vm601, %v551, %v649
  %v698 = vld [vmem:[%s4] sm:$0xff]
  %v699 = vld [vmem:[%s4 + $0x8] sm:$0xff]
  %v700 = vld [vmem:[%s4 + $0x10] sm:$0xff]
  %v701 = vld [vmem:[%s4 + $0x18] sm:$0xff]
  %v702 = vld [vmem:[%s5] sm:$0x1]
  %v704 = vlaneseq
  %v705 = vshrl.u32 %v704, 7
  %v706 = vsub.s32 0, %v705
  %v707 = vrot.slane %v702, %v706
  %vm709 = vcmask 261120
  %v711 = vsel %vm709, %v650, 0
  %v714 = vsel %vm709, %v651, 0
  %v717 = vsel %vm709, %v652, 0
  %v720 = vsel %vm709, %v653, 0
  %v723 = vsel %vm709, %v654, 0
  %v726 = vsel %vm709, %v655, 0
  %v729 = vsel %vm709, %v656, 0
  %v732 = vsel %vm709, %v657, 0
  %v735 = vsel %vm709, %v658, 0
  %v738 = vsel %vm709, %v659, 0
  %v741 = vsel %vm709, %v660, 0
  %v744 = vsel %vm709, %v661, 0
  %v747 = vsel %vm709, %v662, 0
  %v750 = vsel %vm709, %v663, 0
  %v753 = vsel %vm709, %v664, 0
  %v756 = vsel %vm709, %v665, 0
  %v759 = vsel %vm709, %v666, 0
  %v762 = vsel %vm709, %v667, 0
  %v765 = vsel %vm709, %v668, 0
  %v768 = vsel %vm709, %v669, 0
  %v771 = vsel %vm709, %v670, 0
  %v774 = vsel %vm709, %v671, 0
  %v777 = vsel %vm709, %v672, 0
  %v780 = vsel %vm709, %v673, 0
  %v783 = vsel %vm709, %v674, 0
  %v786 = vsel %vm709, %v675, 0
  %v789 = vsel %vm709, %v676, 0
  %v792 = vsel %vm709, %v677, 0
  %v795 = vsel %vm709, %v678, 0
  %v798 = vsel %vm709, %v679, 0
  %v801 = vsel %vm709, %v680, 0
  %v804 = vsel %vm709, %v681, 0
  %v807 = vsel %vm709, %v682, 0
  %v810 = vsel %vm709, %v683, 0
  %v813 = vsel %vm709, %v684, 0
  %v816 = vsel %vm709, %v685, 0
  %v819 = vsel %vm709, %v686, 0
  %v822 = vsel %vm709, %v687, 0
  %v825 = vsel %vm709, %v688, 0
  %v828 = vsel %vm709, %v689, 0
  %v831 = vsel %vm709, %v690, 0
  %v834 = vsel %vm709, %v691, 0
  %v837 = vsel %vm709, %v692, 0
  %v840 = vsel %vm709, %v693, 0
  %v843 = vsel %vm709, %v694, 0
  %v846 = vsel %vm709, %v695, 0
  %v849 = vsel %vm709, %v696, 0
  %v852 = vsel %vm709, %v697, 0
  %854 = vmatprep.subr.mxu0 0.0
  %855 = vmatpush1.msra.mxu0 0.0
  %856 = vmatprep.subr.mxu0 0.0
  %857 = vmatpush1.msra.mxu0 0.0
  %858 = vmatprep.subr.mxu0 0.0
  %859 = vmatpush1.msra.mxu0 0.0
  %860 = vmatprep.subr.mxu0 0.0
  %861 = vmatpush1.msra.mxu0 0.0
  %862 = vmatprep.subr.mxu0 0.0
  %863 = vmatpush1.msra.mxu0 0.0
  %864 = vmatprep.subr.mxu0 0.0
  %865 = vmatpush1.msra.mxu0 0.0
  %866 = vmatprep.subr.mxu0 0.0
  %867 = vmatpush1.msra.mxu0 0.0
  %868 = vmatprep.subr.mxu0 0.0
  %869 = vmatpush1.msra.mxu0 0.0
  %870 = vmatprep.subr.mxu0 0.0
  %871 = vmatpush1.msra.mxu0 0.0
  %872 = vmatprep.subr.mxu0 0.0
  %873 = vmatpush1.msra.mxu0 0.0
  %874 = vmatprep.subr.mxu0 0.0
  %875 = vmatpush1.msra.mxu0 0.0
  %876 = vmatprep.subr.mxu0 0.0
  %877 = vmatpush1.msra.mxu0 0.0
  %878 = vmatprep.subr.mxu0 0.0
  %879 = vmatpush1.msra.mxu0 %v701
  %880 = vmatprep.subr.mxu0 0.0
  %881 = vmatpush1.msra.mxu0 %v700
  %882 = vmatprep.subr.mxu0 0.0
  %883 = vmatpush1.msra.mxu0 %v699
  %884 = vmatprep.subr.mxu0 0.0
  %885 = vmatpush1.msra.mxu0 %v698
  %886 = vmatprep.subr.mxu0 0.0
  %887 = vmatpush2.msra.mxu0 0.0
  %888 = vmatprep.subr.mxu0 0.0
  %889 = vmatpush2.msra.mxu0 0.0
  %890 = vmatprep.subr.mxu0 0.0
  %891 = vmatpush2.msra.mxu0 0.0
  %892 = vmatprep.subr.mxu0 0.0
  %893 = vmatpush2.msra.mxu0 0.0
  %894 = vmatprep.subr.mxu0 0.0
  %895 = vmatpush2.msra.mxu0 0.0
  %896 = vmatprep.subr.mxu0 0.0
  %897 = vmatpush2.msra.mxu0 0.0
  %898 = vmatprep.subr.mxu0 0.0
  %899 = vmatpush2.msra.mxu0 0.0
  %900 = vmatprep.subr.mxu0 0.0
  %901 = vmatpush2.msra.mxu0 0.0
  %902 = vmatprep.subr.mxu0 0.0
  %903 = vmatpush2.msra.mxu0 0.0
  %904 = vmatprep.subr.mxu0 0.0
  %905 = vmatpush2.msra.mxu0 0.0
  %906 = vmatprep.subr.mxu0 0.0
  %907 = vmatpush2.msra.mxu0 0.0
  %908 = vmatprep.subr.mxu0 0.0
  %909 = vmatpush2.msra.mxu0 0.0
  %910 = vmatprep.subr.mxu0 0.0
  %911 = vmatpush2.msra.mxu0 0.0
  %912 = vmatprep.subr.mxu0 0.0
  %913 = vmatpush2.msra.mxu0 0.0
  %914 = vmatprep.subr.mxu0 0.0
  %915 = vmatpush2.msra.mxu0 0.0
  %916 = vmatprep.subr.mxu0 0.0
  %917 = vmatpush2.msra.mxu0 0.0
  %918 = vmatprep.mubr.f32.mxu0 0.0
  %919 = vmatmul.mubr.f32.gmra.mxu0 %v711
  %v920 = vpop.f32.mrf.mxu0
  %v921 = vadd.f32 %v707, %v920
  %v922 = vpop.f32.mrf.mxu0
  %923 = vmatprep.mubr.f32.mxu0 0.0
  %924 = vmatmul.mubr.f32.gmra.mxu0 %v714
  %v925 = vpop.f32.mrf.mxu0
  %v926 = vadd.f32 %v707, %v925
  %v927 = vpop.f32.mrf.mxu0
  %928 = vmatprep.mubr.f32.mxu0 0.0
  %929 = vmatmul.mubr.f32.gmra.mxu0 %v717
  %v930 = vpop.f32.mrf.mxu0
  %v931 = vadd.f32 %v707, %v930
  %v932 = vpop.f32.mrf.mxu0
  %933 = vmatprep.mubr.f32.mxu0 0.0
  %934 = vmatmul.mubr.f32.gmra.mxu0 %v720
  %v935 = vpop.f32.mrf.mxu0
  %v936 = vadd.f32 %v707, %v935
  %v937 = vpop.f32.mrf.mxu0
  %938 = vmatprep.mubr.f32.mxu0 0.0
  %939 = vmatmul.mubr.f32.gmra.mxu0 %v723
  %v940 = vpop.f32.mrf.mxu0
  %v941 = vadd.f32 %v707, %v940
  %v942 = vpop.f32.mrf.mxu0
  %943 = vmatprep.mubr.f32.mxu0 0.0
  %944 = vmatmul.mubr.f32.gmra.mxu0 %v726
  %v945 = vpop.f32.mrf.mxu0
  %v946 = vadd.f32 %v707, %v945
  %v947 = vpop.f32.mrf.mxu0
  %948 = vmatprep.mubr.f32.mxu0 0.0
  %949 = vmatmul.mubr.f32.gmra.mxu0 %v729
  %v950 = vpop.f32.mrf.mxu0
  %v951 = vadd.f32 %v707, %v950
  %v952 = vpop.f32.mrf.mxu0
  %953 = vmatprep.mubr.f32.mxu0 0.0
  %954 = vmatmul.mubr.f32.gmra.mxu0 %v732
  %v955 = vpop.f32.mrf.mxu0
  %v956 = vadd.f32 %v707, %v955
  %v957 = vpop.f32.mrf.mxu0
  %958 = vmatprep.mubr.f32.mxu0 0.0
  %959 = vmatmul.mubr.f32.gmra.mxu0 %v735
  %v960 = vpop.f32.mrf.mxu0
  %v961 = vadd.f32 %v707, %v960
  %v962 = vpop.f32.mrf.mxu0
  %963 = vmatprep.mubr.f32.mxu0 0.0
  %964 = vmatmul.mubr.f32.gmra.mxu0 %v738
  %v965 = vpop.f32.mrf.mxu0
  %v966 = vadd.f32 %v707, %v965
  %v967 = vpop.f32.mrf.mxu0
  %968 = vmatprep.mubr.f32.mxu0 0.0
  %969 = vmatmul.mubr.f32.gmra.mxu0 %v741
  %v970 = vpop.f32.mrf.mxu0
  %v971 = vadd.f32 %v707, %v970
  %v972 = vpop.f32.mrf.mxu0
  %973 = vmatprep.mubr.f32.mxu0 0.0
  %974 = vmatmul.mubr.f32.gmra.mxu0 %v744
  %v975 = vpop.f32.mrf.mxu0
  %v976 = vadd.f32 %v707, %v975
  %v977 = vpop.f32.mrf.mxu0
  %978 = vmatprep.mubr.f32.mxu0 0.0
  %979 = vmatmul.mubr.f32.gmra.mxu0 %v747
  %v980 = vpop.f32.mrf.mxu0
  %v981 = vadd.f32 %v707, %v980
  %v982 = vpop.f32.mrf.mxu0
  %983 = vmatprep.mubr.f32.mxu0 0.0
  %984 = vmatmul.mubr.f32.gmra.mxu0 %v750
  %v985 = vpop.f32.mrf.mxu0
  %v986 = vadd.f32 %v707, %v985
  %v987 = vpop.f32.mrf.mxu0
  %988 = vmatprep.mubr.f32.mxu0 0.0
  %989 = vmatmul.mubr.f32.gmra.mxu0 %v753
  %v990 = vpop.f32.mrf.mxu0
  %v991 = vadd.f32 %v707, %v990
  %v992 = vpop.f32.mrf.mxu0
  %993 = vmatprep.mubr.f32.mxu0 0.0
  %994 = vmatmul.mubr.f32.gmra.mxu0 %v756
  %v995 = vpop.f32.mrf.mxu0
  %v996 = vadd.f32 %v707, %v995
  %v997 = vpop.f32.mrf.mxu0
  %998 = vmatprep.mubr.f32.mxu0 0.0
  %999 = vmatmul.mubr.f32.gmra.mxu0 %v759
  %v1000 = vpop.f32.mrf.mxu0
  %v1001 = vadd.f32 %v707, %v1000
  %v1002 = vpop.f32.mrf.mxu0
  %1003 = vmatprep.mubr.f32.mxu0 0.0
  %1004 = vmatmul.mubr.f32.gmra.mxu0 %v762
  %v1005 = vpop.f32.mrf.mxu0
  %v1006 = vadd.f32 %v707, %v1005
  %v1007 = vpop.f32.mrf.mxu0
  %1008 = vmatprep.mubr.f32.mxu0 0.0
  %1009 = vmatmul.mubr.f32.gmra.mxu0 %v765
  %v1010 = vpop.f32.mrf.mxu0
  %v1011 = vadd.f32 %v707, %v1010
  %v1012 = vpop.f32.mrf.mxu0
  %1013 = vmatprep.mubr.f32.mxu0 0.0
  %1014 = vmatmul.mubr.f32.gmra.mxu0 %v768
  %v1015 = vpop.f32.mrf.mxu0
  %v1016 = vadd.f32 %v707, %v1015
  %v1017 = vpop.f32.mrf.mxu0
  %1018 = vmatprep.mubr.f32.mxu0 0.0
  %1019 = vmatmul.mubr.f32.gmra.mxu0 %v771
  %v1020 = vpop.f32.mrf.mxu0
  %v1021 = vadd.f32 %v707, %v1020
  %v1022 = vpop.f32.mrf.mxu0
  %1023 = vmatprep.mubr.f32.mxu0 0.0
  %1024 = vmatmul.mubr.f32.gmra.mxu0 %v774
  %v1025 = vpop.f32.mrf.mxu0
  %v1026 = vadd.f32 %v707, %v1025
  %v1027 = vpop.f32.mrf.mxu0
  %1028 = vmatprep.mubr.f32.mxu0 0.0
  %1029 = vmatmul.mubr.f32.gmra.mxu0 %v777
  %v1030 = vpop.f32.mrf.mxu0
  %v1031 = vadd.f32 %v707, %v1030
  %v1032 = vpop.f32.mrf.mxu0
  %1033 = vmatprep.mubr.f32.mxu0 0.0
  %1034 = vmatmul.mubr.f32.gmra.mxu0 %v780
  %v1035 = vpop.f32.mrf.mxu0
  %v1036 = vadd.f32 %v707, %v1035
  %v1037 = vpop.f32.mrf.mxu0
  %1038 = vmatprep.mubr.f32.mxu0 0.0
  %1039 = vmatmul.mubr.f32.gmra.mxu0 %v783
  %v1040 = vpop.f32.mrf.mxu0
  %v1041 = vadd.f32 %v707, %v1040
  %v1042 = vpop.f32.mrf.mxu0
  %1043 = vmatprep.mubr.f32.mxu0 0.0
  %1044 = vmatmul.mubr.f32.gmra.mxu0 %v786
  %v1045 = vpop.f32.mrf.mxu0
  %v1046 = vadd.f32 %v707, %v1045
  %v1047 = vpop.f32.mrf.mxu0
  %1048 = vmatprep.mubr.f32.mxu0 0.0
  %1049 = vmatmul.mubr.f32.gmra.mxu0 %v789
  %v1050 = vpop.f32.mrf.mxu0
  %v1051 = vadd.f32 %v707, %v1050
  %v1052 = vpop.f32.mrf.mxu0
  %1053 = vmatprep.mubr.f32.mxu0 0.0
  %1054 = vmatmul.mubr.f32.gmra.mxu0 %v792
  %v1055 = vpop.f32.mrf.mxu0
  %v1056 = vadd.f32 %v707, %v1055
  %v1057 = vpop.f32.mrf.mxu0
  %1058 = vmatprep.mubr.f32.mxu0 0.0
  %1059 = vmatmul.mubr.f32.gmra.mxu0 %v795
  %v1060 = vpop.f32.mrf.mxu0
  %v1061 = vadd.f32 %v707, %v1060
  %v1062 = vpop.f32.mrf.mxu0
  %1063 = vmatprep.mubr.f32.mxu0 0.0
  %1064 = vmatmul.mubr.f32.gmra.mxu0 %v798
  %v1065 = vpop.f32.mrf.mxu0
  %v1066 = vadd.f32 %v707, %v1065
  %v1067 = vpop.f32.mrf.mxu0
  %1068 = vmatprep.mubr.f32.mxu0 0.0
  %1069 = vmatmul.mubr.f32.gmra.mxu0 %v801
  %v1070 = vpop.f32.mrf.mxu0
  %v1071 = vadd.f32 %v707, %v1070
  %v1072 = vpop.f32.mrf.mxu0
  %1073 = vmatprep.mubr.f32.mxu0 0.0
  %1074 = vmatmul.mubr.f32.gmra.mxu0 %v804
  %v1075 = vpop.f32.mrf.mxu0
  %v1076 = vadd.f32 %v707, %v1075
  %v1077 = vpop.f32.mrf.mxu0
  %1078 = vmatprep.mubr.f32.mxu0 0.0
  %1079 = vmatmul.mubr.f32.gmra.mxu0 %v807
  %v1080 = vpop.f32.mrf.mxu0
  %v1081 = vadd.f32 %v707, %v1080
  %v1082 = vpop.f32.mrf.mxu0
  %1083 = vmatprep.mubr.f32.mxu0 0.0
  %1084 = vmatmul.mubr.f32.gmra.mxu0 %v810
  %v1085 = vpop.f32.mrf.mxu0
  %v1086 = vadd.f32 %v707, %v1085
  %v1087 = vpop.f32.mrf.mxu0
  %1088 = vmatprep.mubr.f32.mxu0 0.0
  %1089 = vmatmul.mubr.f32.gmra.mxu0 %v813
  %v1090 = vpop.f32.mrf.mxu0
  %v1091 = vadd.f32 %v707, %v1090
  %v1092 = vpop.f32.mrf.mxu0
  %1093 = vmatprep.mubr.f32.mxu0 0.0
  %1094 = vmatmul.mubr.f32.gmra.mxu0 %v816
  %v1095 = vpop.f32.mrf.mxu0
  %v1096 = vadd.f32 %v707, %v1095
  %v1097 = vpop.f32.mrf.mxu0
  %1098 = vmatprep.mubr.f32.mxu0 0.0
  %1099 = vmatmul.mubr.f32.gmra.mxu0 %v819
  %v1100 = vpop.f32.mrf.mxu0
  %v1101 = vadd.f32 %v707, %v1100
  %v1102 = vpop.f32.mrf.mxu0
  %1103 = vmatprep.mubr.f32.mxu0 0.0
  %1104 = vmatmul.mubr.f32.gmra.mxu0 %v822
  %v1105 = vpop.f32.mrf.mxu0
  %v1106 = vadd.f32 %v707, %v1105
  %v1107 = vpop.f32.mrf.mxu0
  %1108 = vmatprep.mubr.f32.mxu0 0.0
  %1109 = vmatmul.mubr.f32.gmra.mxu0 %v825
  %v1110 = vpop.f32.mrf.mxu0
  %v1111 = vadd.f32 %v707, %v1110
  %v1112 = vpop.f32.mrf.mxu0
  %1113 = vmatprep.mubr.f32.mxu0 0.0
  %1114 = vmatmul.mubr.f32.gmra.mxu0 %v828
  %v1115 = vpop.f32.mrf.mxu0
  %v1116 = vadd.f32 %v707, %v1115
  %v1117 = vpop.f32.mrf.mxu0
  %1118 = vmatprep.mubr.f32.mxu0 0.0
  %1119 = vmatmul.mubr.f32.gmra.mxu0 %v831
  %v1120 = vpop.f32.mrf.mxu0
  %v1121 = vadd.f32 %v707, %v1120
  %v1122 = vpop.f32.mrf.mxu0
  %1123 = vmatprep.mubr.f32.mxu0 0.0
  %1124 = vmatmul.mubr.f32.gmra.mxu0 %v834
  %v1125 = vpop.f32.mrf.mxu0
  %v1126 = vadd.f32 %v707, %v1125
  %v1127 = vpop.f32.mrf.mxu0
  %1128 = vmatprep.mubr.f32.mxu0 0.0
  %1129 = vmatmul.mubr.f32.gmra.mxu0 %v837
  %v1130 = vpop.f32.mrf.mxu0
  %v1131 = vadd.f32 %v707, %v1130
  %v1132 = vpop.f32.mrf.mxu0
  %1133 = vmatprep.mubr.f32.mxu0 0.0
  %1134 = vmatmul.mubr.f32.gmra.mxu0 %v840
  %v1135 = vpop.f32.mrf.mxu0
  %v1136 = vadd.f32 %v707, %v1135
  %v1137 = vpop.f32.mrf.mxu0
  %1138 = vmatprep.mubr.f32.mxu0 0.0
  %1139 = vmatmul.mubr.f32.gmra.mxu0 %v843
  %v1140 = vpop.f32.mrf.mxu0
  %v1141 = vadd.f32 %v707, %v1140
  %v1142 = vpop.f32.mrf.mxu0
  %1143 = vmatprep.mubr.f32.mxu0 0.0
  %1144 = vmatmul.mubr.f32.gmra.mxu0 %v846
  %v1145 = vpop.f32.mrf.mxu0
  %v1146 = vadd.f32 %v707, %v1145
  %v1147 = vpop.f32.mrf.mxu0
  %1148 = vmatprep.mubr.f32.mxu0 0.0
  %1149 = vmatmul.mubr.f32.gmra.mxu0 %v849
  %v1150 = vpop.f32.mrf.mxu0
  %v1151 = vadd.f32 %v707, %v1150
  %v1152 = vpop.f32.mrf.mxu0
  %1153 = vmatprep.mubr.f32.mxu0 0.0
  %1154 = vmatmul.mubr.f32.gmra.mxu0 %v852
  %v1155 = vpop.f32.mrf.mxu0
  %v1156 = vadd.f32 %v707, %v1155
  %v1157 = vpop.f32.mrf.mxu0
  %1158 = vdwg.mxu0
  %vm1159 = vcmp.gt.f32.partialorder %v921, 0.0
  %vm1160 = vcmp.gt.f32.partialorder %v926, 0.0
  %vm1161 = vcmp.gt.f32.partialorder %v931, 0.0
  %vm1162 = vcmp.gt.f32.partialorder %v936, 0.0
  %vm1163 = vcmp.gt.f32.partialorder %v941, 0.0
  %vm1164 = vcmp.gt.f32.partialorder %v946, 0.0
  %vm1165 = vcmp.gt.f32.partialorder %v951, 0.0
  %vm1166 = vcmp.gt.f32.partialorder %v956, 0.0
  %vm1167 = vcmp.gt.f32.partialorder %v961, 0.0
  %vm1168 = vcmp.gt.f32.partialorder %v966, 0.0
  %vm1169 = vcmp.gt.f32.partialorder %v971, 0.0
  %vm1170 = vcmp.gt.f32.partialorder %v976, 0.0
  %vm1171 = vcmp.gt.f32.partialorder %v981, 0.0
  %vm1172 = vcmp.gt.f32.partialorder %v986, 0.0
  %vm1173 = vcmp.gt.f32.partialorder %v991, 0.0
  %vm1174 = vcmp.gt.f32.partialorder %v996, 0.0
  %vm1175 = vcmp.gt.f32.partialorder %v1001, 0.0
  %vm1176 = vcmp.gt.f32.partialorder %v1006, 0.0
  %vm1177 = vcmp.gt.f32.partialorder %v1011, 0.0
  %vm1178 = vcmp.gt.f32.partialorder %v1016, 0.0
  %vm1179 = vcmp.gt.f32.partialorder %v1021, 0.0
  %vm1180 = vcmp.gt.f32.partialorder %v1026, 0.0
  %vm1181 = vcmp.gt.f32.partialorder %v1031, 0.0
  %vm1182 = vcmp.gt.f32.partialorder %v1036, 0.0
  %vm1183 = vcmp.gt.f32.partialorder %v1041, 0.0
  %vm1184 = vcmp.gt.f32.partialorder %v1046, 0.0
  %vm1185 = vcmp.gt.f32.partialorder %v1051, 0.0
  %vm1186 = vcmp.gt.f32.partialorder %v1056, 0.0
  %vm1187 = vcmp.gt.f32.partialorder %v1061, 0.0
  %vm1188 = vcmp.gt.f32.partialorder %v1066, 0.0
  %vm1189 = vcmp.gt.f32.partialorder %v1071, 0.0
  %vm1190 = vcmp.gt.f32.partialorder %v1076, 0.0
  %vm1191 = vcmp.gt.f32.partialorder %v1081, 0.0
  %vm1192 = vcmp.gt.f32.partialorder %v1086, 0.0
  %vm1193 = vcmp.gt.f32.partialorder %v1091, 0.0
  %vm1194 = vcmp.gt.f32.partialorder %v1096, 0.0
  %vm1195 = vcmp.gt.f32.partialorder %v1101, 0.0
  %vm1196 = vcmp.gt.f32.partialorder %v1106, 0.0
  %vm1197 = vcmp.gt.f32.partialorder %v1111, 0.0
  %vm1198 = vcmp.gt.f32.partialorder %v1116, 0.0
  %vm1199 = vcmp.gt.f32.partialorder %v1121, 0.0
  %vm1200 = vcmp.gt.f32.partialorder %v1126, 0.0
  %vm1201 = vcmp.gt.f32.partialorder %v1131, 0.0
  %vm1202 = vcmp.gt.f32.partialorder %v1136, 0.0
  %vm1203 = vcmp.gt.f32.partialorder %v1141, 0.0
  %vm1204 = vcmp.gt.f32.partialorder %v1146, 0.0
  %vm1205 = vcmp.gt.f32.partialorder %v1151, 0.0
  %vm1206 = vcmp.gt.f32.partialorder %v1156, 0.0
  %v1207 = vmul.f32 %v921, 0.01
  %v1208 = vmul.f32 %v926, 0.01
  %v1209 = vmul.f32 %v931, 0.01
  %v1210 = vmul.f32 %v936, 0.01
  %v1211 = vmul.f32 %v941, 0.01
  %v1212 = vmul.f32 %v946, 0.01
  %v1213 = vmul.f32 %v951, 0.01
  %v1214 = vmul.f32 %v956, 0.01
  %v1215 = vmul.f32 %v961, 0.01
  %v1216 = vmul.f32 %v966, 0.01
  %v1217 = vmul.f32 %v971, 0.01
  %v1218 = vmul.f32 %v976, 0.01
  %v1219 = vmul.f32 %v981, 0.01
  %v1220 = vmul.f32 %v986, 0.01
  %v1221 = vmul.f32 %v991, 0.01
  %v1222 = vmul.f32 %v996, 0.01
  %v1223 = vmul.f32 %v1001, 0.01
  %v1224 = vmul.f32 %v1006, 0.01
  %v1225 = vmul.f32 %v1011, 0.01
  %v1226 = vmul.f32 %v1016, 0.01
  %v1227 = vmul.f32 %v1021, 0.01
  %v1228 = vmul.f32 %v1026, 0.01
  %v1229 = vmul.f32 %v1031, 0.01
  %v1230 = vmul.f32 %v1036, 0.01
  %v1231 = vmul.f32 %v1041, 0.01
  %v1232 = vmul.f32 %v1046, 0.01
  %v1233 = vmul.f32 %v1051, 0.01
  %v1234 = vmul.f32 %v1056, 0.01
  %v1235 = vmul.f32 %v1061, 0.01
  %v1236 = vmul.f32 %v1066, 0.01
  %v1237 = vmul.f32 %v1071, 0.01
  %v1238 = vmul.f32 %v1076, 0.01
  %v1239 = vmul.f32 %v1081, 0.01
  %v1240 = vmul.f32 %v1086, 0.01
  %v1241 = vmul.f32 %v1091, 0.01
  %v1242 = vmul.f32 %v1096, 0.01
  %v1243 = vmul.f32 %v1101, 0.01
  %v1244 = vmul.f32 %v1106, 0.01
  %v1245 = vmul.f32 %v1111, 0.01
  %v1246 = vmul.f32 %v1116, 0.01
  %v1247 = vmul.f32 %v1121, 0.01
  %v1248 = vmul.f32 %v1126, 0.01
  %v1249 = vmul.f32 %v1131, 0.01
  %v1250 = vmul.f32 %v1136, 0.01
  %v1251 = vmul.f32 %v1141, 0.01
  %v1252 = vmul.f32 %v1146, 0.01
  %v1253 = vmul.f32 %v1151, 0.01
  %v1254 = vmul.f32 %v1156, 0.01
  %v1255 = vsel %vm1159, %v921, %v1207
  %v1256 = vsel %vm1160, %v926, %v1208
  %v1257 = vsel %vm1161, %v931, %v1209
  %v1258 = vsel %vm1162, %v936, %v1210
  %v1259 = vsel %vm1163, %v941, %v1211
  %v1260 = vsel %vm1164, %v946, %v1212
  %v1261 = vsel %vm1165, %v951, %v1213
  %v1262 = vsel %vm1166, %v956, %v1214
  %v1263 = vsel %vm1167, %v961, %v1215
  %v1264 = vsel %vm1168, %v966, %v1216
  %v1265 = vsel %vm1169, %v971, %v1217
  %v1266 = vsel %vm1170, %v976, %v1218
  %v1267 = vsel %vm1171, %v981, %v1219
  %v1268 = vsel %vm1172, %v986, %v1220
  %v1269 = vsel %vm1173, %v991, %v1221
  %v1270 = vsel %vm1174, %v996, %v1222
  %v1271 = vsel %vm1175, %v1001, %v1223
  %v1272 = vsel %vm1176, %v1006, %v1224
  %v1273 = vsel %vm1177, %v1011, %v1225
  %v1274 = vsel %vm1178, %v1016, %v1226
  %v1275 = vsel %vm1179, %v1021, %v1227
  %v1276 = vsel %vm1180, %v1026, %v1228
  %v1277 = vsel %vm1181, %v1031, %v1229
  %v1278 = vsel %vm1182, %v1036, %v1230
  %v1279 = vsel %vm1183, %v1041, %v1231
  %v1280 = vsel %vm1184, %v1046, %v1232
  %v1281 = vsel %vm1185, %v1051, %v1233
  %v1282 = vsel %vm1186, %v1056, %v1234
  %v1283 = vsel %vm1187, %v1061, %v1235
  %v1284 = vsel %vm1188, %v1066, %v1236
  %v1285 = vsel %vm1189, %v1071, %v1237
  %v1286 = vsel %vm1190, %v1076, %v1238
  %v1287 = vsel %vm1191, %v1081, %v1239
  %v1288 = vsel %vm1192, %v1086, %v1240
  %v1289 = vsel %vm1193, %v1091, %v1241
  %v1290 = vsel %vm1194, %v1096, %v1242
  %v1291 = vsel %vm1195, %v1101, %v1243
  %v1292 = vsel %vm1196, %v1106, %v1244
  %v1293 = vsel %vm1197, %v1111, %v1245
  %v1294 = vsel %vm1198, %v1116, %v1246
  %v1295 = vsel %vm1199, %v1121, %v1247
  %v1296 = vsel %vm1200, %v1126, %v1248
  %v1297 = vsel %vm1201, %v1131, %v1249
  %v1298 = vsel %vm1202, %v1136, %v1250
  %v1299 = vsel %vm1203, %v1141, %v1251
  %v1300 = vsel %vm1204, %v1146, %v1252
  %v1301 = vsel %vm1205, %v1151, %v1253
  %v1302 = vsel %vm1206, %v1156, %v1254
  %v1303 = vld [vmem:[%s6] sm:$0xff]
  %v1304 = vld [vmem:[%s6 + $0x8] sm:$0xff]
  %v1305 = vld [vmem:[%s6 + $0x10] sm:$0xff]
  %v1306 = vld [vmem:[%s6 + $0x18] sm:$0xff]
  %v1307 = vld [vmem:[%s7] sm:$0x1]
  %v1309 = vlaneseq
  %v1310 = vshrl.u32 %v1309, 7
  %v1311 = vsub.s32 0, %v1310
  %v1312 = vrot.slane %v1307, %v1311
  %v1315 = vsel %vm709, %v1255, 0
  %v1318 = vsel %vm709, %v1256, 0
  %v1321 = vsel %vm709, %v1257, 0
  %v1324 = vsel %vm709, %v1258, 0
  %v1327 = vsel %vm709, %v1259, 0
  %v1330 = vsel %vm709, %v1260, 0
  %v1333 = vsel %vm709, %v1261, 0
  %v1336 = vsel %vm709, %v1262, 0
  %v1339 = vsel %vm709, %v1263, 0
  %v1342 = vsel %vm709, %v1264, 0
  %v1345 = vsel %vm709, %v1265, 0
  %v1348 = vsel %vm709, %v1266, 0
  %v1351 = vsel %vm709, %v1267, 0
  %v1354 = vsel %vm709, %v1268, 0
  %v1357 = vsel %vm709, %v1269, 0
  %v1360 = vsel %vm709, %v1270, 0
  %v1363 = vsel %vm709, %v1271, 0
  %v1366 = vsel %vm709, %v1272, 0
  %v1369 = vsel %vm709, %v1273, 0
  %v1372 = vsel %vm709, %v1274, 0
  %v1375 = vsel %vm709, %v1275, 0
  %v1378 = vsel %vm709, %v1276, 0
  %v1381 = vsel %vm709, %v1277, 0
  %v1384 = vsel %vm709, %v1278, 0
  %v1387 = vsel %vm709, %v1279, 0
  %v1390 = vsel %vm709, %v1280, 0
  %v1393 = vsel %vm709, %v1281, 0
  %v1396 = vsel %vm709, %v1282, 0
  %v1399 = vsel %vm709, %v1283, 0
  %v1402 = vsel %vm709, %v1284, 0
  %v1405 = vsel %vm709, %v1285, 0
  %v1408 = vsel %vm709, %v1286, 0
  %v1411 = vsel %vm709, %v1287, 0
  %v1414 = vsel %vm709, %v1288, 0
  %v1417 = vsel %vm709, %v1289, 0
  %v1420 = vsel %vm709, %v1290, 0
  %v1423 = vsel %vm709, %v1291, 0
  %v1426 = vsel %vm709, %v1292, 0
  %v1429 = vsel %vm709, %v1293, 0
  %v1432 = vsel %vm709, %v1294, 0
  %v1435 = vsel %vm709, %v1295, 0
  %v1438 = vsel %vm709, %v1296, 0
  %v1441 = vsel %vm709, %v1297, 0
  %v1444 = vsel %vm709, %v1298, 0
  %v1447 = vsel %vm709, %v1299, 0
  %v1450 = vsel %vm709, %v1300, 0
  %v1453 = vsel %vm709, %v1301, 0
  %v1456 = vsel %vm709, %v1302, 0
  %1458 = vmatprep.subr.mxu0 0.0
  %1459 = vmatpush1.msra.mxu0 0.0
  %1460 = vmatprep.subr.mxu0 0.0
  %1461 = vmatpush1.msra.mxu0 0.0
  %1462 = vmatprep.subr.mxu0 0.0
  %1463 = vmatpush1.msra.mxu0 0.0
  %1464 = vmatprep.subr.mxu0 0.0
  %1465 = vmatpush1.msra.mxu0 0.0
  %1466 = vmatprep.subr.mxu0 0.0
  %1467 = vmatpush1.msra.mxu0 0.0
  %1468 = vmatprep.subr.mxu0 0.0
  %1469 = vmatpush1.msra.mxu0 0.0
  %1470 = vmatprep.subr.mxu0 0.0
  %1471 = vmatpush1.msra.mxu0 0.0
  %1472 = vmatprep.subr.mxu0 0.0
  %1473 = vmatpush1.msra.mxu0 0.0
  %1474 = vmatprep.subr.mxu0 0.0
  %1475 = vmatpush1.msra.mxu0 0.0
  %1476 = vmatprep.subr.mxu0 0.0
  %1477 = vmatpush1.msra.mxu0 0.0
  %1478 = vmatprep.subr.mxu0 0.0
  %1479 = vmatpush1.msra.mxu0 0.0
  %1480 = vmatprep.subr.mxu0 0.0
  %1481 = vmatpush1.msra.mxu0 0.0
  %1482 = vmatprep.subr.mxu0 0.0
  %1483 = vmatpush1.msra.mxu0 %v1306
  %1484 = vmatprep.subr.mxu0 0.0
  %1485 = vmatpush1.msra.mxu0 %v1305
  %1486 = vmatprep.subr.mxu0 0.0
  %1487 = vmatpush1.msra.mxu0 %v1304
  %1488 = vmatprep.subr.mxu0 0.0
  %1489 = vmatpush1.msra.mxu0 %v1303
  %1490 = vmatprep.subr.mxu0 0.0
  %1491 = vmatpush2.msra.mxu0 0.0
  %1492 = vmatprep.subr.mxu0 0.0
  %1493 = vmatpush2.msra.mxu0 0.0
  %1494 = vmatprep.subr.mxu0 0.0
  %1495 = vmatpush2.msra.mxu0 0.0
  %1496 = vmatprep.subr.mxu0 0.0
  %1497 = vmatpush2.msra.mxu0 0.0
  %1498 = vmatprep.subr.mxu0 0.0
  %1499 = vmatpush2.msra.mxu0 0.0
  %1500 = vmatprep.subr.mxu0 0.0
  %1501 = vmatpush2.msra.mxu0 0.0
  %1502 = vmatprep.subr.mxu0 0.0
  %1503 = vmatpush2.msra.mxu0 0.0
  %1504 = vmatprep.subr.mxu0 0.0
  %1505 = vmatpush2.msra.mxu0 0.0
  %1506 = vmatprep.subr.mxu0 0.0
  %1507 = vmatpush2.msra.mxu0 0.0
  %1508 = vmatprep.subr.mxu0 0.0
  %1509 = vmatpush2.msra.mxu0 0.0
  %1510 = vmatprep.subr.mxu0 0.0
  %1511 = vmatpush2.msra.mxu0 0.0
  %1512 = vmatprep.subr.mxu0 0.0
  %1513 = vmatpush2.msra.mxu0 0.0
  %1514 = vmatprep.subr.mxu0 0.0
  %1515 = vmatpush2.msra.mxu0 0.0
  %1516 = vmatprep.subr.mxu0 0.0
  %1517 = vmatpush2.msra.mxu0 0.0
  %1518 = vmatprep.subr.mxu0 0.0
  %1519 = vmatpush2.msra.mxu0 0.0
  %1520 = vmatprep.subr.mxu0 0.0
  %1521 = vmatpush2.msra.mxu0 0.0
  %1522 = vmatprep.mubr.f32.mxu0 0.0
  %1523 = vmatmul.mubr.f32.gmra.mxu0 %v1315
  %v1524 = vpop.f32.mrf.mxu0
  %v1525 = vadd.f32 %v1312, %v1524
  %v1526 = vpop.f32.mrf.mxu0
  %1527 = vmatprep.mubr.f32.mxu0 0.0
  %1528 = vmatmul.mubr.f32.gmra.mxu0 %v1318
  %v1529 = vpop.f32.mrf.mxu0
  %v1530 = vadd.f32 %v1312, %v1529
  %v1531 = vpop.f32.mrf.mxu0
  %1532 = vmatprep.mubr.f32.mxu0 0.0
  %1533 = vmatmul.mubr.f32.gmra.mxu0 %v1321
  %v1534 = vpop.f32.mrf.mxu0
  %v1535 = vadd.f32 %v1312, %v1534
  %v1536 = vpop.f32.mrf.mxu0
  %1537 = vmatprep.mubr.f32.mxu0 0.0
  %1538 = vmatmul.mubr.f32.gmra.mxu0 %v1324
  %v1539 = vpop.f32.mrf.mxu0
  %v1540 = vadd.f32 %v1312, %v1539
  %v1541 = vpop.f32.mrf.mxu0
  %1542 = vmatprep.mubr.f32.mxu0 0.0
  %1543 = vmatmul.mubr.f32.gmra.mxu0 %v1327
  %v1544 = vpop.f32.mrf.mxu0
  %v1545 = vadd.f32 %v1312, %v1544
  %v1546 = vpop.f32.mrf.mxu0
  %1547 = vmatprep.mubr.f32.mxu0 0.0
  %1548 = vmatmul.mubr.f32.gmra.mxu0 %v1330
  %v1549 = vpop.f32.mrf.mxu0
  %v1550 = vadd.f32 %v1312, %v1549
  %v1551 = vpop.f32.mrf.mxu0
  %1552 = vmatprep.mubr.f32.mxu0 0.0
  %1553 = vmatmul.mubr.f32.gmra.mxu0 %v1333
  %v1554 = vpop.f32.mrf.mxu0
  %v1555 = vadd.f32 %v1312, %v1554
  %v1556 = vpop.f32.mrf.mxu0
  %1557 = vmatprep.mubr.f32.mxu0 0.0
  %1558 = vmatmul.mubr.f32.gmra.mxu0 %v1336
  %v1559 = vpop.f32.mrf.mxu0
  %v1560 = vadd.f32 %v1312, %v1559
  %v1561 = vpop.f32.mrf.mxu0
  %1562 = vmatprep.mubr.f32.mxu0 0.0
  %1563 = vmatmul.mubr.f32.gmra.mxu0 %v1339
  %v1564 = vpop.f32.mrf.mxu0
  %v1565 = vadd.f32 %v1312, %v1564
  %v1566 = vpop.f32.mrf.mxu0
  %1567 = vmatprep.mubr.f32.mxu0 0.0
  %1568 = vmatmul.mubr.f32.gmra.mxu0 %v1342
  %v1569 = vpop.f32.mrf.mxu0
  %v1570 = vadd.f32 %v1312, %v1569
  %v1571 = vpop.f32.mrf.mxu0
  %1572 = vmatprep.mubr.f32.mxu0 0.0
  %1573 = vmatmul.mubr.f32.gmra.mxu0 %v1345
  %v1574 = vpop.f32.mrf.mxu0
  %v1575 = vadd.f32 %v1312, %v1574
  %v1576 = vpop.f32.mrf.mxu0
  %1577 = vmatprep.mubr.f32.mxu0 0.0
  %1578 = vmatmul.mubr.f32.gmra.mxu0 %v1348
  %v1579 = vpop.f32.mrf.mxu0
  %v1580 = vadd.f32 %v1312, %v1579
  %v1581 = vpop.f32.mrf.mxu0
  %1582 = vmatprep.mubr.f32.mxu0 0.0
  %1583 = vmatmul.mubr.f32.gmra.mxu0 %v1351
  %v1584 = vpop.f32.mrf.mxu0
  %v1585 = vadd.f32 %v1312, %v1584
  %v1586 = vpop.f32.mrf.mxu0
  %1587 = vmatprep.mubr.f32.mxu0 0.0
  %1588 = vmatmul.mubr.f32.gmra.mxu0 %v1354
  %v1589 = vpop.f32.mrf.mxu0
  %v1590 = vadd.f32 %v1312, %v1589
  %v1591 = vpop.f32.mrf.mxu0
  %1592 = vmatprep.mubr.f32.mxu0 0.0
  %1593 = vmatmul.mubr.f32.gmra.mxu0 %v1357
  %v1594 = vpop.f32.mrf.mxu0
  %v1595 = vadd.f32 %v1312, %v1594
  %v1596 = vpop.f32.mrf.mxu0
  %1597 = vmatprep.mubr.f32.mxu0 0.0
  %1598 = vmatmul.mubr.f32.gmra.mxu0 %v1360
  %v1599 = vpop.f32.mrf.mxu0
  %v1600 = vadd.f32 %v1312, %v1599
  %v1601 = vpop.f32.mrf.mxu0
  %1602 = vmatprep.mubr.f32.mxu0 0.0
  %1603 = vmatmul.mubr.f32.gmra.mxu0 %v1363
  %v1604 = vpop.f32.mrf.mxu0
  %v1605 = vadd.f32 %v1312, %v1604
  %v1606 = vpop.f32.mrf.mxu0
  %1607 = vmatprep.mubr.f32.mxu0 0.0
  %1608 = vmatmul.mubr.f32.gmra.mxu0 %v1366
  %v1609 = vpop.f32.mrf.mxu0
  %v1610 = vadd.f32 %v1312, %v1609
  %v1611 = vpop.f32.mrf.mxu0
  %1612 = vmatprep.mubr.f32.mxu0 0.0
  %1613 = vmatmul.mubr.f32.gmra.mxu0 %v1369
  %v1614 = vpop.f32.mrf.mxu0
  %v1615 = vadd.f32 %v1312, %v1614
  %v1616 = vpop.f32.mrf.mxu0
  %1617 = vmatprep.mubr.f32.mxu0 0.0
  %1618 = vmatmul.mubr.f32.gmra.mxu0 %v1372
  %v1619 = vpop.f32.mrf.mxu0
  %v1620 = vadd.f32 %v1312, %v1619
  %v1621 = vpop.f32.mrf.mxu0
  %1622 = vmatprep.mubr.f32.mxu0 0.0
  %1623 = vmatmul.mubr.f32.gmra.mxu0 %v1375
  %v1624 = vpop.f32.mrf.mxu0
  %v1625 = vadd.f32 %v1312, %v1624
  %v1626 = vpop.f32.mrf.mxu0
  %1627 = vmatprep.mubr.f32.mxu0 0.0
  %1628 = vmatmul.mubr.f32.gmra.mxu0 %v1378
  %v1629 = vpop.f32.mrf.mxu0
  %v1630 = vadd.f32 %v1312, %v1629
  %v1631 = vpop.f32.mrf.mxu0
  %1632 = vmatprep.mubr.f32.mxu0 0.0
  %1633 = vmatmul.mubr.f32.gmra.mxu0 %v1381
  %v1634 = vpop.f32.mrf.mxu0
  %v1635 = vadd.f32 %v1312, %v1634
  %v1636 = vpop.f32.mrf.mxu0
  %1637 = vmatprep.mubr.f32.mxu0 0.0
  %1638 = vmatmul.mubr.f32.gmra.mxu0 %v1384
  %v1639 = vpop.f32.mrf.mxu0
  %v1640 = vadd.f32 %v1312, %v1639
  %v1641 = vpop.f32.mrf.mxu0
  %1642 = vmatprep.mubr.f32.mxu0 0.0
  %1643 = vmatmul.mubr.f32.gmra.mxu0 %v1387
  %v1644 = vpop.f32.mrf.mxu0
  %v1645 = vadd.f32 %v1312, %v1644
  %v1646 = vpop.f32.mrf.mxu0
  %1647 = vmatprep.mubr.f32.mxu0 0.0
  %1648 = vmatmul.mubr.f32.gmra.mxu0 %v1390
  %v1649 = vpop.f32.mrf.mxu0
  %v1650 = vadd.f32 %v1312, %v1649
  %v1651 = vpop.f32.mrf.mxu0
  %1652 = vmatprep.mubr.f32.mxu0 0.0
  %1653 = vmatmul.mubr.f32.gmra.mxu0 %v1393
  %v1654 = vpop.f32.mrf.mxu0
  %v1655 = vadd.f32 %v1312, %v1654
  %v1656 = vpop.f32.mrf.mxu0
  %1657 = vmatprep.mubr.f32.mxu0 0.0
  %1658 = vmatmul.mubr.f32.gmra.mxu0 %v1396
  %v1659 = vpop.f32.mrf.mxu0
  %v1660 = vadd.f32 %v1312, %v1659
  %v1661 = vpop.f32.mrf.mxu0
  %1662 = vmatprep.mubr.f32.mxu0 0.0
  %1663 = vmatmul.mubr.f32.gmra.mxu0 %v1399
  %v1664 = vpop.f32.mrf.mxu0
  %v1665 = vadd.f32 %v1312, %v1664
  %v1666 = vpop.f32.mrf.mxu0
  %1667 = vmatprep.mubr.f32.mxu0 0.0
  %1668 = vmatmul.mubr.f32.gmra.mxu0 %v1402
  %v1669 = vpop.f32.mrf.mxu0
  %v1670 = vadd.f32 %v1312, %v1669
  %v1671 = vpop.f32.mrf.mxu0
  %1672 = vmatprep.mubr.f32.mxu0 0.0
  %1673 = vmatmul.mubr.f32.gmra.mxu0 %v1405
  %v1674 = vpop.f32.mrf.mxu0
  %v1675 = vadd.f32 %v1312, %v1674
  %v1676 = vpop.f32.mrf.mxu0
  %1677 = vmatprep.mubr.f32.mxu0 0.0
  %1678 = vmatmul.mubr.f32.gmra.mxu0 %v1408
  %v1679 = vpop.f32.mrf.mxu0
  %v1680 = vadd.f32 %v1312, %v1679
  %v1681 = vpop.f32.mrf.mxu0
  %1682 = vmatprep.mubr.f32.mxu0 0.0
  %1683 = vmatmul.mubr.f32.gmra.mxu0 %v1411
  %v1684 = vpop.f32.mrf.mxu0
  %v1685 = vadd.f32 %v1312, %v1684
  %v1686 = vpop.f32.mrf.mxu0
  %1687 = vmatprep.mubr.f32.mxu0 0.0
  %1688 = vmatmul.mubr.f32.gmra.mxu0 %v1414
  %v1689 = vpop.f32.mrf.mxu0
  %v1690 = vadd.f32 %v1312, %v1689
  %v1691 = vpop.f32.mrf.mxu0
  %1692 = vmatprep.mubr.f32.mxu0 0.0
  %1693 = vmatmul.mubr.f32.gmra.mxu0 %v1417
  %v1694 = vpop.f32.mrf.mxu0
  %v1695 = vadd.f32 %v1312, %v1694
  %v1696 = vpop.f32.mrf.mxu0
  %1697 = vmatprep.mubr.f32.mxu0 0.0
  %1698 = vmatmul.mubr.f32.gmra.mxu0 %v1420
  %v1699 = vpop.f32.mrf.mxu0
  %v1700 = vadd.f32 %v1312, %v1699
  %v1701 = vpop.f32.mrf.mxu0
  %1702 = vmatprep.mubr.f32.mxu0 0.0
  %1703 = vmatmul.mubr.f32.gmra.mxu0 %v1423
  %v1704 = vpop.f32.mrf.mxu0
  %v1705 = vadd.f32 %v1312, %v1704
  %v1706 = vpop.f32.mrf.mxu0
  %1707 = vmatprep.mubr.f32.mxu0 0.0
  %1708 = vmatmul.mubr.f32.gmra.mxu0 %v1426
  %v1709 = vpop.f32.mrf.mxu0
  %v1710 = vadd.f32 %v1312, %v1709
  %v1711 = vpop.f32.mrf.mxu0
  %1712 = vmatprep.mubr.f32.mxu0 0.0
  %1713 = vmatmul.mubr.f32.gmra.mxu0 %v1429
  %v1714 = vpop.f32.mrf.mxu0
  %v1715 = vadd.f32 %v1312, %v1714
  %v1716 = vpop.f32.mrf.mxu0
  %1717 = vmatprep.mubr.f32.mxu0 0.0
  %1718 = vmatmul.mubr.f32.gmra.mxu0 %v1432
  %v1719 = vpop.f32.mrf.mxu0
  %v1720 = vadd.f32 %v1312, %v1719
  %v1721 = vpop.f32.mrf.mxu0
  %1722 = vmatprep.mubr.f32.mxu0 0.0
  %1723 = vmatmul.mubr.f32.gmra.mxu0 %v1435
  %v1724 = vpop.f32.mrf.mxu0
  %v1725 = vadd.f32 %v1312, %v1724
  %v1726 = vpop.f32.mrf.mxu0
  %1727 = vmatprep.mubr.f32.mxu0 0.0
  %1728 = vmatmul.mubr.f32.gmra.mxu0 %v1438
  %v1729 = vpop.f32.mrf.mxu0
  %v1730 = vadd.f32 %v1312, %v1729
  %v1731 = vpop.f32.mrf.mxu0
  %1732 = vmatprep.mubr.f32.mxu0 0.0
  %1733 = vmatmul.mubr.f32.gmra.mxu0 %v1441
  %v1734 = vpop.f32.mrf.mxu0
  %v1735 = vadd.f32 %v1312, %v1734
  %v1736 = vpop.f32.mrf.mxu0
  %1737 = vmatprep.mubr.f32.mxu0 0.0
  %1738 = vmatmul.mubr.f32.gmra.mxu0 %v1444
  %v1739 = vpop.f32.mrf.mxu0
  %v1740 = vadd.f32 %v1312, %v1739
  %v1741 = vpop.f32.mrf.mxu0
  %1742 = vmatprep.mubr.f32.mxu0 0.0
  %1743 = vmatmul.mubr.f32.gmra.mxu0 %v1447
  %v1744 = vpop.f32.mrf.mxu0
  %v1745 = vadd.f32 %v1312, %v1744
  %v1746 = vpop.f32.mrf.mxu0
  %1747 = vmatprep.mubr.f32.mxu0 0.0
  %1748 = vmatmul.mubr.f32.gmra.mxu0 %v1450
  %v1749 = vpop.f32.mrf.mxu0
  %v1750 = vadd.f32 %v1312, %v1749
  %v1751 = vpop.f32.mrf.mxu0
  %1752 = vmatprep.mubr.f32.mxu0 0.0
  %1753 = vmatmul.mubr.f32.gmra.mxu0 %v1453
  %v1754 = vpop.f32.mrf.mxu0
  %v1755 = vadd.f32 %v1312, %v1754
  %v1756 = vpop.f32.mrf.mxu0
  %1757 = vmatprep.mubr.f32.mxu0 0.0
  %1758 = vmatmul.mubr.f32.gmra.mxu0 %v1456
  %v1759 = vpop.f32.mrf.mxu0
  %v1760 = vadd.f32 %v1312, %v1759
  %v1761 = vpop.f32.mrf.mxu0
  %1762 = vdwg.mxu0
  %vm1763 = vcmp.gt.f32.partialorder %v1525, 0.0
  %vm1764 = vcmp.gt.f32.partialorder %v1530, 0.0
  %vm1765 = vcmp.gt.f32.partialorder %v1535, 0.0
  %vm1766 = vcmp.gt.f32.partialorder %v1540, 0.0
  %vm1767 = vcmp.gt.f32.partialorder %v1545, 0.0
  %vm1768 = vcmp.gt.f32.partialorder %v1550, 0.0
  %vm1769 = vcmp.gt.f32.partialorder %v1555, 0.0
  %vm1770 = vcmp.gt.f32.partialorder %v1560, 0.0
  %vm1771 = vcmp.gt.f32.partialorder %v1565, 0.0
  %vm1772 = vcmp.gt.f32.partialorder %v1570, 0.0
  %vm1773 = vcmp.gt.f32.partialorder %v1575, 0.0
  %vm1774 = vcmp.gt.f32.partialorder %v1580, 0.0
  %vm1775 = vcmp.gt.f32.partialorder %v1585, 0.0
  %vm1776 = vcmp.gt.f32.partialorder %v1590, 0.0
  %vm1777 = vcmp.gt.f32.partialorder %v1595, 0.0
  %vm1778 = vcmp.gt.f32.partialorder %v1600, 0.0
  %vm1779 = vcmp.gt.f32.partialorder %v1605, 0.0
  %vm1780 = vcmp.gt.f32.partialorder %v1610, 0.0
  %vm1781 = vcmp.gt.f32.partialorder %v1615, 0.0
  %vm1782 = vcmp.gt.f32.partialorder %v1620, 0.0
  %vm1783 = vcmp.gt.f32.partialorder %v1625, 0.0
  %vm1784 = vcmp.gt.f32.partialorder %v1630, 0.0
  %vm1785 = vcmp.gt.f32.partialorder %v1635, 0.0
  %vm1786 = vcmp.gt.f32.partialorder %v1640, 0.0
  %vm1787 = vcmp.gt.f32.partialorder %v1645, 0.0
  %vm1788 = vcmp.gt.f32.partialorder %v1650, 0.0
  %vm1789 = vcmp.gt.f32.partialorder %v1655, 0.0
  %vm1790 = vcmp.gt.f32.partialorder %v1660, 0.0
  %vm1791 = vcmp.gt.f32.partialorder %v1665, 0.0
  %vm1792 = vcmp.gt.f32.partialorder %v1670, 0.0
  %vm1793 = vcmp.gt.f32.partialorder %v1675, 0.0
  %vm1794 = vcmp.gt.f32.partialorder %v1680, 0.0
  %vm1795 = vcmp.gt.f32.partialorder %v1685, 0.0
  %vm1796 = vcmp.gt.f32.partialorder %v1690, 0.0
  %vm1797 = vcmp.gt.f32.partialorder %v1695, 0.0
  %vm1798 = vcmp.gt.f32.partialorder %v1700, 0.0
  %vm1799 = vcmp.gt.f32.partialorder %v1705, 0.0
  %vm1800 = vcmp.gt.f32.partialorder %v1710, 0.0
  %vm1801 = vcmp.gt.f32.partialorder %v1715, 0.0
  %vm1802 = vcmp.gt.f32.partialorder %v1720, 0.0
  %vm1803 = vcmp.gt.f32.partialorder %v1725, 0.0
  %vm1804 = vcmp.gt.f32.partialorder %v1730, 0.0
  %vm1805 = vcmp.gt.f32.partialorder %v1735, 0.0
  %vm1806 = vcmp.gt.f32.partialorder %v1740, 0.0
  %vm1807 = vcmp.gt.f32.partialorder %v1745, 0.0
  %vm1808 = vcmp.gt.f32.partialorder %v1750, 0.0
  %vm1809 = vcmp.gt.f32.partialorder %v1755, 0.0
  %vm1810 = vcmp.gt.f32.partialorder %v1760, 0.0
  %v1811 = vmul.f32 %v1525, 0.01
  %v1812 = vmul.f32 %v1530, 0.01
  %v1813 = vmul.f32 %v1535, 0.01
  %v1814 = vmul.f32 %v1540, 0.01
  %v1815 = vmul.f32 %v1545, 0.01
  %v1816 = vmul.f32 %v1550, 0.01
  %v1817 = vmul.f32 %v1555, 0.01
  %v1818 = vmul.f32 %v1560, 0.01
  %v1819 = vmul.f32 %v1565, 0.01
  %v1820 = vmul.f32 %v1570, 0.01
  %v1821 = vmul.f32 %v1575, 0.01
  %v1822 = vmul.f32 %v1580, 0.01
  %v1823 = vmul.f32 %v1585, 0.01
  %v1824 = vmul.f32 %v1590, 0.01
  %v1825 = vmul.f32 %v1595, 0.01
  %v1826 = vmul.f32 %v1600, 0.01
  %v1827 = vmul.f32 %v1605, 0.01
  %v1828 = vmul.f32 %v1610, 0.01
  %v1829 = vmul.f32 %v1615, 0.01
  %v1830 = vmul.f32 %v1620, 0.01
  %v1831 = vmul.f32 %v1625, 0.01
  %v1832 = vmul.f32 %v1630, 0.01
  %v1833 = vmul.f32 %v1635, 0.01
  %v1834 = vmul.f32 %v1640, 0.01
  %v1835 = vmul.f32 %v1645, 0.01
  %v1836 = vmul.f32 %v1650, 0.01
  %v1837 = vmul.f32 %v1655, 0.01
  %v1838 = vmul.f32 %v1660, 0.01
  %v1839 = vmul.f32 %v1665, 0.01
  %v1840 = vmul.f32 %v1670, 0.01
  %v1841 = vmul.f32 %v1675, 0.01
  %v1842 = vmul.f32 %v1680, 0.01
  %v1843 = vmul.f32 %v1685, 0.01
  %v1844 = vmul.f32 %v1690, 0.01
  %v1845 = vmul.f32 %v1695, 0.01
  %v1846 = vmul.f32 %v1700, 0.01
  %v1847 = vmul.f32 %v1705, 0.01
  %v1848 = vmul.f32 %v1710, 0.01
  %v1849 = vmul.f32 %v1715, 0.01
  %v1850 = vmul.f32 %v1720, 0.01
  %v1851 = vmul.f32 %v1725, 0.01
  %v1852 = vmul.f32 %v1730, 0.01
  %v1853 = vmul.f32 %v1735, 0.01
  %v1854 = vmul.f32 %v1740, 0.01
  %v1855 = vmul.f32 %v1745, 0.01
  %v1856 = vmul.f32 %v1750, 0.01
  %v1857 = vmul.f32 %v1755, 0.01
  %v1858 = vmul.f32 %v1760, 0.01
  %v1859 = vsel %vm1763, %v1525, %v1811
  %v1860 = vsel %vm1764, %v1530, %v1812
  %v1861 = vsel %vm1765, %v1535, %v1813
  %v1862 = vsel %vm1766, %v1540, %v1814
  %v1863 = vsel %vm1767, %v1545, %v1815
  %v1864 = vsel %vm1768, %v1550, %v1816
  %v1865 = vsel %vm1769, %v1555, %v1817
  %v1866 = vsel %vm1770, %v1560, %v1818
  %v1867 = vsel %vm1771, %v1565, %v1819
  %v1868 = vsel %vm1772, %v1570, %v1820
  %v1869 = vsel %vm1773, %v1575, %v1821
  %v1870 = vsel %vm1774, %v1580, %v1822
  %v1871 = vsel %vm1775, %v1585, %v1823
  %v1872 = vsel %vm1776, %v1590, %v1824
  %v1873 = vsel %vm1777, %v1595, %v1825
  %v1874 = vsel %vm1778, %v1600, %v1826
  %v1875 = vsel %vm1779, %v1605, %v1827
  %v1876 = vsel %vm1780, %v1610, %v1828
  %v1877 = vsel %vm1781, %v1615, %v1829
  %v1878 = vsel %vm1782, %v1620, %v1830
  %v1879 = vsel %vm1783, %v1625, %v1831
  %v1880 = vsel %vm1784, %v1630, %v1832
  %v1881 = vsel %vm1785, %v1635, %v1833
  %v1882 = vsel %vm1786, %v1640, %v1834
  %v1883 = vsel %vm1787, %v1645, %v1835
  %v1884 = vsel %vm1788, %v1650, %v1836
  %v1885 = vsel %vm1789, %v1655, %v1837
  %v1886 = vsel %vm1790, %v1660, %v1838
  %v1887 = vsel %vm1791, %v1665, %v1839
  %v1888 = vsel %vm1792, %v1670, %v1840
  %v1889 = vsel %vm1793, %v1675, %v1841
  %v1890 = vsel %vm1794, %v1680, %v1842
  %v1891 = vsel %vm1795, %v1685, %v1843
  %v1892 = vsel %vm1796, %v1690, %v1844
  %v1893 = vsel %vm1797, %v1695, %v1845
  %v1894 = vsel %vm1798, %v1700, %v1846
  %v1895 = vsel %vm1799, %v1705, %v1847
  %v1896 = vsel %vm1800, %v1710, %v1848
  %v1897 = vsel %vm1801, %v1715, %v1849
  %v1898 = vsel %vm1802, %v1720, %v1850
  %v1899 = vsel %vm1803, %v1725, %v1851
  %v1900 = vsel %vm1804, %v1730, %v1852
  %v1901 = vsel %vm1805, %v1735, %v1853
  %v1902 = vsel %vm1806, %v1740, %v1854
  %v1903 = vsel %vm1807, %v1745, %v1855
  %v1904 = vsel %vm1808, %v1750, %v1856
  %v1905 = vsel %vm1809, %v1755, %v1857
  %v1906 = vsel %vm1810, %v1760, %v1858
  %v1907 = vld [vmem:[%s8] sm:$0xff]
  %v1908 = vld [vmem:[%s8 + $0x8] sm:$0xff]
  %v1909 = vld [vmem:[%s8 + $0x10] sm:$0xff]
  %v1910 = vld [vmem:[%s8 + $0x18] sm:$0xff]
  %v1911 = vld [vmem:[%s9] sm:$0x1]
  %v1913 = vlaneseq
  %v1914 = vshrl.u32 %v1913, 7
  %v1915 = vsub.s32 0, %v1914
  %v1916 = vrot.slane %v1911, %v1915
  %v1919 = vsel %vm709, %v1859, 0
  %v1922 = vsel %vm709, %v1860, 0
  %v1925 = vsel %vm709, %v1861, 0
  %v1928 = vsel %vm709, %v1862, 0
  %v1931 = vsel %vm709, %v1863, 0
  %v1934 = vsel %vm709, %v1864, 0
  %v1937 = vsel %vm709, %v1865, 0
  %v1940 = vsel %vm709, %v1866, 0
  %v1943 = vsel %vm709, %v1867, 0
  %v1946 = vsel %vm709, %v1868, 0
  %v1949 = vsel %vm709, %v1869, 0
  %v1952 = vsel %vm709, %v1870, 0
  %v1955 = vsel %vm709, %v1871, 0
  %v1958 = vsel %vm709, %v1872, 0
  %v1961 = vsel %vm709, %v1873, 0
  %v1964 = vsel %vm709, %v1874, 0
  %v1967 = vsel %vm709, %v1875, 0
  %v1970 = vsel %vm709, %v1876, 0
  %v1973 = vsel %vm709, %v1877, 0
  %v1976 = vsel %vm709, %v1878, 0
  %v1979 = vsel %vm709, %v1879, 0
  %v1982 = vsel %vm709, %v1880, 0
  %v1985 = vsel %vm709, %v1881, 0
  %v1988 = vsel %vm709, %v1882, 0
  %v1991 = vsel %vm709, %v1883, 0
  %v1994 = vsel %vm709, %v1884, 0
  %v1997 = vsel %vm709, %v1885, 0
  %v2000 = vsel %vm709, %v1886, 0
  %v2003 = vsel %vm709, %v1887, 0
  %v2006 = vsel %vm709, %v1888, 0
  %v2009 = vsel %vm709, %v1889, 0
  %v2012 = vsel %vm709, %v1890, 0
  %v2015 = vsel %vm709, %v1891, 0
  %v2018 = vsel %vm709, %v1892, 0
  %v2021 = vsel %vm709, %v1893, 0
  %v2024 = vsel %vm709, %v1894, 0
  %v2027 = vsel %vm709, %v1895, 0
  %v2030 = vsel %vm709, %v1896, 0
  %v2033 = vsel %vm709, %v1897, 0
  %v2036 = vsel %vm709, %v1898, 0
  %v2039 = vsel %vm709, %v1899, 0
  %v2042 = vsel %vm709, %v1900, 0
  %v2045 = vsel %vm709, %v1901, 0
  %v2048 = vsel %vm709, %v1902, 0
  %v2051 = vsel %vm709, %v1903, 0
  %v2054 = vsel %vm709, %v1904, 0
  %v2057 = vsel %vm709, %v1905, 0
  %v2060 = vsel %vm709, %v1906, 0
  %2062 = vmatprep.subr.mxu0 0.0
  %2063 = vmatpush1.msra.mxu0 0.0
  %2064 = vmatprep.subr.mxu0 0.0
  %2065 = vmatpush1.msra.mxu0 0.0
  %2066 = vmatprep.subr.mxu0 0.0
  %2067 = vmatpush1.msra.mxu0 0.0
  %2068 = vmatprep.subr.mxu0 0.0
  %2069 = vmatpush1.msra.mxu0 0.0
  %2070 = vmatprep.subr.mxu0 0.0
  %2071 = vmatpush1.msra.mxu0 0.0
  %2072 = vmatprep.subr.mxu0 0.0
  %2073 = vmatpush1.msra.mxu0 0.0
  %2074 = vmatprep.subr.mxu0 0.0
  %2075 = vmatpush1.msra.mxu0 0.0
  %2076 = vmatprep.subr.mxu0 0.0
  %2077 = vmatpush1.msra.mxu0 0.0
  %2078 = vmatprep.subr.mxu0 0.0
  %2079 = vmatpush1.msra.mxu0 0.0
  %2080 = vmatprep.subr.mxu0 0.0
  %2081 = vmatpush1.msra.mxu0 0.0
  %2082 = vmatprep.subr.mxu0 0.0
  %2083 = vmatpush1.msra.mxu0 0.0
  %2084 = vmatprep.subr.mxu0 0.0
  %2085 = vmatpush1.msra.mxu0 0.0
  %2086 = vmatprep.subr.mxu0 0.0
  %2087 = vmatpush1.msra.mxu0 %v1910
  %2088 = vmatprep.subr.mxu0 0.0
  %2089 = vmatpush1.msra.mxu0 %v1909
  %2090 = vmatprep.subr.mxu0 0.0
  %2091 = vmatpush1.msra.mxu0 %v1908
  %2092 = vmatprep.subr.mxu0 0.0
  %2093 = vmatpush1.msra.mxu0 %v1907
  %2094 = vmatprep.subr.mxu0 0.0
  %2095 = vmatpush2.msra.mxu0 0.0
  %2096 = vmatprep.subr.mxu0 0.0
  %2097 = vmatpush2.msra.mxu0 0.0
  %2098 = vmatprep.subr.mxu0 0.0
  %2099 = vmatpush2.msra.mxu0 0.0
  %2100 = vmatprep.subr.mxu0 0.0
  %2101 = vmatpush2.msra.mxu0 0.0
  %2102 = vmatprep.subr.mxu0 0.0
  %2103 = vmatpush2.msra.mxu0 0.0
  %2104 = vmatprep.subr.mxu0 0.0
  %2105 = vmatpush2.msra.mxu0 0.0
  %2106 = vmatprep.subr.mxu0 0.0
  %2107 = vmatpush2.msra.mxu0 0.0
  %2108 = vmatprep.subr.mxu0 0.0
  %2109 = vmatpush2.msra.mxu0 0.0
  %2110 = vmatprep.subr.mxu0 0.0
  %2111 = vmatpush2.msra.mxu0 0.0
  %2112 = vmatprep.subr.mxu0 0.0
  %2113 = vmatpush2.msra.mxu0 0.0
  %2114 = vmatprep.subr.mxu0 0.0
  %2115 = vmatpush2.msra.mxu0 0.0
  %2116 = vmatprep.subr.mxu0 0.0
  %2117 = vmatpush2.msra.mxu0 0.0
  %2118 = vmatprep.subr.mxu0 0.0
  %2119 = vmatpush2.msra.mxu0 0.0
  %2120 = vmatprep.subr.mxu0 0.0
  %2121 = vmatpush2.msra.mxu0 0.0
  %2122 = vmatprep.subr.mxu0 0.0
  %2123 = vmatpush2.msra.mxu0 0.0
  %2124 = vmatprep.subr.mxu0 0.0
  %2125 = vmatpush2.msra.mxu0 0.0
  %2126 = vmatprep.mubr.f32.mxu0 0.0
  %2127 = vmatmul.mubr.f32.gmra.mxu0 %v1919
  %v2128 = vpop.f32.mrf.mxu0
  %v2129 = vadd.f32 %v1916, %v2128
  %v2130 = vpop.f32.mrf.mxu0
  %2131 = vmatprep.mubr.f32.mxu0 0.0
  %2132 = vmatmul.mubr.f32.gmra.mxu0 %v1922
  %v2133 = vpop.f32.mrf.mxu0
  %v2134 = vadd.f32 %v1916, %v2133
  %v2135 = vpop.f32.mrf.mxu0
  %2136 = vmatprep.mubr.f32.mxu0 0.0
  %2137 = vmatmul.mubr.f32.gmra.mxu0 %v1925
  %v2138 = vpop.f32.mrf.mxu0
  %v2139 = vadd.f32 %v1916, %v2138
  %v2140 = vpop.f32.mrf.mxu0
  %2141 = vmatprep.mubr.f32.mxu0 0.0
  %2142 = vmatmul.mubr.f32.gmra.mxu0 %v1928
  %v2143 = vpop.f32.mrf.mxu0
  %v2144 = vadd.f32 %v1916, %v2143
  %v2145 = vpop.f32.mrf.mxu0
  %2146 = vmatprep.mubr.f32.mxu0 0.0
  %2147 = vmatmul.mubr.f32.gmra.mxu0 %v1931
  %v2148 = vpop.f32.mrf.mxu0
  %v2149 = vadd.f32 %v1916, %v2148
  %v2150 = vpop.f32.mrf.mxu0
  %2151 = vmatprep.mubr.f32.mxu0 0.0
  %2152 = vmatmul.mubr.f32.gmra.mxu0 %v1934
  %v2153 = vpop.f32.mrf.mxu0
  %v2154 = vadd.f32 %v1916, %v2153
  %v2155 = vpop.f32.mrf.mxu0
  %2156 = vmatprep.mubr.f32.mxu0 0.0
  %2157 = vmatmul.mubr.f32.gmra.mxu0 %v1937
  %v2158 = vpop.f32.mrf.mxu0
  %v2159 = vadd.f32 %v1916, %v2158
  %v2160 = vpop.f32.mrf.mxu0
  %2161 = vmatprep.mubr.f32.mxu0 0.0
  %2162 = vmatmul.mubr.f32.gmra.mxu0 %v1940
  %v2163 = vpop.f32.mrf.mxu0
  %v2164 = vadd.f32 %v1916, %v2163
  %v2165 = vpop.f32.mrf.mxu0
  %2166 = vmatprep.mubr.f32.mxu0 0.0
  %2167 = vmatmul.mubr.f32.gmra.mxu0 %v1943
  %v2168 = vpop.f32.mrf.mxu0
  %v2169 = vadd.f32 %v1916, %v2168
  %v2170 = vpop.f32.mrf.mxu0
  %2171 = vmatprep.mubr.f32.mxu0 0.0
  %2172 = vmatmul.mubr.f32.gmra.mxu0 %v1946
  %v2173 = vpop.f32.mrf.mxu0
  %v2174 = vadd.f32 %v1916, %v2173
  %v2175 = vpop.f32.mrf.mxu0
  %2176 = vmatprep.mubr.f32.mxu0 0.0
  %2177 = vmatmul.mubr.f32.gmra.mxu0 %v1949
  %v2178 = vpop.f32.mrf.mxu0
  %v2179 = vadd.f32 %v1916, %v2178
  %v2180 = vpop.f32.mrf.mxu0
  %2181 = vmatprep.mubr.f32.mxu0 0.0
  %2182 = vmatmul.mubr.f32.gmra.mxu0 %v1952
  %v2183 = vpop.f32.mrf.mxu0
  %v2184 = vadd.f32 %v1916, %v2183
  %v2185 = vpop.f32.mrf.mxu0
  %2186 = vmatprep.mubr.f32.mxu0 0.0
  %2187 = vmatmul.mubr.f32.gmra.mxu0 %v1955
  %v2188 = vpop.f32.mrf.mxu0
  %v2189 = vadd.f32 %v1916, %v2188
  %v2190 = vpop.f32.mrf.mxu0
  %2191 = vmatprep.mubr.f32.mxu0 0.0
  %2192 = vmatmul.mubr.f32.gmra.mxu0 %v1958
  %v2193 = vpop.f32.mrf.mxu0
  %v2194 = vadd.f32 %v1916, %v2193
  %v2195 = vpop.f32.mrf.mxu0
  %2196 = vmatprep.mubr.f32.mxu0 0.0
  %2197 = vmatmul.mubr.f32.gmra.mxu0 %v1961
  %v2198 = vpop.f32.mrf.mxu0
  %v2199 = vadd.f32 %v1916, %v2198
  %v2200 = vpop.f32.mrf.mxu0
  %2201 = vmatprep.mubr.f32.mxu0 0.0
  %2202 = vmatmul.mubr.f32.gmra.mxu0 %v1964
  %v2203 = vpop.f32.mrf.mxu0
  %v2204 = vadd.f32 %v1916, %v2203
  %v2205 = vpop.f32.mrf.mxu0
  %2206 = vmatprep.mubr.f32.mxu0 0.0
  %2207 = vmatmul.mubr.f32.gmra.mxu0 %v1967
  %v2208 = vpop.f32.mrf.mxu0
  %v2209 = vadd.f32 %v1916, %v2208
  %v2210 = vpop.f32.mrf.mxu0
  %2211 = vmatprep.mubr.f32.mxu0 0.0
  %2212 = vmatmul.mubr.f32.gmra.mxu0 %v1970
  %v2213 = vpop.f32.mrf.mxu0
  %v2214 = vadd.f32 %v1916, %v2213
  %v2215 = vpop.f32.mrf.mxu0
  %2216 = vmatprep.mubr.f32.mxu0 0.0
  %2217 = vmatmul.mubr.f32.gmra.mxu0 %v1973
  %v2218 = vpop.f32.mrf.mxu0
  %v2219 = vadd.f32 %v1916, %v2218
  %v2220 = vpop.f32.mrf.mxu0
  %2221 = vmatprep.mubr.f32.mxu0 0.0
  %2222 = vmatmul.mubr.f32.gmra.mxu0 %v1976
  %v2223 = vpop.f32.mrf.mxu0
  %v2224 = vadd.f32 %v1916, %v2223
  %v2225 = vpop.f32.mrf.mxu0
  %2226 = vmatprep.mubr.f32.mxu0 0.0
  %2227 = vmatmul.mubr.f32.gmra.mxu0 %v1979
  %v2228 = vpop.f32.mrf.mxu0
  %v2229 = vadd.f32 %v1916, %v2228
  %v2230 = vpop.f32.mrf.mxu0
  %2231 = vmatprep.mubr.f32.mxu0 0.0
  %2232 = vmatmul.mubr.f32.gmra.mxu0 %v1982
  %v2233 = vpop.f32.mrf.mxu0
  %v2234 = vadd.f32 %v1916, %v2233
  %v2235 = vpop.f32.mrf.mxu0
  %2236 = vmatprep.mubr.f32.mxu0 0.0
  %2237 = vmatmul.mubr.f32.gmra.mxu0 %v1985
  %v2238 = vpop.f32.mrf.mxu0
  %v2239 = vadd.f32 %v1916, %v2238
  %v2240 = vpop.f32.mrf.mxu0
  %2241 = vmatprep.mubr.f32.mxu0 0.0
  %2242 = vmatmul.mubr.f32.gmra.mxu0 %v1988
  %v2243 = vpop.f32.mrf.mxu0
  %v2244 = vadd.f32 %v1916, %v2243
  %v2245 = vpop.f32.mrf.mxu0
  %2246 = vmatprep.mubr.f32.mxu0 0.0
  %2247 = vmatmul.mubr.f32.gmra.mxu0 %v1991
  %v2248 = vpop.f32.mrf.mxu0
  %v2249 = vadd.f32 %v1916, %v2248
  %v2250 = vpop.f32.mrf.mxu0
  %2251 = vmatprep.mubr.f32.mxu0 0.0
  %2252 = vmatmul.mubr.f32.gmra.mxu0 %v1994
  %v2253 = vpop.f32.mrf.mxu0
  %v2254 = vadd.f32 %v1916, %v2253
  %v2255 = vpop.f32.mrf.mxu0
  %2256 = vmatprep.mubr.f32.mxu0 0.0
  %2257 = vmatmul.mubr.f32.gmra.mxu0 %v1997
  %v2258 = vpop.f32.mrf.mxu0
  %v2259 = vadd.f32 %v1916, %v2258
  %v2260 = vpop.f32.mrf.mxu0
  %2261 = vmatprep.mubr.f32.mxu0 0.0
  %2262 = vmatmul.mubr.f32.gmra.mxu0 %v2000
  %v2263 = vpop.f32.mrf.mxu0
  %v2264 = vadd.f32 %v1916, %v2263
  %v2265 = vpop.f32.mrf.mxu0
  %2266 = vmatprep.mubr.f32.mxu0 0.0
  %2267 = vmatmul.mubr.f32.gmra.mxu0 %v2003
  %v2268 = vpop.f32.mrf.mxu0
  %v2269 = vadd.f32 %v1916, %v2268
  %v2270 = vpop.f32.mrf.mxu0
  %2271 = vmatprep.mubr.f32.mxu0 0.0
  %2272 = vmatmul.mubr.f32.gmra.mxu0 %v2006
  %v2273 = vpop.f32.mrf.mxu0
  %v2274 = vadd.f32 %v1916, %v2273
  %v2275 = vpop.f32.mrf.mxu0
  %2276 = vmatprep.mubr.f32.mxu0 0.0
  %2277 = vmatmul.mubr.f32.gmra.mxu0 %v2009
  %v2278 = vpop.f32.mrf.mxu0
  %v2279 = vadd.f32 %v1916, %v2278
  %v2280 = vpop.f32.mrf.mxu0
  %2281 = vmatprep.mubr.f32.mxu0 0.0
  %2282 = vmatmul.mubr.f32.gmra.mxu0 %v2012
  %v2283 = vpop.f32.mrf.mxu0
  %v2284 = vadd.f32 %v1916, %v2283
  %v2285 = vpop.f32.mrf.mxu0
  %2286 = vmatprep.mubr.f32.mxu0 0.0
  %2287 = vmatmul.mubr.f32.gmra.mxu0 %v2015
  %v2288 = vpop.f32.mrf.mxu0
  %v2289 = vadd.f32 %v1916, %v2288
  %v2290 = vpop.f32.mrf.mxu0
  %2291 = vmatprep.mubr.f32.mxu0 0.0
  %2292 = vmatmul.mubr.f32.gmra.mxu0 %v2018
  %v2293 = vpop.f32.mrf.mxu0
  %v2294 = vadd.f32 %v1916, %v2293
  %v2295 = vpop.f32.mrf.mxu0
  %2296 = vmatprep.mubr.f32.mxu0 0.0
  %2297 = vmatmul.mubr.f32.gmra.mxu0 %v2021
  %v2298 = vpop.f32.mrf.mxu0
  %v2299 = vadd.f32 %v1916, %v2298
  %v2300 = vpop.f32.mrf.mxu0
  %2301 = vmatprep.mubr.f32.mxu0 0.0
  %2302 = vmatmul.mubr.f32.gmra.mxu0 %v2024
  %v2303 = vpop.f32.mrf.mxu0
  %v2304 = vadd.f32 %v1916, %v2303
  %v2305 = vpop.f32.mrf.mxu0
  %2306 = vmatprep.mubr.f32.mxu0 0.0
  %2307 = vmatmul.mubr.f32.gmra.mxu0 %v2027
  %v2308 = vpop.f32.mrf.mxu0
  %v2309 = vadd.f32 %v1916, %v2308
  %v2310 = vpop.f32.mrf.mxu0
  %2311 = vmatprep.mubr.f32.mxu0 0.0
  %2312 = vmatmul.mubr.f32.gmra.mxu0 %v2030
  %v2313 = vpop.f32.mrf.mxu0
  %v2314 = vadd.f32 %v1916, %v2313
  %v2315 = vpop.f32.mrf.mxu0
  %2316 = vmatprep.mubr.f32.mxu0 0.0
  %2317 = vmatmul.mubr.f32.gmra.mxu0 %v2033
  %v2318 = vpop.f32.mrf.mxu0
  %v2319 = vadd.f32 %v1916, %v2318
  %v2320 = vpop.f32.mrf.mxu0
  %2321 = vmatprep.mubr.f32.mxu0 0.0
  %2322 = vmatmul.mubr.f32.gmra.mxu0 %v2036
  %v2323 = vpop.f32.mrf.mxu0
  %v2324 = vadd.f32 %v1916, %v2323
  %v2325 = vpop.f32.mrf.mxu0
  %2326 = vmatprep.mubr.f32.mxu0 0.0
  %2327 = vmatmul.mubr.f32.gmra.mxu0 %v2039
  %v2328 = vpop.f32.mrf.mxu0
  %v2329 = vadd.f32 %v1916, %v2328
  %v2330 = vpop.f32.mrf.mxu0
  %2331 = vmatprep.mubr.f32.mxu0 0.0
  %2332 = vmatmul.mubr.f32.gmra.mxu0 %v2042
  %v2333 = vpop.f32.mrf.mxu0
  %v2334 = vadd.f32 %v1916, %v2333
  %v2335 = vpop.f32.mrf.mxu0
  %2336 = vmatprep.mubr.f32.mxu0 0.0
  %2337 = vmatmul.mubr.f32.gmra.mxu0 %v2045
  %v2338 = vpop.f32.mrf.mxu0
  %v2339 = vadd.f32 %v1916, %v2338
  %v2340 = vpop.f32.mrf.mxu0
  %2341 = vmatprep.mubr.f32.mxu0 0.0
  %2342 = vmatmul.mubr.f32.gmra.mxu0 %v2048
  %v2343 = vpop.f32.mrf.mxu0
  %v2344 = vadd.f32 %v1916, %v2343
  %v2345 = vpop.f32.mrf.mxu0
  %2346 = vmatprep.mubr.f32.mxu0 0.0
  %2347 = vmatmul.mubr.f32.gmra.mxu0 %v2051
  %v2348 = vpop.f32.mrf.mxu0
  %v2349 = vadd.f32 %v1916, %v2348
  %v2350 = vpop.f32.mrf.mxu0
  %2351 = vmatprep.mubr.f32.mxu0 0.0
  %2352 = vmatmul.mubr.f32.gmra.mxu0 %v2054
  %v2353 = vpop.f32.mrf.mxu0
  %v2354 = vadd.f32 %v1916, %v2353
  %v2355 = vpop.f32.mrf.mxu0
  %2356 = vmatprep.mubr.f32.mxu0 0.0
  %2357 = vmatmul.mubr.f32.gmra.mxu0 %v2057
  %v2358 = vpop.f32.mrf.mxu0
  %v2359 = vadd.f32 %v1916, %v2358
  %v2360 = vpop.f32.mrf.mxu0
  %2361 = vmatprep.mubr.f32.mxu0 0.0
  %2362 = vmatmul.mubr.f32.gmra.mxu0 %v2060
  %v2363 = vpop.f32.mrf.mxu0
  %v2364 = vadd.f32 %v1916, %v2363
  %v2365 = vpop.f32.mrf.mxu0
  %2366 = vdwg.mxu0
  %vm2367 = vcmp.gt.f32.partialorder %v2129, 0.0
  %vm2368 = vcmp.gt.f32.partialorder %v2134, 0.0
  %vm2369 = vcmp.gt.f32.partialorder %v2139, 0.0
  %vm2370 = vcmp.gt.f32.partialorder %v2144, 0.0
  %vm2371 = vcmp.gt.f32.partialorder %v2149, 0.0
  %vm2372 = vcmp.gt.f32.partialorder %v2154, 0.0
  %vm2373 = vcmp.gt.f32.partialorder %v2159, 0.0
  %vm2374 = vcmp.gt.f32.partialorder %v2164, 0.0
  %vm2375 = vcmp.gt.f32.partialorder %v2169, 0.0
  %vm2376 = vcmp.gt.f32.partialorder %v2174, 0.0
  %vm2377 = vcmp.gt.f32.partialorder %v2179, 0.0
  %vm2378 = vcmp.gt.f32.partialorder %v2184, 0.0
  %vm2379 = vcmp.gt.f32.partialorder %v2189, 0.0
  %vm2380 = vcmp.gt.f32.partialorder %v2194, 0.0
  %vm2381 = vcmp.gt.f32.partialorder %v2199, 0.0
  %vm2382 = vcmp.gt.f32.partialorder %v2204, 0.0
  %vm2383 = vcmp.gt.f32.partialorder %v2209, 0.0
  %vm2384 = vcmp.gt.f32.partialorder %v2214, 0.0
  %vm2385 = vcmp.gt.f32.partialorder %v2219, 0.0
  %vm2386 = vcmp.gt.f32.partialorder %v2224, 0.0
  %vm2387 = vcmp.gt.f32.partialorder %v2229, 0.0
  %vm2388 = vcmp.gt.f32.partialorder %v2234, 0.0
  %vm2389 = vcmp.gt.f32.partialorder %v2239, 0.0
  %vm2390 = vcmp.gt.f32.partialorder %v2244, 0.0
  %vm2391 = vcmp.gt.f32.partialorder %v2249, 0.0
  %vm2392 = vcmp.gt.f32.partialorder %v2254, 0.0
  %vm2393 = vcmp.gt.f32.partialorder %v2259, 0.0
  %vm2394 = vcmp.gt.f32.partialorder %v2264, 0.0
  %vm2395 = vcmp.gt.f32.partialorder %v2269, 0.0
  %vm2396 = vcmp.gt.f32.partialorder %v2274, 0.0
  %vm2397 = vcmp.gt.f32.partialorder %v2279, 0.0
  %vm2398 = vcmp.gt.f32.partialorder %v2284, 0.0
  %vm2399 = vcmp.gt.f32.partialorder %v2289, 0.0
  %vm2400 = vcmp.gt.f32.partialorder %v2294, 0.0
  %vm2401 = vcmp.gt.f32.partialorder %v2299, 0.0
  %vm2402 = vcmp.gt.f32.partialorder %v2304, 0.0
  %vm2403 = vcmp.gt.f32.partialorder %v2309, 0.0
  %vm2404 = vcmp.gt.f32.partialorder %v2314, 0.0
  %vm2405 = vcmp.gt.f32.partialorder %v2319, 0.0
  %vm2406 = vcmp.gt.f32.partialorder %v2324, 0.0
  %vm2407 = vcmp.gt.f32.partialorder %v2329, 0.0
  %vm2408 = vcmp.gt.f32.partialorder %v2334, 0.0
  %vm2409 = vcmp.gt.f32.partialorder %v2339, 0.0
  %vm2410 = vcmp.gt.f32.partialorder %v2344, 0.0
  %vm2411 = vcmp.gt.f32.partialorder %v2349, 0.0
  %vm2412 = vcmp.gt.f32.partialorder %v2354, 0.0
  %vm2413 = vcmp.gt.f32.partialorder %v2359, 0.0
  %vm2414 = vcmp.gt.f32.partialorder %v2364, 0.0
  %v2415 = vmul.f32 %v2129, 0.01
  %v2416 = vmul.f32 %v2134, 0.01
  %v2417 = vmul.f32 %v2139, 0.01
  %v2418 = vmul.f32 %v2144, 0.01
  %v2419 = vmul.f32 %v2149, 0.01
  %v2420 = vmul.f32 %v2154, 0.01
  %v2421 = vmul.f32 %v2159, 0.01
  %v2422 = vmul.f32 %v2164, 0.01
  %v2423 = vmul.f32 %v2169, 0.01
  %v2424 = vmul.f32 %v2174, 0.01
  %v2425 = vmul.f32 %v2179, 0.01
  %v2426 = vmul.f32 %v2184, 0.01
  %v2427 = vmul.f32 %v2189, 0.01
  %v2428 = vmul.f32 %v2194, 0.01
  %v2429 = vmul.f32 %v2199, 0.01
  %v2430 = vmul.f32 %v2204, 0.01
  %v2431 = vmul.f32 %v2209, 0.01
  %v2432 = vmul.f32 %v2214, 0.01
  %v2433 = vmul.f32 %v2219, 0.01
  %v2434 = vmul.f32 %v2224, 0.01
  %v2435 = vmul.f32 %v2229, 0.01
  %v2436 = vmul.f32 %v2234, 0.01
  %v2437 = vmul.f32 %v2239, 0.01
  %v2438 = vmul.f32 %v2244, 0.01
  %v2439 = vmul.f32 %v2249, 0.01
  %v2440 = vmul.f32 %v2254, 0.01
  %v2441 = vmul.f32 %v2259, 0.01
  %v2442 = vmul.f32 %v2264, 0.01
  %v2443 = vmul.f32 %v2269, 0.01
  %v2444 = vmul.f32 %v2274, 0.01
  %v2445 = vmul.f32 %v2279, 0.01
  %v2446 = vmul.f32 %v2284, 0.01
  %v2447 = vmul.f32 %v2289, 0.01
  %v2448 = vmul.f32 %v2294, 0.01
  %v2449 = vmul.f32 %v2299, 0.01
  %v2450 = vmul.f32 %v2304, 0.01
  %v2451 = vmul.f32 %v2309, 0.01
  %v2452 = vmul.f32 %v2314, 0.01
  %v2453 = vmul.f32 %v2319, 0.01
  %v2454 = vmul.f32 %v2324, 0.01
  %v2455 = vmul.f32 %v2329, 0.01
  %v2456 = vmul.f32 %v2334, 0.01
  %v2457 = vmul.f32 %v2339, 0.01
  %v2458 = vmul.f32 %v2344, 0.01
  %v2459 = vmul.f32 %v2349, 0.01
  %v2460 = vmul.f32 %v2354, 0.01
  %v2461 = vmul.f32 %v2359, 0.01
  %v2462 = vmul.f32 %v2364, 0.01
  %v2463 = vsel %vm2367, %v2129, %v2415
  %v2464 = vsel %vm2368, %v2134, %v2416
  %v2465 = vsel %vm2369, %v2139, %v2417
  %v2466 = vsel %vm2370, %v2144, %v2418
  %v2467 = vsel %vm2371, %v2149, %v2419
  %v2468 = vsel %vm2372, %v2154, %v2420
  %v2469 = vsel %vm2373, %v2159, %v2421
  %v2470 = vsel %vm2374, %v2164, %v2422
  %v2471 = vsel %vm2375, %v2169, %v2423
  %v2472 = vsel %vm2376, %v2174, %v2424
  %v2473 = vsel %vm2377, %v2179, %v2425
  %v2474 = vsel %vm2378, %v2184, %v2426
  %v2475 = vsel %vm2379, %v2189, %v2427
  %v2476 = vsel %vm2380, %v2194, %v2428
  %v2477 = vsel %vm2381, %v2199, %v2429
  %v2478 = vsel %vm2382, %v2204, %v2430
  %v2479 = vsel %vm2383, %v2209, %v2431
  %v2480 = vsel %vm2384, %v2214, %v2432
  %v2481 = vsel %vm2385, %v2219, %v2433
  %v2482 = vsel %vm2386, %v2224, %v2434
  %v2483 = vsel %vm2387, %v2229, %v2435
  %v2484 = vsel %vm2388, %v2234, %v2436
  %v2485 = vsel %vm2389, %v2239, %v2437
  %v2486 = vsel %vm2390, %v2244, %v2438
  %v2487 = vsel %vm2391, %v2249, %v2439
  %v2488 = vsel %vm2392, %v2254, %v2440
  %v2489 = vsel %vm2393, %v2259, %v2441
  %v2490 = vsel %vm2394, %v2264, %v2442
  %v2491 = vsel %vm2395, %v2269, %v2443
  %v2492 = vsel %vm2396, %v2274, %v2444
  %v2493 = vsel %vm2397, %v2279, %v2445
  %v2494 = vsel %vm2398, %v2284, %v2446
  %v2495 = vsel %vm2399, %v2289, %v2447
  %v2496 = vsel %vm2400, %v2294, %v2448
  %v2497 = vsel %vm2401, %v2299, %v2449
  %v2498 = vsel %vm2402, %v2304, %v2450
  %v2499 = vsel %vm2403, %v2309, %v2451
  %v2500 = vsel %vm2404, %v2314, %v2452
  %v2501 = vsel %vm2405, %v2319, %v2453
  %v2502 = vsel %vm2406, %v2324, %v2454
  %v2503 = vsel %vm2407, %v2329, %v2455
  %v2504 = vsel %vm2408, %v2334, %v2456
  %v2505 = vsel %vm2409, %v2339, %v2457
  %v2506 = vsel %vm2410, %v2344, %v2458
  %v2507 = vsel %vm2411, %v2349, %v2459
  %v2508 = vsel %vm2412, %v2354, %v2460
  %v2509 = vsel %vm2413, %v2359, %v2461
  %v2510 = vsel %vm2414, %v2364, %v2462
  %v2511 = vld [vmem:[%s10] sm:$0xff]
  %v2512 = vld [vmem:[%s10 + $0x8] sm:$0xff]
  %v2513 = vld [vmem:[%s10 + $0x10] sm:$0xff]
  %v2514 = vld [vmem:[%s10 + $0x18] sm:$0xff]
  %v2515 = vld [vmem:[%s11] sm:$0x1]
  %v2517 = vlaneseq
  %v2518 = vshrl.u32 %v2517, 7
  %v2519 = vsub.s32 0, %v2518
  %v2520 = vrot.slane %v2515, %v2519
  %v2523 = vsel %vm709, %v2463, 0
  %v2526 = vsel %vm709, %v2464, 0
  %v2529 = vsel %vm709, %v2465, 0
  %v2532 = vsel %vm709, %v2466, 0
  %v2535 = vsel %vm709, %v2467, 0
  %v2538 = vsel %vm709, %v2468, 0
  %v2541 = vsel %vm709, %v2469, 0
  %v2544 = vsel %vm709, %v2470, 0
  %v2547 = vsel %vm709, %v2471, 0
  %v2550 = vsel %vm709, %v2472, 0
  %v2553 = vsel %vm709, %v2473, 0
  %v2556 = vsel %vm709, %v2474, 0
  %v2559 = vsel %vm709, %v2475, 0
  %v2562 = vsel %vm709, %v2476, 0
  %v2565 = vsel %vm709, %v2477, 0
  %v2568 = vsel %vm709, %v2478, 0
  %v2571 = vsel %vm709, %v2479, 0
  %v2574 = vsel %vm709, %v2480, 0
  %v2577 = vsel %vm709, %v2481, 0
  %v2580 = vsel %vm709, %v2482, 0
  %v2583 = vsel %vm709, %v2483, 0
  %v2586 = vsel %vm709, %v2484, 0
  %v2589 = vsel %vm709, %v2485, 0
  %v2592 = vsel %vm709, %v2486, 0
  %v2595 = vsel %vm709, %v2487, 0
  %v2598 = vsel %vm709, %v2488, 0
  %v2601 = vsel %vm709, %v2489, 0
  %v2604 = vsel %vm709, %v2490, 0
  %v2607 = vsel %vm709, %v2491, 0
  %v2610 = vsel %vm709, %v2492, 0
  %v2613 = vsel %vm709, %v2493, 0
  %v2616 = vsel %vm709, %v2494, 0
  %v2619 = vsel %vm709, %v2495, 0
  %v2622 = vsel %vm709, %v2496, 0
  %v2625 = vsel %vm709, %v2497, 0
  %v2628 = vsel %vm709, %v2498, 0
  %v2631 = vsel %vm709, %v2499, 0
  %v2634 = vsel %vm709, %v2500, 0
  %v2637 = vsel %vm709, %v2501, 0
  %v2640 = vsel %vm709, %v2502, 0
  %v2643 = vsel %vm709, %v2503, 0
  %v2646 = vsel %vm709, %v2504, 0
  %v2649 = vsel %vm709, %v2505, 0
  %v2652 = vsel %vm709, %v2506, 0
  %v2655 = vsel %vm709, %v2507, 0
  %v2658 = vsel %vm709, %v2508, 0
  %v2661 = vsel %vm709, %v2509, 0
  %v2664 = vsel %vm709, %v2510, 0
  %2666 = vmatprep.subr.mxu0 0.0
  %2667 = vmatpush1.msra.mxu0 0.0
  %2668 = vmatprep.subr.mxu0 0.0
  %2669 = vmatpush1.msra.mxu0 0.0
  %2670 = vmatprep.subr.mxu0 0.0
  %2671 = vmatpush1.msra.mxu0 0.0
  %2672 = vmatprep.subr.mxu0 0.0
  %2673 = vmatpush1.msra.mxu0 0.0
  %2674 = vmatprep.subr.mxu0 0.0
  %2675 = vmatpush1.msra.mxu0 0.0
  %2676 = vmatprep.subr.mxu0 0.0
  %2677 = vmatpush1.msra.mxu0 0.0
  %2678 = vmatprep.subr.mxu0 0.0
  %2679 = vmatpush1.msra.mxu0 0.0
  %2680 = vmatprep.subr.mxu0 0.0
  %2681 = vmatpush1.msra.mxu0 0.0
  %2682 = vmatprep.subr.mxu0 0.0
  %2683 = vmatpush1.msra.mxu0 0.0
  %2684 = vmatprep.subr.mxu0 0.0
  %2685 = vmatpush1.msra.mxu0 0.0
  %2686 = vmatprep.subr.mxu0 0.0
  %2687 = vmatpush1.msra.mxu0 0.0
  %2688 = vmatprep.subr.mxu0 0.0
  %2689 = vmatpush1.msra.mxu0 0.0
  %2690 = vmatprep.subr.mxu0 0.0
  %2691 = vmatpush1.msra.mxu0 %v2514
  %2692 = vmatprep.subr.mxu0 0.0
  %2693 = vmatpush1.msra.mxu0 %v2513
  %2694 = vmatprep.subr.mxu0 0.0
  %2695 = vmatpush1.msra.mxu0 %v2512
  %2696 = vmatprep.subr.mxu0 0.0
  %2697 = vmatpush1.msra.mxu0 %v2511
  %2698 = vmatprep.subr.mxu0 0.0
  %2699 = vmatpush2.msra.mxu0 0.0
  %2700 = vmatprep.subr.mxu0 0.0
  %2701 = vmatpush2.msra.mxu0 0.0
  %2702 = vmatprep.subr.mxu0 0.0
  %2703 = vmatpush2.msra.mxu0 0.0
  %2704 = vmatprep.subr.mxu0 0.0
  %2705 = vmatpush2.msra.mxu0 0.0
  %2706 = vmatprep.subr.mxu0 0.0
  %2707 = vmatpush2.msra.mxu0 0.0
  %2708 = vmatprep.subr.mxu0 0.0
  %2709 = vmatpush2.msra.mxu0 0.0
  %2710 = vmatprep.subr.mxu0 0.0
  %2711 = vmatpush2.msra.mxu0 0.0
  %2712 = vmatprep.subr.mxu0 0.0
  %2713 = vmatpush2.msra.mxu0 0.0
  %2714 = vmatprep.subr.mxu0 0.0
  %2715 = vmatpush2.msra.mxu0 0.0
  %2716 = vmatprep.subr.mxu0 0.0
  %2717 = vmatpush2.msra.mxu0 0.0
  %2718 = vmatprep.subr.mxu0 0.0
  %2719 = vmatpush2.msra.mxu0 0.0
  %2720 = vmatprep.subr.mxu0 0.0
  %2721 = vmatpush2.msra.mxu0 0.0
  %2722 = vmatprep.subr.mxu0 0.0
  %2723 = vmatpush2.msra.mxu0 0.0
  %2724 = vmatprep.subr.mxu0 0.0
  %2725 = vmatpush2.msra.mxu0 0.0
  %2726 = vmatprep.subr.mxu0 0.0
  %2727 = vmatpush2.msra.mxu0 0.0
  %2728 = vmatprep.subr.mxu0 0.0
  %2729 = vmatpush2.msra.mxu0 0.0
  %2730 = vmatprep.mubr.f32.mxu0 0.0
  %2731 = vmatmul.mubr.f32.gmra.mxu0 %v2523
  %v2732 = vpop.f32.mrf.mxu0
  %v2733 = vadd.f32 %v2520, %v2732
  %v2734 = vpop.f32.mrf.mxu0
  %2735 = vmatprep.mubr.f32.mxu0 0.0
  %2736 = vmatmul.mubr.f32.gmra.mxu0 %v2526
  %v2737 = vpop.f32.mrf.mxu0
  %v2738 = vadd.f32 %v2520, %v2737
  %v2739 = vpop.f32.mrf.mxu0
  %2740 = vmatprep.mubr.f32.mxu0 0.0
  %2741 = vmatmul.mubr.f32.gmra.mxu0 %v2529
  %v2742 = vpop.f32.mrf.mxu0
  %v2743 = vadd.f32 %v2520, %v2742
  %v2744 = vpop.f32.mrf.mxu0
  %2745 = vmatprep.mubr.f32.mxu0 0.0
  %2746 = vmatmul.mubr.f32.gmra.mxu0 %v2532
  %v2747 = vpop.f32.mrf.mxu0
  %v2748 = vadd.f32 %v2520, %v2747
  %v2749 = vpop.f32.mrf.mxu0
  %2750 = vmatprep.mubr.f32.mxu0 0.0
  %2751 = vmatmul.mubr.f32.gmra.mxu0 %v2535
  %v2752 = vpop.f32.mrf.mxu0
  %v2753 = vadd.f32 %v2520, %v2752
  %v2754 = vpop.f32.mrf.mxu0
  %2755 = vmatprep.mubr.f32.mxu0 0.0
  %2756 = vmatmul.mubr.f32.gmra.mxu0 %v2538
  %v2757 = vpop.f32.mrf.mxu0
  %v2758 = vadd.f32 %v2520, %v2757
  %v2759 = vpop.f32.mrf.mxu0
  %2760 = vmatprep.mubr.f32.mxu0 0.0
  %2761 = vmatmul.mubr.f32.gmra.mxu0 %v2541
  %v2762 = vpop.f32.mrf.mxu0
  %v2763 = vadd.f32 %v2520, %v2762
  %v2764 = vpop.f32.mrf.mxu0
  %2765 = vmatprep.mubr.f32.mxu0 0.0
  %2766 = vmatmul.mubr.f32.gmra.mxu0 %v2544
  %v2767 = vpop.f32.mrf.mxu0
  %v2768 = vadd.f32 %v2520, %v2767
  %v2769 = vpop.f32.mrf.mxu0
  %2770 = vmatprep.mubr.f32.mxu0 0.0
  %2771 = vmatmul.mubr.f32.gmra.mxu0 %v2547
  %v2772 = vpop.f32.mrf.mxu0
  %v2773 = vadd.f32 %v2520, %v2772
  %v2774 = vpop.f32.mrf.mxu0
  %2775 = vmatprep.mubr.f32.mxu0 0.0
  %2776 = vmatmul.mubr.f32.gmra.mxu0 %v2550
  %v2777 = vpop.f32.mrf.mxu0
  %v2778 = vadd.f32 %v2520, %v2777
  %v2779 = vpop.f32.mrf.mxu0
  %2780 = vmatprep.mubr.f32.mxu0 0.0
  %2781 = vmatmul.mubr.f32.gmra.mxu0 %v2553
  %v2782 = vpop.f32.mrf.mxu0
  %v2783 = vadd.f32 %v2520, %v2782
  %v2784 = vpop.f32.mrf.mxu0
  %2785 = vmatprep.mubr.f32.mxu0 0.0
  %2786 = vmatmul.mubr.f32.gmra.mxu0 %v2556
  %v2787 = vpop.f32.mrf.mxu0
  %v2788 = vadd.f32 %v2520, %v2787
  %v2789 = vpop.f32.mrf.mxu0
  %2790 = vmatprep.mubr.f32.mxu0 0.0
  %2791 = vmatmul.mubr.f32.gmra.mxu0 %v2559
  %v2792 = vpop.f32.mrf.mxu0
  %v2793 = vadd.f32 %v2520, %v2792
  %v2794 = vpop.f32.mrf.mxu0
  %2795 = vmatprep.mubr.f32.mxu0 0.0
  %2796 = vmatmul.mubr.f32.gmra.mxu0 %v2562
  %v2797 = vpop.f32.mrf.mxu0
  %v2798 = vadd.f32 %v2520, %v2797
  %v2799 = vpop.f32.mrf.mxu0
  %2800 = vmatprep.mubr.f32.mxu0 0.0
  %2801 = vmatmul.mubr.f32.gmra.mxu0 %v2565
  %v2802 = vpop.f32.mrf.mxu0
  %v2803 = vadd.f32 %v2520, %v2802
  %v2804 = vpop.f32.mrf.mxu0
  %2805 = vmatprep.mubr.f32.mxu0 0.0
  %2806 = vmatmul.mubr.f32.gmra.mxu0 %v2568
  %v2807 = vpop.f32.mrf.mxu0
  %v2808 = vadd.f32 %v2520, %v2807
  %v2809 = vpop.f32.mrf.mxu0
  %2810 = vmatprep.mubr.f32.mxu0 0.0
  %2811 = vmatmul.mubr.f32.gmra.mxu0 %v2571
  %v2812 = vpop.f32.mrf.mxu0
  %v2813 = vadd.f32 %v2520, %v2812
  %v2814 = vpop.f32.mrf.mxu0
  %2815 = vmatprep.mubr.f32.mxu0 0.0
  %2816 = vmatmul.mubr.f32.gmra.mxu0 %v2574
  %v2817 = vpop.f32.mrf.mxu0
  %v2818 = vadd.f32 %v2520, %v2817
  %v2819 = vpop.f32.mrf.mxu0
  %2820 = vmatprep.mubr.f32.mxu0 0.0
  %2821 = vmatmul.mubr.f32.gmra.mxu0 %v2577
  %v2822 = vpop.f32.mrf.mxu0
  %v2823 = vadd.f32 %v2520, %v2822
  %v2824 = vpop.f32.mrf.mxu0
  %2825 = vmatprep.mubr.f32.mxu0 0.0
  %2826 = vmatmul.mubr.f32.gmra.mxu0 %v2580
  %v2827 = vpop.f32.mrf.mxu0
  %v2828 = vadd.f32 %v2520, %v2827
  %v2829 = vpop.f32.mrf.mxu0
  %2830 = vmatprep.mubr.f32.mxu0 0.0
  %2831 = vmatmul.mubr.f32.gmra.mxu0 %v2583
  %v2832 = vpop.f32.mrf.mxu0
  %v2833 = vadd.f32 %v2520, %v2832
  %v2834 = vpop.f32.mrf.mxu0
  %2835 = vmatprep.mubr.f32.mxu0 0.0
  %2836 = vmatmul.mubr.f32.gmra.mxu0 %v2586
  %v2837 = vpop.f32.mrf.mxu0
  %v2838 = vadd.f32 %v2520, %v2837
  %v2839 = vpop.f32.mrf.mxu0
  %2840 = vmatprep.mubr.f32.mxu0 0.0
  %2841 = vmatmul.mubr.f32.gmra.mxu0 %v2589
  %v2842 = vpop.f32.mrf.mxu0
  %v2843 = vadd.f32 %v2520, %v2842
  %v2844 = vpop.f32.mrf.mxu0
  %2845 = vmatprep.mubr.f32.mxu0 0.0
  %2846 = vmatmul.mubr.f32.gmra.mxu0 %v2592
  %v2847 = vpop.f32.mrf.mxu0
  %v2848 = vadd.f32 %v2520, %v2847
  %v2849 = vpop.f32.mrf.mxu0
  %2850 = vmatprep.mubr.f32.mxu0 0.0
  %2851 = vmatmul.mubr.f32.gmra.mxu0 %v2595
  %v2852 = vpop.f32.mrf.mxu0
  %v2853 = vadd.f32 %v2520, %v2852
  %v2854 = vpop.f32.mrf.mxu0
  %2855 = vmatprep.mubr.f32.mxu0 0.0
  %2856 = vmatmul.mubr.f32.gmra.mxu0 %v2598
  %v2857 = vpop.f32.mrf.mxu0
  %v2858 = vadd.f32 %v2520, %v2857
  %v2859 = vpop.f32.mrf.mxu0
  %2860 = vmatprep.mubr.f32.mxu0 0.0
  %2861 = vmatmul.mubr.f32.gmra.mxu0 %v2601
  %v2862 = vpop.f32.mrf.mxu0
  %v2863 = vadd.f32 %v2520, %v2862
  %v2864 = vpop.f32.mrf.mxu0
  %2865 = vmatprep.mubr.f32.mxu0 0.0
  %2866 = vmatmul.mubr.f32.gmra.mxu0 %v2604
  %v2867 = vpop.f32.mrf.mxu0
  %v2868 = vadd.f32 %v2520, %v2867
  %v2869 = vpop.f32.mrf.mxu0
  %2870 = vmatprep.mubr.f32.mxu0 0.0
  %2871 = vmatmul.mubr.f32.gmra.mxu0 %v2607
  %v2872 = vpop.f32.mrf.mxu0
  %v2873 = vadd.f32 %v2520, %v2872
  %v2874 = vpop.f32.mrf.mxu0
  %2875 = vmatprep.mubr.f32.mxu0 0.0
  %2876 = vmatmul.mubr.f32.gmra.mxu0 %v2610
  %v2877 = vpop.f32.mrf.mxu0
  %v2878 = vadd.f32 %v2520, %v2877
  %v2879 = vpop.f32.mrf.mxu0
  %2880 = vmatprep.mubr.f32.mxu0 0.0
  %2881 = vmatmul.mubr.f32.gmra.mxu0 %v2613
  %v2882 = vpop.f32.mrf.mxu0
  %v2883 = vadd.f32 %v2520, %v2882
  %v2884 = vpop.f32.mrf.mxu0
  %2885 = vmatprep.mubr.f32.mxu0 0.0
  %2886 = vmatmul.mubr.f32.gmra.mxu0 %v2616
  %v2887 = vpop.f32.mrf.mxu0
  %v2888 = vadd.f32 %v2520, %v2887
  %v2889 = vpop.f32.mrf.mxu0
  %2890 = vmatprep.mubr.f32.mxu0 0.0
  %2891 = vmatmul.mubr.f32.gmra.mxu0 %v2619
  %v2892 = vpop.f32.mrf.mxu0
  %v2893 = vadd.f32 %v2520, %v2892
  %v2894 = vpop.f32.mrf.mxu0
  %2895 = vmatprep.mubr.f32.mxu0 0.0
  %2896 = vmatmul.mubr.f32.gmra.mxu0 %v2622
  %v2897 = vpop.f32.mrf.mxu0
  %v2898 = vadd.f32 %v2520, %v2897
  %v2899 = vpop.f32.mrf.mxu0
  %2900 = vmatprep.mubr.f32.mxu0 0.0
  %2901 = vmatmul.mubr.f32.gmra.mxu0 %v2625
  %v2902 = vpop.f32.mrf.mxu0
  %v2903 = vadd.f32 %v2520, %v2902
  %v2904 = vpop.f32.mrf.mxu0
  %2905 = vmatprep.mubr.f32.mxu0 0.0
  %2906 = vmatmul.mubr.f32.gmra.mxu0 %v2628
  %v2907 = vpop.f32.mrf.mxu0
  %v2908 = vadd.f32 %v2520, %v2907
  %v2909 = vpop.f32.mrf.mxu0
  %2910 = vmatprep.mubr.f32.mxu0 0.0
  %2911 = vmatmul.mubr.f32.gmra.mxu0 %v2631
  %v2912 = vpop.f32.mrf.mxu0
  %v2913 = vadd.f32 %v2520, %v2912
  %v2914 = vpop.f32.mrf.mxu0
  %2915 = vmatprep.mubr.f32.mxu0 0.0
  %2916 = vmatmul.mubr.f32.gmra.mxu0 %v2634
  %v2917 = vpop.f32.mrf.mxu0
  %v2918 = vadd.f32 %v2520, %v2917
  %v2919 = vpop.f32.mrf.mxu0
  %2920 = vmatprep.mubr.f32.mxu0 0.0
  %2921 = vmatmul.mubr.f32.gmra.mxu0 %v2637
  %v2922 = vpop.f32.mrf.mxu0
  %v2923 = vadd.f32 %v2520, %v2922
  %v2924 = vpop.f32.mrf.mxu0
  %2925 = vmatprep.mubr.f32.mxu0 0.0
  %2926 = vmatmul.mubr.f32.gmra.mxu0 %v2640
  %v2927 = vpop.f32.mrf.mxu0
  %v2928 = vadd.f32 %v2520, %v2927
  %v2929 = vpop.f32.mrf.mxu0
  %2930 = vmatprep.mubr.f32.mxu0 0.0
  %2931 = vmatmul.mubr.f32.gmra.mxu0 %v2643
  %v2932 = vpop.f32.mrf.mxu0
  %v2933 = vadd.f32 %v2520, %v2932
  %v2934 = vpop.f32.mrf.mxu0
  %2935 = vmatprep.mubr.f32.mxu0 0.0
  %2936 = vmatmul.mubr.f32.gmra.mxu0 %v2646
  %v2937 = vpop.f32.mrf.mxu0
  %v2938 = vadd.f32 %v2520, %v2937
  %v2939 = vpop.f32.mrf.mxu0
  %2940 = vmatprep.mubr.f32.mxu0 0.0
  %2941 = vmatmul.mubr.f32.gmra.mxu0 %v2649
  %v2942 = vpop.f32.mrf.mxu0
  %v2943 = vadd.f32 %v2520, %v2942
  %v2944 = vpop.f32.mrf.mxu0
  %2945 = vmatprep.mubr.f32.mxu0 0.0
  %2946 = vmatmul.mubr.f32.gmra.mxu0 %v2652
  %v2947 = vpop.f32.mrf.mxu0
  %v2948 = vadd.f32 %v2520, %v2947
  %v2949 = vpop.f32.mrf.mxu0
  %2950 = vmatprep.mubr.f32.mxu0 0.0
  %2951 = vmatmul.mubr.f32.gmra.mxu0 %v2655
  %v2952 = vpop.f32.mrf.mxu0
  %v2953 = vadd.f32 %v2520, %v2952
  %v2954 = vpop.f32.mrf.mxu0
  %2955 = vmatprep.mubr.f32.mxu0 0.0
  %2956 = vmatmul.mubr.f32.gmra.mxu0 %v2658
  %v2957 = vpop.f32.mrf.mxu0
  %v2958 = vadd.f32 %v2520, %v2957
  %v2959 = vpop.f32.mrf.mxu0
  %2960 = vmatprep.mubr.f32.mxu0 0.0
  %2961 = vmatmul.mubr.f32.gmra.mxu0 %v2661
  %v2962 = vpop.f32.mrf.mxu0
  %v2963 = vadd.f32 %v2520, %v2962
  %v2964 = vpop.f32.mrf.mxu0
  %2965 = vmatprep.mubr.f32.mxu0 0.0
  %2966 = vmatmul.mubr.f32.gmra.mxu0 %v2664
  %v2967 = vpop.f32.mrf.mxu0
  %v2968 = vadd.f32 %v2520, %v2967
  %v2969 = vpop.f32.mrf.mxu0
  %2970 = vdwg.mxu0
  %v2971 = vld [vmem:[%s1] sm:$0xff]
  %v2972 = vld [vmem:[%s1 + $0x8] sm:$0xff]
  %v2973 = vld [vmem:[%s1 + $0x10] sm:$0xff]
  %v2974 = vld [vmem:[%s1 + $0x18] sm:$0xff]
  %v2975 = vld [vmem:[%s1 + $0x20] sm:$0xff]
  %v2976 = vld [vmem:[%s1 + $0x28] sm:$0xff]
  %v2977 = vld [vmem:[%s1 + $0x30] sm:$0xff]
  %v2978 = vld [vmem:[%s1 + $0x38] sm:$0xff]
  %v2979 = vld [vmem:[%s1 + $0x40] sm:$0xff]
  %v2980 = vld [vmem:[%s1 + $0x48] sm:$0xff]
  %v2981 = vld [vmem:[%s1 + $0x50] sm:$0xff]
  %v2982 = vld [vmem:[%s1 + $0x58] sm:$0xff]
  %v2983 = vld [vmem:[%s1 + $0x60] sm:$0xff]
  %v2984 = vld [vmem:[%s1 + $0x68] sm:$0xff]
  %v2985 = vld [vmem:[%s1 + $0x70] sm:$0xff]
  %v2986 = vld [vmem:[%s1 + $0x78] sm:$0xff]
  %v2987 = vld [vmem:[%s1 + $0x80] sm:$0xff]
  %v2988 = vld [vmem:[%s1 + $0x88] sm:$0xff]
  %v2989 = vld [vmem:[%s1 + $0x90] sm:$0xff]
  %v2990 = vld [vmem:[%s1 + $0x98] sm:$0xff]
  %v2991 = vld [vmem:[%s1 + $0xa0] sm:$0xff]
  %v2992 = vld [vmem:[%s1 + $0xa8] sm:$0xff]
  %v2993 = vld [vmem:[%s1 + $0xb0] sm:$0xff]
  %v2994 = vld [vmem:[%s1 + $0xb8] sm:$0xff]
  %v2995 = vld [vmem:[%s1 + $0xc0] sm:$0xff]
  %v2996 = vld [vmem:[%s1 + $0xc8] sm:$0xff]
  %v2997 = vld [vmem:[%s1 + $0xd0] sm:$0xff]
  %v2998 = vld [vmem:[%s1 + $0xd8] sm:$0xff]
  %v2999 = vld [vmem:[%s1 + $0xe0] sm:$0xff]
  %v3000 = vld [vmem:[%s1 + $0xe8] sm:$0xff]
  %v3001 = vld [vmem:[%s1 + $0xf0] sm:$0xff]
  %v3002 = vld [vmem:[%s1 + $0xf8] sm:$0xff]
  %v3003 = vld [vmem:[%s1 + $0x100] sm:$0xff]
  %v3004 = vld [vmem:[%s1 + $0x108] sm:$0xff]
  %v3005 = vld [vmem:[%s1 + $0x110] sm:$0xff]
  %v3006 = vld [vmem:[%s1 + $0x118] sm:$0xff]
  %v3007 = vld [vmem:[%s1 + $0x120] sm:$0xff]
  %v3008 = vld [vmem:[%s1 + $0x128] sm:$0xff]
  %v3009 = vld [vmem:[%s1 + $0x130] sm:$0xff]
  %v3010 = vld [vmem:[%s1 + $0x138] sm:$0xff]
  %v3011 = vld [vmem:[%s1 + $0x140] sm:$0xff]
  %v3012 = vld [vmem:[%s1 + $0x148] sm:$0xff]
  %v3013 = vld [vmem:[%s1 + $0x150] sm:$0xff]
  %v3014 = vld [vmem:[%s1 + $0x158] sm:$0xff]
  %v3015 = vld [vmem:[%s1 + $0x160] sm:$0xff]
  %v3016 = vld [vmem:[%s1 + $0x168] sm:$0xff]
  %v3017 = vld [vmem:[%s1 + $0x170] sm:$0xff]
  %v3018 = vld [vmem:[%s1 + $0x178] sm:$0xff]
  %v3019 = vmul.f32 %v2733, %v2971
  %v3020 = vmul.f32 %v2738, %v2972
  %v3021 = vmul.f32 %v2743, %v2973
  %v3022 = vmul.f32 %v2748, %v2974
  %v3023 = vmul.f32 %v2753, %v2975
  %v3024 = vmul.f32 %v2758, %v2976
  %v3025 = vmul.f32 %v2763, %v2977
  %v3026 = vmul.f32 %v2768, %v2978
  %v3027 = vmul.f32 %v2773, %v2979
  %v3028 = vmul.f32 %v2778, %v2980
  %v3029 = vmul.f32 %v2783, %v2981
  %v3030 = vmul.f32 %v2788, %v2982
  %v3031 = vmul.f32 %v2793, %v2983
  %v3032 = vmul.f32 %v2798, %v2984
  %v3033 = vmul.f32 %v2803, %v2985
  %v3034 = vmul.f32 %v2808, %v2986
  %v3035 = vmul.f32 %v2813, %v2987
  %v3036 = vmul.f32 %v2818, %v2988
  %v3037 = vmul.f32 %v2823, %v2989
  %v3038 = vmul.f32 %v2828, %v2990
  %v3039 = vmul.f32 %v2833, %v2991
  %v3040 = vmul.f32 %v2838, %v2992
  %v3041 = vmul.f32 %v2843, %v2993
  %v3042 = vmul.f32 %v2848, %v2994
  %v3043 = vmul.f32 %v2853, %v2995
  %v3044 = vmul.f32 %v2858, %v2996
  %v3045 = vmul.f32 %v2863, %v2997
  %v3046 = vmul.f32 %v2868, %v2998
  %v3047 = vmul.f32 %v2873, %v2999
  %v3048 = vmul.f32 %v2878, %v3000
  %v3049 = vmul.f32 %v2883, %v3001
  %v3050 = vmul.f32 %v2888, %v3002
  %v3051 = vmul.f32 %v2893, %v3003
  %v3052 = vmul.f32 %v2898, %v3004
  %v3053 = vmul.f32 %v2903, %v3005
  %v3054 = vmul.f32 %v2908, %v3006
  %v3055 = vmul.f32 %v2913, %v3007
  %v3056 = vmul.f32 %v2918, %v3008
  %v3057 = vmul.f32 %v2923, %v3009
  %v3058 = vmul.f32 %v2928, %v3010
  %v3059 = vmul.f32 %v2933, %v3011
  %v3060 = vmul.f32 %v2938, %v3012
  %v3061 = vmul.f32 %v2943, %v3013
  %v3062 = vmul.f32 %v2948, %v3014
  %v3063 = vmul.f32 %v2953, %v3015
  %v3064 = vmul.f32 %v2958, %v3016
  %v3065 = vmul.f32 %v2963, %v3017
  %v3066 = vmul.f32 %v2968, %v3018
  %v3067 = vld [vmem:[%s12] sm:$0xff]
  %v3068 = vld [vmem:[%s12 + $0x8] sm:$0xff]
  %v3069 = vld [vmem:[%s12 + $0x10] sm:$0xff]
  %v3070 = vld [vmem:[%s12 + $0x18] sm:$0xff]
  %v3071 = vld [vmem:[%s12 + $0x20] sm:$0xff]
  %v3072 = vld [vmem:[%s12 + $0x28] sm:$0xff]
  %v3073 = vld [vmem:[%s12 + $0x30] sm:$0xff]
  %v3074 = vld [vmem:[%s12 + $0x38] sm:$0xff]
  %v3075 = vld [vmem:[%s12 + $0x40] sm:$0xff]
  %v3076 = vld [vmem:[%s12 + $0x48] sm:$0xff]
  %v3077 = vld [vmem:[%s12 + $0x50] sm:$0xff]
  %v3078 = vld [vmem:[%s12 + $0x58] sm:$0x3]
  %vm3079 = vcmask 736256
  %v3081 = vsel %vm3079, %v3019, 0
  %v3084 = vsel %vm3079, %v3020, 0
  %v3087 = vsel %vm3079, %v3021, 0
  %v3090 = vsel %vm3079, %v3022, 0
  %v3093 = vsel %vm3079, %v3023, 0
  %v3096 = vsel %vm3079, %v3024, 0
  %v3099 = vsel %vm3079, %v3025, 0
  %v3102 = vsel %vm3079, %v3026, 0
  %v3105 = vsel %vm3079, %v3027, 0
  %v3108 = vsel %vm3079, %v3028, 0
  %v3111 = vsel %vm3079, %v3029, 0
  %v3114 = vsel %vm3079, %v3030, 0
  %v3117 = vsel %vm3079, %v3031, 0
  %v3120 = vsel %vm3079, %v3032, 0
  %v3123 = vsel %vm3079, %v3033, 0
  %v3126 = vsel %vm3079, %v3034, 0
  %v3129 = vsel %vm3079, %v3035, 0
  %v3132 = vsel %vm3079, %v3036, 0
  %v3135 = vsel %vm3079, %v3037, 0
  %v3138 = vsel %vm3079, %v3038, 0
  %v3141 = vsel %vm3079, %v3039, 0
  %v3144 = vsel %vm3079, %v3040, 0
  %v3147 = vsel %vm3079, %v3041, 0
  %v3150 = vsel %vm3079, %v3042, 0
  %v3153 = vsel %vm3079, %v3043, 0
  %v3156 = vsel %vm3079, %v3044, 0
  %v3159 = vsel %vm3079, %v3045, 0
  %v3162 = vsel %vm3079, %v3046, 0
  %v3165 = vsel %vm3079, %v3047, 0
  %v3168 = vsel %vm3079, %v3048, 0
  %v3171 = vsel %vm3079, %v3049, 0
  %v3174 = vsel %vm3079, %v3050, 0
  %v3177 = vsel %vm3079, %v3051, 0
  %v3180 = vsel %vm3079, %v3052, 0
  %v3183 = vsel %vm3079, %v3053, 0
  %v3186 = vsel %vm3079, %v3054, 0
  %v3189 = vsel %vm3079, %v3055, 0
  %v3192 = vsel %vm3079, %v3056, 0
  %v3195 = vsel %vm3079, %v3057, 0
  %v3198 = vsel %vm3079, %v3058, 0
  %v3201 = vsel %vm3079, %v3059, 0
  %v3204 = vsel %vm3079, %v3060, 0
  %v3207 = vsel %vm3079, %v3061, 0
  %v3210 = vsel %vm3079, %v3062, 0
  %v3213 = vsel %vm3079, %v3063, 0
  %v3216 = vsel %vm3079, %v3064, 0
  %v3219 = vsel %vm3079, %v3065, 0
  %v3222 = vsel %vm3079, %v3066, 0
  %vm3224 = vcmask 1041408
  %v3226 = vsel %vm3224, %v3078, 0
  %3228 = vmatprep.subr.mxu0 0.0
  %3229 = vmatpush1.msra.mxu0 0.0
  %3230 = vmatprep.subr.mxu0 0.0
  %3231 = vmatpush1.msra.mxu0 0.0
  %3232 = vmatprep.subr.mxu0 0.0
  %3233 = vmatpush1.msra.mxu0 0.0
  %3234 = vmatprep.subr.mxu0 0.0
  %3235 = vmatpush1.msra.mxu0 0.0
  %3236 = vmatprep.subr.mxu0 0.0
  %3237 = vmatpush1.msra.mxu0 %v3226
  %3238 = vmatprep.subr.mxu0 0.0
  %3239 = vmatpush1.msra.mxu0 %v3077
  %3240 = vmatprep.subr.mxu0 0.0
  %3241 = vmatpush1.msra.mxu0 %v3076
  %3242 = vmatprep.subr.mxu0 0.0
  %3243 = vmatpush1.msra.mxu0 %v3075
  %3244 = vmatprep.subr.mxu0 0.0
  %3245 = vmatpush1.msra.mxu0 %v3074
  %3246 = vmatprep.subr.mxu0 0.0
  %3247 = vmatpush1.msra.mxu0 %v3073
  %3248 = vmatprep.subr.mxu0 0.0
  %3249 = vmatpush1.msra.mxu0 %v3072
  %3250 = vmatprep.subr.mxu0 0.0
  %3251 = vmatpush1.msra.mxu0 %v3071
  %3252 = vmatprep.subr.mxu0 0.0
  %3253 = vmatpush1.msra.mxu0 %v3070
  %3254 = vmatprep.subr.mxu0 0.0
  %3255 = vmatpush1.msra.mxu0 %v3069
  %3256 = vmatprep.subr.mxu0 0.0
  %3257 = vmatpush1.msra.mxu0 %v3068
  %3258 = vmatprep.subr.mxu0 0.0
  %3259 = vmatpush1.msra.mxu0 %v3067
  %3260 = vmatprep.subr.mxu0 0.0
  %3261 = vmatpush2.msra.mxu0 0.0
  %3262 = vmatprep.subr.mxu0 0.0
  %3263 = vmatpush2.msra.mxu0 0.0
  %3264 = vmatprep.subr.mxu0 0.0
  %3265 = vmatpush2.msra.mxu0 0.0
  %3266 = vmatprep.subr.mxu0 0.0
  %3267 = vmatpush2.msra.mxu0 0.0
  %3268 = vmatprep.subr.mxu0 0.0
  %3269 = vmatpush2.msra.mxu0 0.0
  %3270 = vmatprep.subr.mxu0 0.0
  %3271 = vmatpush2.msra.mxu0 0.0
  %3272 = vmatprep.subr.mxu0 0.0
  %3273 = vmatpush2.msra.mxu0 0.0
  %3274 = vmatprep.subr.mxu0 0.0
  %3275 = vmatpush2.msra.mxu0 0.0
  %3276 = vmatprep.subr.mxu0 0.0
  %3277 = vmatpush2.msra.mxu0 0.0
  %3278 = vmatprep.subr.mxu0 0.0
  %3279 = vmatpush2.msra.mxu0 0.0
  %3280 = vmatprep.subr.mxu0 0.0
  %3281 = vmatpush2.msra.mxu0 0.0
  %3282 = vmatprep.subr.mxu0 0.0
  %3283 = vmatpush2.msra.mxu0 0.0
  %3284 = vmatprep.subr.mxu0 0.0
  %3285 = vmatpush2.msra.mxu0 0.0
  %3286 = vmatprep.subr.mxu0 0.0
  %3287 = vmatpush2.msra.mxu0 0.0
  %3288 = vmatprep.subr.mxu0 0.0
  %3289 = vmatpush2.msra.mxu0 0.0
  %3290 = vmatprep.subr.mxu0 0.0
  %3291 = vmatpush2.msra.mxu0 0.0
  %3292 = vmatprep.mubr.f32.mxu0 0.0
  %3293 = vmatmul.mubr.f32.gmra.mxu0 %v3081
  %v3294 = vpop.f32.mrf.mxu0
  %v3295 = vadd.f32 0.0, %v3294
  %v3296 = vpop.f32.mrf.mxu0
  %3297 = vmatprep.mubr.f32.mxu0 0.0
  %3298 = vmatmul.mubr.f32.gmra.mxu0 %v3084
  %v3299 = vpop.f32.mrf.mxu0
  %v3300 = vadd.f32 0.0, %v3299
  %v3301 = vpop.f32.mrf.mxu0
  %3302 = vmatprep.mubr.f32.mxu0 0.0
  %3303 = vmatmul.mubr.f32.gmra.mxu0 %v3087
  %v3304 = vpop.f32.mrf.mxu0
  %v3305 = vadd.f32 0.0, %v3304
  %v3306 = vpop.f32.mrf.mxu0
  %3307 = vmatprep.mubr.f32.mxu0 0.0
  %3308 = vmatmul.mubr.f32.gmra.mxu0 %v3090
  %v3309 = vpop.f32.mrf.mxu0
  %v3310 = vadd.f32 0.0, %v3309
  %v3311 = vpop.f32.mrf.mxu0
  %3312 = vmatprep.mubr.f32.mxu0 0.0
  %3313 = vmatmul.mubr.f32.gmra.mxu0 %v3093
  %v3314 = vpop.f32.mrf.mxu0
  %v3315 = vadd.f32 0.0, %v3314
  %v3316 = vpop.f32.mrf.mxu0
  %3317 = vmatprep.mubr.f32.mxu0 0.0
  %3318 = vmatmul.mubr.f32.gmra.mxu0 %v3096
  %v3319 = vpop.f32.mrf.mxu0
  %v3320 = vadd.f32 0.0, %v3319
  %v3321 = vpop.f32.mrf.mxu0
  %3322 = vmatprep.mubr.f32.mxu0 0.0
  %3323 = vmatmul.mubr.f32.gmra.mxu0 %v3099
  %v3324 = vpop.f32.mrf.mxu0
  %v3325 = vadd.f32 0.0, %v3324
  %v3326 = vpop.f32.mrf.mxu0
  %3327 = vmatprep.mubr.f32.mxu0 0.0
  %3328 = vmatmul.mubr.f32.gmra.mxu0 %v3102
  %v3329 = vpop.f32.mrf.mxu0
  %v3330 = vadd.f32 0.0, %v3329
  %v3331 = vpop.f32.mrf.mxu0
  %3332 = vmatprep.mubr.f32.mxu0 0.0
  %3333 = vmatmul.mubr.f32.gmra.mxu0 %v3105
  %v3334 = vpop.f32.mrf.mxu0
  %v3335 = vadd.f32 0.0, %v3334
  %v3336 = vpop.f32.mrf.mxu0
  %3337 = vmatprep.mubr.f32.mxu0 0.0
  %3338 = vmatmul.mubr.f32.gmra.mxu0 %v3108
  %v3339 = vpop.f32.mrf.mxu0
  %v3340 = vadd.f32 0.0, %v3339
  %v3341 = vpop.f32.mrf.mxu0
  %3342 = vmatprep.mubr.f32.mxu0 0.0
  %3343 = vmatmul.mubr.f32.gmra.mxu0 %v3111
  %v3344 = vpop.f32.mrf.mxu0
  %v3345 = vadd.f32 0.0, %v3344
  %v3346 = vpop.f32.mrf.mxu0
  %3347 = vmatprep.mubr.f32.mxu0 0.0
  %3348 = vmatmul.mubr.f32.gmra.mxu0 %v3114
  %v3349 = vpop.f32.mrf.mxu0
  %v3350 = vadd.f32 0.0, %v3349
  %v3351 = vpop.f32.mrf.mxu0
  %3352 = vmatprep.mubr.f32.mxu0 0.0
  %3353 = vmatmul.mubr.f32.gmra.mxu0 %v3117
  %v3354 = vpop.f32.mrf.mxu0
  %v3355 = vadd.f32 0.0, %v3354
  %v3356 = vpop.f32.mrf.mxu0
  %3357 = vmatprep.mubr.f32.mxu0 0.0
  %3358 = vmatmul.mubr.f32.gmra.mxu0 %v3120
  %v3359 = vpop.f32.mrf.mxu0
  %v3360 = vadd.f32 0.0, %v3359
  %v3361 = vpop.f32.mrf.mxu0
  %3362 = vmatprep.mubr.f32.mxu0 0.0
  %3363 = vmatmul.mubr.f32.gmra.mxu0 %v3123
  %v3364 = vpop.f32.mrf.mxu0
  %v3365 = vadd.f32 0.0, %v3364
  %v3366 = vpop.f32.mrf.mxu0
  %3367 = vmatprep.mubr.f32.mxu0 0.0
  %3368 = vmatmul.mubr.f32.gmra.mxu0 %v3126
  %v3369 = vpop.f32.mrf.mxu0
  %v3370 = vadd.f32 0.0, %v3369
  %v3371 = vpop.f32.mrf.mxu0
  %3372 = vmatprep.mubr.f32.mxu0 0.0
  %3373 = vmatmul.mubr.f32.gmra.mxu0 %v3129
  %v3374 = vpop.f32.mrf.mxu0
  %v3375 = vadd.f32 0.0, %v3374
  %v3376 = vpop.f32.mrf.mxu0
  %3377 = vmatprep.mubr.f32.mxu0 0.0
  %3378 = vmatmul.mubr.f32.gmra.mxu0 %v3132
  %v3379 = vpop.f32.mrf.mxu0
  %v3380 = vadd.f32 0.0, %v3379
  %v3381 = vpop.f32.mrf.mxu0
  %3382 = vmatprep.mubr.f32.mxu0 0.0
  %3383 = vmatmul.mubr.f32.gmra.mxu0 %v3135
  %v3384 = vpop.f32.mrf.mxu0
  %v3385 = vadd.f32 0.0, %v3384
  %v3386 = vpop.f32.mrf.mxu0
  %3387 = vmatprep.mubr.f32.mxu0 0.0
  %3388 = vmatmul.mubr.f32.gmra.mxu0 %v3138
  %v3389 = vpop.f32.mrf.mxu0
  %v3390 = vadd.f32 0.0, %v3389
  %v3391 = vpop.f32.mrf.mxu0
  %3392 = vmatprep.mubr.f32.mxu0 0.0
  %3393 = vmatmul.mubr.f32.gmra.mxu0 %v3141
  %v3394 = vpop.f32.mrf.mxu0
  %v3395 = vadd.f32 0.0, %v3394
  %v3396 = vpop.f32.mrf.mxu0
  %3397 = vmatprep.mubr.f32.mxu0 0.0
  %3398 = vmatmul.mubr.f32.gmra.mxu0 %v3144
  %v3399 = vpop.f32.mrf.mxu0
  %v3400 = vadd.f32 0.0, %v3399
  %v3401 = vpop.f32.mrf.mxu0
  %3402 = vmatprep.mubr.f32.mxu0 0.0
  %3403 = vmatmul.mubr.f32.gmra.mxu0 %v3147
  %v3404 = vpop.f32.mrf.mxu0
  %v3405 = vadd.f32 0.0, %v3404
  %v3406 = vpop.f32.mrf.mxu0
  %3407 = vmatprep.mubr.f32.mxu0 0.0
  %3408 = vmatmul.mubr.f32.gmra.mxu0 %v3150
  %v3409 = vpop.f32.mrf.mxu0
  %v3410 = vadd.f32 0.0, %v3409
  %v3411 = vpop.f32.mrf.mxu0
  %3412 = vmatprep.mubr.f32.mxu0 0.0
  %3413 = vmatmul.mubr.f32.gmra.mxu0 %v3153
  %v3414 = vpop.f32.mrf.mxu0
  %v3415 = vadd.f32 0.0, %v3414
  %v3416 = vpop.f32.mrf.mxu0
  %3417 = vmatprep.mubr.f32.mxu0 0.0
  %3418 = vmatmul.mubr.f32.gmra.mxu0 %v3156
  %v3419 = vpop.f32.mrf.mxu0
  %v3420 = vadd.f32 0.0, %v3419
  %v3421 = vpop.f32.mrf.mxu0
  %3422 = vmatprep.mubr.f32.mxu0 0.0
  %3423 = vmatmul.mubr.f32.gmra.mxu0 %v3159
  %v3424 = vpop.f32.mrf.mxu0
  %v3425 = vadd.f32 0.0, %v3424
  %v3426 = vpop.f32.mrf.mxu0
  %3427 = vmatprep.mubr.f32.mxu0 0.0
  %3428 = vmatmul.mubr.f32.gmra.mxu0 %v3162
  %v3429 = vpop.f32.mrf.mxu0
  %v3430 = vadd.f32 0.0, %v3429
  %v3431 = vpop.f32.mrf.mxu0
  %3432 = vmatprep.mubr.f32.mxu0 0.0
  %3433 = vmatmul.mubr.f32.gmra.mxu0 %v3165
  %v3434 = vpop.f32.mrf.mxu0
  %v3435 = vadd.f32 0.0, %v3434
  %v3436 = vpop.f32.mrf.mxu0
  %3437 = vmatprep.mubr.f32.mxu0 0.0
  %3438 = vmatmul.mubr.f32.gmra.mxu0 %v3168
  %v3439 = vpop.f32.mrf.mxu0
  %v3440 = vadd.f32 0.0, %v3439
  %v3441 = vpop.f32.mrf.mxu0
  %3442 = vmatprep.mubr.f32.mxu0 0.0
  %3443 = vmatmul.mubr.f32.gmra.mxu0 %v3171
  %v3444 = vpop.f32.mrf.mxu0
  %v3445 = vadd.f32 0.0, %v3444
  %v3446 = vpop.f32.mrf.mxu0
  %3447 = vmatprep.mubr.f32.mxu0 0.0
  %3448 = vmatmul.mubr.f32.gmra.mxu0 %v3174
  %v3449 = vpop.f32.mrf.mxu0
  %v3450 = vadd.f32 0.0, %v3449
  %v3451 = vpop.f32.mrf.mxu0
  %3452 = vmatprep.mubr.f32.mxu0 0.0
  %3453 = vmatmul.mubr.f32.gmra.mxu0 %v3177
  %v3454 = vpop.f32.mrf.mxu0
  %v3455 = vadd.f32 0.0, %v3454
  %v3456 = vpop.f32.mrf.mxu0
  %3457 = vmatprep.mubr.f32.mxu0 0.0
  %3458 = vmatmul.mubr.f32.gmra.mxu0 %v3180
  %v3459 = vpop.f32.mrf.mxu0
  %v3460 = vadd.f32 0.0, %v3459
  %v3461 = vpop.f32.mrf.mxu0
  %3462 = vmatprep.mubr.f32.mxu0 0.0
  %3463 = vmatmul.mubr.f32.gmra.mxu0 %v3183
  %v3464 = vpop.f32.mrf.mxu0
  %v3465 = vadd.f32 0.0, %v3464
  %v3466 = vpop.f32.mrf.mxu0
  %3467 = vmatprep.mubr.f32.mxu0 0.0
  %3468 = vmatmul.mubr.f32.gmra.mxu0 %v3186
  %v3469 = vpop.f32.mrf.mxu0
  %v3470 = vadd.f32 0.0, %v3469
  %v3471 = vpop.f32.mrf.mxu0
  %3472 = vmatprep.mubr.f32.mxu0 0.0
  %3473 = vmatmul.mubr.f32.gmra.mxu0 %v3189
  %v3474 = vpop.f32.mrf.mxu0
  %v3475 = vadd.f32 0.0, %v3474
  %v3476 = vpop.f32.mrf.mxu0
  %3477 = vmatprep.mubr.f32.mxu0 0.0
  %3478 = vmatmul.mubr.f32.gmra.mxu0 %v3192
  %v3479 = vpop.f32.mrf.mxu0
  %v3480 = vadd.f32 0.0, %v3479
  %v3481 = vpop.f32.mrf.mxu0
  %3482 = vmatprep.mubr.f32.mxu0 0.0
  %3483 = vmatmul.mubr.f32.gmra.mxu0 %v3195
  %v3484 = vpop.f32.mrf.mxu0
  %v3485 = vadd.f32 0.0, %v3484
  %v3486 = vpop.f32.mrf.mxu0
  %3487 = vmatprep.mubr.f32.mxu0 0.0
  %3488 = vmatmul.mubr.f32.gmra.mxu0 %v3198
  %v3489 = vpop.f32.mrf.mxu0
  %v3490 = vadd.f32 0.0, %v3489
  %v3491 = vpop.f32.mrf.mxu0
  %3492 = vmatprep.mubr.f32.mxu0 0.0
  %3493 = vmatmul.mubr.f32.gmra.mxu0 %v3201
  %v3494 = vpop.f32.mrf.mxu0
  %v3495 = vadd.f32 0.0, %v3494
  %v3496 = vpop.f32.mrf.mxu0
  %3497 = vmatprep.mubr.f32.mxu0 0.0
  %3498 = vmatmul.mubr.f32.gmra.mxu0 %v3204
  %v3499 = vpop.f32.mrf.mxu0
  %v3500 = vadd.f32 0.0, %v3499
  %v3501 = vpop.f32.mrf.mxu0
  %3502 = vmatprep.mubr.f32.mxu0 0.0
  %3503 = vmatmul.mubr.f32.gmra.mxu0 %v3207
  %v3504 = vpop.f32.mrf.mxu0
  %v3505 = vadd.f32 0.0, %v3504
  %v3506 = vpop.f32.mrf.mxu0
  %3507 = vmatprep.mubr.f32.mxu0 0.0
  %3508 = vmatmul.mubr.f32.gmra.mxu0 %v3210
  %v3509 = vpop.f32.mrf.mxu0
  %v3510 = vadd.f32 0.0, %v3509
  %v3511 = vpop.f32.mrf.mxu0
  %3512 = vmatprep.mubr.f32.mxu0 0.0
  %3513 = vmatmul.mubr.f32.gmra.mxu0 %v3213
  %v3514 = vpop.f32.mrf.mxu0
  %v3515 = vadd.f32 0.0, %v3514
  %v3516 = vpop.f32.mrf.mxu0
  %3517 = vmatprep.mubr.f32.mxu0 0.0
  %3518 = vmatmul.mubr.f32.gmra.mxu0 %v3216
  %v3519 = vpop.f32.mrf.mxu0
  %v3520 = vadd.f32 0.0, %v3519
  %v3521 = vpop.f32.mrf.mxu0
  %3522 = vmatprep.mubr.f32.mxu0 0.0
  %3523 = vmatmul.mubr.f32.gmra.mxu0 %v3219
  %v3524 = vpop.f32.mrf.mxu0
  %v3525 = vadd.f32 0.0, %v3524
  %v3526 = vpop.f32.mrf.mxu0
  %3527 = vmatprep.mubr.f32.mxu0 0.0
  %3528 = vmatmul.mubr.f32.gmra.mxu0 %v3222
  %v3529 = vpop.f32.mrf.mxu0
  %v3530 = vadd.f32 0.0, %v3529
  %v3531 = vpop.f32.mrf.mxu0
  %3532 = vdwg.mxu0
  %vm3533 = vcmask 72704
  %3534 = vst.msk [vmem:[%s13] sm:$0xff] %vm3533, %v3295
  %3535 = vst.msk [vmem:[%s13 + $0x8] sm:$0xff] %vm3533, %v3300
  %3536 = vst.msk [vmem:[%s13 + $0x10] sm:$0xff] %vm3533, %v3305
  %3537 = vst.msk [vmem:[%s13 + $0x18] sm:$0xff] %vm3533, %v3310
  %3538 = vst.msk [vmem:[%s13 + $0x20] sm:$0xff] %vm3533, %v3315
  %3539 = vst.msk [vmem:[%s13 + $0x28] sm:$0xff] %vm3533, %v3320
  %3540 = vst.msk [vmem:[%s13 + $0x30] sm:$0xff] %vm3533, %v3325
  %3541 = vst.msk [vmem:[%s13 + $0x38] sm:$0xff] %vm3533, %v3330
  %3542 = vst.msk [vmem:[%s13 + $0x40] sm:$0xff] %vm3533, %v3335
  %3543 = vst.msk [vmem:[%s13 + $0x48] sm:$0xff] %vm3533, %v3340
  %3544 = vst.msk [vmem:[%s13 + $0x50] sm:$0xff] %vm3533, %v3345
  %3545 = vst.msk [vmem:[%s13 + $0x58] sm:$0xff] %vm3533, %v3350
  %3546 = vst.msk [vmem:[%s13 + $0x60] sm:$0xff] %vm3533, %v3355
  %3547 = vst.msk [vmem:[%s13 + $0x68] sm:$0xff] %vm3533, %v3360
  %3548 = vst.msk [vmem:[%s13 + $0x70] sm:$0xff] %vm3533, %v3365
  %3549 = vst.msk [vmem:[%s13 + $0x78] sm:$0xff] %vm3533, %v3370
  %3550 = vst.msk [vmem:[%s13 + $0x80] sm:$0xff] %vm3533, %v3375
  %3551 = vst.msk [vmem:[%s13 + $0x88] sm:$0xff] %vm3533, %v3380
  %3552 = vst.msk [vmem:[%s13 + $0x90] sm:$0xff] %vm3533, %v3385
  %3553 = vst.msk [vmem:[%s13 + $0x98] sm:$0xff] %vm3533, %v3390
  %3554 = vst.msk [vmem:[%s13 + $0xa0] sm:$0xff] %vm3533, %v3395
  %3555 = vst.msk [vmem:[%s13 + $0xa8] sm:$0xff] %vm3533, %v3400
  %3556 = vst.msk [vmem:[%s13 + $0xb0] sm:$0xff] %vm3533, %v3405
  %3557 = vst.msk [vmem:[%s13 + $0xb8] sm:$0xff] %vm3533, %v3410
  %3558 = vst.msk [vmem:[%s13 + $0xc0] sm:$0xff] %vm3533, %v3415
  %3559 = vst.msk [vmem:[%s13 + $0xc8] sm:$0xff] %vm3533, %v3420
  %3560 = vst.msk [vmem:[%s13 + $0xd0] sm:$0xff] %vm3533, %v3425
  %3561 = vst.msk [vmem:[%s13 + $0xd8] sm:$0xff] %vm3533, %v3430
  %3562 = vst.msk [vmem:[%s13 + $0xe0] sm:$0xff] %vm3533, %v3435
  %3563 = vst.msk [vmem:[%s13 + $0xe8] sm:$0xff] %vm3533, %v3440
  %3564 = vst.msk [vmem:[%s13 + $0xf0] sm:$0xff] %vm3533, %v3445
  %3565 = vst.msk [vmem:[%s13 + $0xf8] sm:$0xff] %vm3533, %v3450
  %3566 = vst.msk [vmem:[%s13 + $0x100] sm:$0xff] %vm3533, %v3455
  %3567 = vst.msk [vmem:[%s13 + $0x108] sm:$0xff] %vm3533, %v3460
  %3568 = vst.msk [vmem:[%s13 + $0x110] sm:$0xff] %vm3533, %v3465
  %3569 = vst.msk [vmem:[%s13 + $0x118] sm:$0xff] %vm3533, %v3470
  %3570 = vst.msk [vmem:[%s13 + $0x120] sm:$0xff] %vm3533, %v3475
  %3571 = vst.msk [vmem:[%s13 + $0x128] sm:$0xff] %vm3533, %v3480
  %3572 = vst.msk [vmem:[%s13 + $0x130] sm:$0xff] %vm3533, %v3485
  %3573 = vst.msk [vmem:[%s13 + $0x138] sm:$0xff] %vm3533, %v3490
  %3574 = vst.msk [vmem:[%s13 + $0x140] sm:$0xff] %vm3533, %v3495
  %3575 = vst.msk [vmem:[%s13 + $0x148] sm:$0xff] %vm3533, %v3500
  %3576 = vst.msk [vmem:[%s13 + $0x150] sm:$0xff] %vm3533, %v3505
  %3577 = vst.msk [vmem:[%s13 + $0x158] sm:$0xff] %vm3533, %v3510
  %3578 = vst.msk [vmem:[%s13 + $0x160] sm:$0xff] %vm3533, %v3515
  %3579 = vst.msk [vmem:[%s13 + $0x168] sm:$0xff] %vm3533, %v3520
  %3580 = vst.msk [vmem:[%s13 + $0x170] sm:$0xff] %vm3533, %v3525
  %3581 = vst.msk [vmem:[%s13 + $0x178] sm:$0xff] %vm3533, %v3530
  // Predicated region
  $region54: #{tpu_custom_call.1} parent=0 // pred_check
    _
  $region55: #{tpu_custom_call.1} parent=0 // pred_check_branch
    %3583 = sbr.rel (0) target = $region57
  $region56: #{tpu_custom_call.1} parent=0 // pred_region
    _
  $region57: #{tpu_custom_call.1} parent=0 // pred_fallthru
    _
  // Predicated region
  $region58: #{tpu_custom_call.1} parent=0 // pred_check
    _
  $region59: #{tpu_custom_call.1} parent=0 // pred_check_branch
    %3585 = sbr.rel (0) target = $region61
  $region60: #{tpu_custom_call.1} parent=0 // pred_region
    _
  $region61: #{tpu_custom_call.1} parent=0 // pred_fallthru
    _

</llo_original>
